<compile_context>
chip_gen: v5e
topology: v5e:2x2
jax: 0.10.0
libtpu: 0.0.40
codegen_flags: <defaults>
</compile_context>

<pallas_src>
import math
import functools

import numpy as np
import jax
import jax.numpy as jnp
from jax.experimental import pallas as pl
from jax.experimental.pallas import tpu as pltpu

HEADS = 4
NEG_SLOPE = 0.2       # GATv2Conv default negative_slope
LN_EPS = 1e-5
BN_EPS = 1e-5
MASK_VAL = -1e30
OUT_LANES = 128       # lane-dense output slab width


# ---------------------------------------------------------------------------
# In-kernel helpers (traced inline, not separate pallas_calls)
# ---------------------------------------------------------------------------
def _layer_norm(x, gamma, beta):
    mu = jnp.mean(x, axis=1, keepdims=True)
    var = jnp.mean(jnp.square(x - mu), axis=1, keepdims=True)
    return (x - mu) * jax.lax.rsqrt(var + LN_EPS) * gamma + beta


def _gat_bn_elu(h, ev3, mask3, eh, wl, bl, wr, br, we, s_blk, gat_bias,
                bn_scale, bn_shift, heads, out_ch):
    """One dense GATv2Conv (heads fused) + folded BatchNorm (eval) + ELU.

    GATv2 semantics per edge j -> i (adjacency includes self loops):
        e[i,j,:]    = leaky_relu(xr[i,:] + xl[j,:] + ev[i,j] * We)
        score[i,j,h]= sum_c e[i,j,h*C+c] * att[h,c]        (one MXU pass via S)
        alpha       = softmax over sources j (masked by adjacency)
        out[i,:]    = sum_j alpha[i,j,head(f)] * xl[j,:] + bias
    """
    n = h.shape[0]
    hc = heads * out_ch
    # Separate lin_l / lin_r matmuls: no lane-unaligned slicing of a fused
    # [N, 2*HC] result (K is tiny, the extra MXU pass is cheaper than the
    # two 32-lane relayout copies the slices would cost).
    xl = jnp.dot(h, wl, preferred_element_type=jnp.float32) + bl       # [N, HC] sources
    xr = jnp.dot(h, wr, preferred_element_type=jnp.float32) + br       # [N, HC] targets
    # GATv2 edge features, all heads fused along lanes.
    e = xr[:, None, :] + xl[None, :, :] + ev3 * we                     # [N, N, HC]
    e = jnp.where(e > 0.0, e, NEG_SLOPE * e)                           # leaky_relu
    # All 4 head scores in ONE MXU pass via the block-diagonal att matrix
    # S[HC, H] (S[h*C+c, h] = att[h, c]): no [N,N,HC] `weighted` buffer, no
    # per-head width-8 slices, no narrow XLU reduces.  bf16 operands, f32 acc.
    score = jnp.dot(e.reshape(n * n, hc).astype(jnp.bfloat16),
                    s_blk.astype(jnp.bfloat16),
                    preferred_element_type=jnp.float32).reshape(n, n, heads)
    score = score + mask3                                              # adjacency mask
    # Single fused masked softmax over sources for all (dst, head) pairs.
    m = jnp.max(score, axis=1, keepdims=True)                          # [N, 1, H]
    p = jnp.exp(score - m)                                             # masked -> 0
    denom = jnp.sum(p, axis=1, keepdims=True)
    alpha = p * pl.reciprocal(denom, approx=True)                      # [N, N, H]
    # Head-fused aggregation (no per-head slices / concat, relayout-free):
    # expand alpha over channels with eh[H, HC] (one tiny MXU pass), multiply
    # by the source messages, reduce over sources.
    alpha_exp = jnp.dot(alpha.reshape(n * n, heads), eh,
                        preferred_element_type=jnp.float32).reshape(n, n, hc)
    out = jnp.sum(alpha_exp * xl[None, :, :], axis=1) + gat_bias       # [N, HC]
    # Folded BatchNorm1d (eval) + ELU epilogue.
    y = out * bn_scale + bn_shift
    return jnp.where(y > 0.0, y, jnp.exp(jnp.minimum(y, 0.0)) - 1.0)


# ---------------------------------------------------------------------------
# Single fused kernel for the whole forward pass
# ---------------------------------------------------------------------------
def fused_forward_kernel(*refs, heads, out_ch):
    (x_ref, adj3_ref, ev3_ref, pool_ref, cls_ref, eh_ref, pnf_ref) = refs[:7]
    gat_refs = refs[7:7 + 3 * 9]                      # 3 layers x 9 refs
    (wv_ref, bv_ref, ln1g_ref, ln1b_ref, wo_ref, bo_ref,
     w1_ref, b1_ref, w2_ref, b2_ref, ln2g_ref, ln2b_ref,
     wfcs_ref, bfcs_ref) = refs[34:48]
    out_ref = refs[48]

    # Hoisted loop invariants: reused by all 3 layers x 4 heads.
    ev3 = ev3_ref[...]                                               # [N, N, 1]
    mask3 = jnp.where(adj3_ref[...] > 0.0, 0.0, MASK_VAL)            # [N, N, 1]
    eh = eh_ref[...]                                                 # [H, HC]

    h = x_ref[...]
    for l in range(3):
        (wl_r, bl_r, wr_r, br_r, we_r, s_r, bias_r,
         bns_r, bnb_r) = gat_refs[9 * l: 9 * l + 9]
        h = _gat_bn_elu(h, ev3, mask3, eh,
                        wl_r[...], bl_r[...], wr_r[...], br_r[...],
                        we_r[...], s_r[...], bias_r[...],
                        bns_r[...], bnb_r[...], heads, out_ch)

    # (global_add_pool + global_mean_pool) / 2 : weights folded into pool matrix.
    nf = jnp.dot(pool_ref[...], h, preferred_element_type=jnp.float32)   # [G, HC]

    # Cross-attention head: each graph contributes a single key/value token, so
    # softmax over one key is identically 1 and context == v_linear(cls); the
    # q/k projections and the softmax are mathematically dead and omitted.
    v = jnp.dot(cls_ref[...].astype(jnp.bfloat16), wv_ref[...],
                preferred_element_type=jnp.float32) + bv_ref[...]         # [G, HC]
    ctx = _layer_norm(v, ln1g_ref[...], ln1b_ref[...])
    attn = jnp.dot(ctx, wo_ref[...], preferred_element_type=jnp.float32) + bo_ref[...]
    # FFN + residual + ffn_norm + classifier.
    h1 = jnp.maximum(
        jnp.dot(attn, w1_ref[...], preferred_element_type=jnp.float32) + b1_ref[...],
        0.0)
    ffn = jnp.dot(h1, w2_ref[...], preferred_element_type=jnp.float32) + b2_ref[...]
    y = _layer_norm(attn + ffn, ln2g_ref[...], ln2b_ref[...])

    # Lane-dense 128-wide output slab: classifier weights are pre-placed into
    # lanes [HC, HC+num_classes); node features are placed into lanes [0, HC)
    # with a one-hot placement matmul.  One full-width store, no masked vst.
    slab = jnp.dot(y, wfcs_ref[...], preferred_element_type=jnp.float32) + bfcs_ref[...]
    out_ref[...] = slab + jnp.dot(nf, pnf_ref[...], preferred_element_type=jnp.float32)


def forward(x, adj3, ev3, pool_mat, biobert_cls, eh, pnf, params, num_classes):
    g = pool_mat.shape[0]
    heads = HEADS
    hc = params["gat1"]["s"].shape[0]
    out_ch = hc // heads

    args = [x, adj3, ev3, pool_mat, biobert_cls, eh, pnf]
    for name in ("gat1", "gat2", "gat3"):
        p = params[name]
        args += [p["wl"], p["bl"], p["wr"], p["br"], p["we"], p["s"], p["bias"],
                 p["bn_scale"], p["bn_shift"]]
    hp = params["head"]
    args += [hp["wv"], hp["bv"], hp["ln1_g"], hp["ln1_b"], hp["wo"], hp["bo"],
             hp["w1"], hp["b1"], hp["w2"], hp["b2"], hp["ln2_g"], hp["ln2_b"],
             hp["wfc_slab"], hp["bfc_slab"]]

    vmem = pl.BlockSpec(memory_space=pltpu.MemorySpace.VMEM)
    kernel = functools.partial(fused_forward_kernel, heads=heads, out_ch=out_ch)
    # All G graphs are batched block-diagonally into this one call; everything
    # (activations + weights, < 1 MiB) is VMEM-resident, so no grid is needed.
    # For large N / G, introduce a grid over destination-node tiles of adj/ev
    # (dimension_semantics=("parallel",...) to use v7x's 2nd TensorCore) and
    # size the [T, N, HC] intermediate per generation (<= ~24 MiB on v7x's
    # 64 MiB VMEM, ~2x larger tiles on v5e/v6e with vmem_limit_bytes raised).
    slab = pl.pallas_call(
        kernel,
        out_shape=jax.ShapeDtypeStruct((g, OUT_LANES), jnp.float32),
        in_specs=[vmem] * len(args),
        out_specs=vmem,
    )(*args)
    node_feats = slab[:, :hc]
    logits = slab[:, hc:hc + num_classes]
    return logits, node_feats


# ---------------------------------------------------------------------------
# Parameter construction (deterministic, synthetic)
# ---------------------------------------------------------------------------
def init_linear(key, fan_in, fan_out):
    k1, k2 = jax.random.split(key)
    s = 1.0 / math.sqrt(fan_in)
    w = jax.random.uniform(k1, (fan_in, fan_out), jnp.float32, -s, s)
    b = jax.random.uniform(k2, (1, fan_out), jnp.float32, -s, s)
    return w, b


def init_gat(key, fan_in, heads, out_ch):
    ks = jax.random.split(key, 5)
    hc = heads * out_ch
    wl, bl = init_linear(ks[0], fan_in, hc)
    wr, br = init_linear(ks[1], fan_in, hc)
    we = jax.random.uniform(ks[2], (1, 1, hc), jnp.float32, -1.0, 1.0)   # lin_edge (no bias)
    att = jax.random.uniform(ks[3], (heads, out_ch), jnp.float32, -0.5, 0.5)
    bias = jax.random.uniform(ks[4], (1, hc), jnp.float32, -0.1, 0.1)
    # Host-built block-diagonal attention matrix: S[h*C + c, h] = att[h, c].
    s_np = np.zeros((hc, heads), np.float32)
    att_np = np.asarray(att)
    for hh in range(heads):
        s_np[hh * out_ch:(hh + 1) * out_ch, hh] = att_np[hh]
    return dict(wl=wl, bl=bl, wr=wr, br=br, we=we, s=jnp.asarray(s_np), bias=bias)


def init_bn(key, dim):
    ks = jax.random.split(key, 4)
    gamma = 1.0 + 0.1 * jax.random.normal(ks[0], (1, dim), jnp.float32)
    beta = 0.1 * jax.random.normal(ks[1], (1, dim), jnp.float32)
    rmean = 0.05 * jax.random.normal(ks[2], (1, dim), jnp.float32)
    rvar = 1.0 + 0.1 * jax.random.uniform(ks[3], (1, dim), jnp.float32)
    scale = gamma / jnp.sqrt(rvar + BN_EPS)
    shift = beta - rmean * scale
    return scale, shift


if __name__ == "__main__":
    key = jax.random.PRNGKey(0)
    node_in_dim = 16
    gat_hidden = 8
    heads = HEADS
    D = gat_hidden * heads          # 32
    cls_dim = 768
    num_classes = 5
    nodes_per_graph = 8
    G = 2
    N = nodes_per_graph * G         # 16

    keys = jax.random.split(key, 16)

    # --- synthetic graph data ---
    x = 0.5 * jax.random.normal(keys[0], (N, node_in_dim), jnp.float32)
    biobert_cls = 0.1 * jax.random.normal(keys[1], (G, cls_dim), jnp.float32)
    batch = np.repeat(np.arange(G), nodes_per_graph)

    edges = []
    for gi in range(G):
        base = gi * nodes_per_graph
        for i in range(nodes_per_graph):
            edges.append((base + i, base + (i + 1) % nodes_per_graph))
            edges.append((base + (i + 1) % nodes_per_graph, base + i))
    E = len(edges)
    edge_attr = jax.random.uniform(keys[2], (E, 1), jnp.float32)

    # dense adjacency [dst, src] + dense edge attr, including self loops
    # (GATv2Conv add_self_loops=True, fill_value='mean' over incoming edges)
    adj_np = np.zeros((N, N), np.float32)
    ev_np = np.zeros((N, N), np.float32)
    ea = np.asarray(edge_attr)[:, 0]
    in_sum = np.zeros(N, np.float32)
    in_cnt = np.zeros(N, np.float32)
    for e, (src, dst) in enumerate(edges):
        adj_np[dst, src] = 1.0
        ev_np[dst, src] = ea[e]
        in_sum[dst] += ea[e]
        in_cnt[dst] += 1.0
    for i in range(N):
        adj_np[i, i] = 1.0
        ev_np[i, i] = in_sum[i] / in_cnt[i] if in_cnt[i] > 0 else 0.0
    adj3 = jnp.asarray(adj_np[:, :, None])     # pre-expanded: no in-kernel relayout
    ev3 = jnp.asarray(ev_np[:, :, None])

    # (global_add_pool + global_mean_pool)/2 folded into one pooling matrix:
    #   pool[g, n] = onehot[g, n] * 0.5 * (1 + 1/count_g)
    onehot_np = (batch[None, :] == np.arange(G)[:, None]).astype(np.float32)
    counts = np.maximum(onehot_np.sum(axis=1, keepdims=True), 1.0)
    pool_mat = jnp.asarray(onehot_np * 0.5 * (1.0 + 1.0 / counts))

    # one-hot head -> channel expansion matrix (shared by all 3 layers)
    eh_np = np.zeros((heads, D), np.float32)
    for hh in range(heads):
        eh_np[hh, hh * gat_hidden:(hh + 1) * gat_hidden] = 1.0
    eh = jnp.asarray(eh_np)

    # placement matrix: node_feats -> lanes [0, D) of the 128-lane output slab
    pnf_np = np.zeros((D, OUT_LANES), np.float32)
    pnf_np[np.arange(D), np.arange(D)] = 1.0
    pnf = jnp.asarray(pnf_np)

    # --- parameters ---
    params = {
        "gat1": init_gat(keys[3], node_in_dim, heads, gat_hidden),
        "gat2": init_gat(keys[4], D, heads, gat_hidden),
        "gat3": init_gat(keys[5], D, heads, gat_hidden),
    }
    for name, k in (("gat1", keys[6]), ("gat2", keys[7]), ("gat3", keys[8])):
        scale, shift = init_bn(k, D)
        params[name]["bn_scale"] = scale
        params[name]["bn_shift"] = shift

    hk = jax.random.split(keys[9], 10)
    # q_linear / k_linear of the cross-attention are mathematically unused
    # (softmax over a single key token is identically 1), so they are omitted.
    wv, bv = init_linear(hk[2], cls_dim, D)
    wo, bo = init_linear(hk[3], D, D)
    w1, b1 = init_linear(hk[4], D, D)
    w2, b2 = init_linear(hk[5], D, D)
    wfc, bfc = init_linear(hk[6], D, num_classes)
    # classifier folded into lanes [D, D+num_classes) of the output slab
    wfc_slab_np = np.zeros((D, OUT_LANES), np.float32)
    wfc_slab_np[:, D:D + num_classes] = np.asarray(wfc)
    bfc_slab_np = np.zeros((1, OUT_LANES), np.float32)
    bfc_slab_np[:, D:D + num_classes] = np.asarray(bfc)
    params["head"] = dict(
        wv=wv.astype(jnp.bfloat16), bv=bv,    # bf16 wv: halves the single largest DMA
        ln1_g=jnp.ones((1, D), jnp.float32), ln1_b=jnp.zeros((1, D), jnp.float32),
        wo=wo, bo=bo, w1=w1, b1=b1, w2=w2, b2=b2,
        ln2_g=jnp.ones((1, D), jnp.float32), ln2_b=jnp.zeros((1, D), jnp.float32),
        wfc_slab=jnp.asarray(wfc_slab_np), bfc_slab=jnp.asarray(bfc_slab_np))

    logits, node_feats = forward(x, adj3, ev3, pool_mat, biobert_cls, eh, pnf,
                                 params, num_classes)
    jax.block_until_ready(logits)
    assert logits.shape == (G, num_classes)
    assert node_feats.shape == (G, D)
    assert bool(jnp.all(jnp.isfinite(logits)))
    assert bool(jnp.all(jnp.isfinite(node_feats)))
    print("KERNEL_OK")
</pallas_src>

<mosaic_0001>
module attributes {stable_mosaic.version = 11 : i64} {
  func.func @fused_forward_kernel(%arg0: memref<16x16xf32, #tpu.memory_space<vmem>>, %arg1: memref<16x16x1xf32, #tpu.memory_space<vmem>>, %arg2: memref<16x16x1xf32, #tpu.memory_space<vmem>>, %arg3: memref<2x16xf32, #tpu.memory_space<vmem>>, %arg4: memref<2x768xf32, #tpu.memory_space<vmem>>, %arg5: memref<4x32xf32, #tpu.memory_space<vmem>>, %arg6: memref<32x128xf32, #tpu.memory_space<vmem>>, %arg7: memref<16x32xf32, #tpu.memory_space<vmem>>, %arg8: memref<1x32xf32, #tpu.memory_space<vmem>>, %arg9: memref<16x32xf32, #tpu.memory_space<vmem>>, %arg10: memref<1x32xf32, #tpu.memory_space<vmem>>, %arg11: memref<1x1x32xf32, #tpu.memory_space<vmem>>, %arg12: memref<32x4xf32, #tpu.memory_space<vmem>>, %arg13: memref<1x32xf32, #tpu.memory_space<vmem>>, %arg14: memref<1x32xf32, #tpu.memory_space<vmem>>, %arg15: memref<1x32xf32, #tpu.memory_space<vmem>>, %arg16: memref<32x32xf32, #tpu.memory_space<vmem>>, %arg17: memref<1x32xf32, #tpu.memory_space<vmem>>, %arg18: memref<32x32xf32, #tpu.memory_space<vmem>>, %arg19: memref<1x32xf32, #tpu.memory_space<vmem>>, %arg20: memref<1x1x32xf32, #tpu.memory_space<vmem>>, %arg21: memref<32x4xf32, #tpu.memory_space<vmem>>, %arg22: memref<1x32xf32, #tpu.memory_space<vmem>>, %arg23: memref<1x32xf32, #tpu.memory_space<vmem>>, %arg24: memref<1x32xf32, #tpu.memory_space<vmem>>, %arg25: memref<32x32xf32, #tpu.memory_space<vmem>>, %arg26: memref<1x32xf32, #tpu.memory_space<vmem>>, %arg27: memref<32x32xf32, #tpu.memory_space<vmem>>, %arg28: memref<1x32xf32, #tpu.memory_space<vmem>>, %arg29: memref<1x1x32xf32, #tpu.memory_space<vmem>>, %arg30: memref<32x4xf32, #tpu.memory_space<vmem>>, %arg31: memref<1x32xf32, #tpu.memory_space<vmem>>, %arg32: memref<1x32xf32, #tpu.memory_space<vmem>>, %arg33: memref<1x32xf32, #tpu.memory_space<vmem>>, %arg34: memref<768x32xbf16, #tpu.memory_space<vmem>>, %arg35: memref<1x32xf32, #tpu.memory_space<vmem>>, %arg36: memref<1x32xf32, #tpu.memory_space<vmem>>, %arg37: memref<1x32xf32, #tpu.memory_space<vmem>>, %arg38: memref<32x32xf32, #tpu.memory_space<vmem>>, %arg39: memref<1x32xf32, #tpu.memory_space<vmem>>, %arg40: memref<32x32xf32, #tpu.memory_space<vmem>>, %arg41: memref<1x32xf32, #tpu.memory_space<vmem>>, %arg42: memref<32x32xf32, #tpu.memory_space<vmem>>, %arg43: memref<1x32xf32, #tpu.memory_space<vmem>>, %arg44: memref<1x32xf32, #tpu.memory_space<vmem>>, %arg45: memref<1x32xf32, #tpu.memory_space<vmem>>, %arg46: memref<32x128xf32, #tpu.memory_space<vmem>>, %arg47: memref<1x128xf32, #tpu.memory_space<vmem>>, %arg48: memref<2x128xf32, #tpu.memory_space<vmem>>) attributes {dimension_semantics = [], scalar_prefetch = 0 : i64, scratch_operands = 0 : i64, tpu.core_type = #tpu.core_type<tc>} {
    %c0 = arith.constant 0 : index
    %c0_0 = arith.constant 0 : index
    %c0_1 = arith.constant 0 : index
    %0 = vector.load %arg2[%c0, %c0_0, %c0_1] : memref<16x16x1xf32, #tpu.memory_space<vmem>>, vector<16x16x1xf32>
    %c0_2 = arith.constant 0 : index
    %c0_3 = arith.constant 0 : index
    %c0_4 = arith.constant 0 : index
    %1 = vector.load %arg1[%c0_2, %c0_3, %c0_4] : memref<16x16x1xf32, #tpu.memory_space<vmem>>, vector<16x16x1xf32>
    %cst = arith.constant 0.000000e+00 : f32
    %2 = vector.broadcast %cst : f32 to vector<16x16x1xf32>
    %3 = arith.cmpf ogt, %1, %2 : vector<16x16x1xf32>
    %cst_5 = arith.constant 0.000000e+00 : f32
    %cst_6 = arith.constant -1.000000e+30 : f32
    %4 = vector.broadcast %cst_5 : f32 to vector<16x16x1xf32>
    %5 = vector.broadcast %cst_6 : f32 to vector<16x16x1xf32>
    %6 = arith.select %3, %4, %5 : vector<16x16x1xi1>, vector<16x16x1xf32>
    %c0_7 = arith.constant 0 : index
    %c0_8 = arith.constant 0 : index
    %7 = vector.load %arg5[%c0_7, %c0_8] : memref<4x32xf32, #tpu.memory_space<vmem>>, vector<4x32xf32>
    %c0_9 = arith.constant 0 : index
    %c0_10 = arith.constant 0 : index
    %8 = vector.load %arg0[%c0_9, %c0_10] : memref<16x16xf32, #tpu.memory_space<vmem>>, vector<16x16xf32>
    %c0_11 = arith.constant 0 : index
    %c0_12 = arith.constant 0 : index
    %9 = vector.load %arg7[%c0_11, %c0_12] : memref<16x32xf32, #tpu.memory_space<vmem>>, vector<16x32xf32>
    %c0_13 = arith.constant 0 : index
    %c0_14 = arith.constant 0 : index
    %10 = vector.load %arg8[%c0_13, %c0_14] : memref<1x32xf32, #tpu.memory_space<vmem>>, vector<1x32xf32>
    %c0_15 = arith.constant 0 : index
    %c0_16 = arith.constant 0 : index
    %11 = vector.load %arg9[%c0_15, %c0_16] : memref<16x32xf32, #tpu.memory_space<vmem>>, vector<16x32xf32>
    %c0_17 = arith.constant 0 : index
    %c0_18 = arith.constant 0 : index
    %12 = vector.load %arg10[%c0_17, %c0_18] : memref<1x32xf32, #tpu.memory_space<vmem>>, vector<1x32xf32>
    %c0_19 = arith.constant 0 : index
    %c0_20 = arith.constant 0 : index
    %c0_21 = arith.constant 0 : index
    %13 = vector.load %arg11[%c0_19, %c0_20, %c0_21] : memref<1x1x32xf32, #tpu.memory_space<vmem>>, vector<1x1x32xf32>
    %c0_22 = arith.constant 0 : index
    %c0_23 = arith.constant 0 : index
    %14 = vector.load %arg12[%c0_22, %c0_23] : memref<32x4xf32, #tpu.memory_space<vmem>>, vector<32x4xf32>
    %c0_24 = arith.constant 0 : index
    %c0_25 = arith.constant 0 : index
    %15 = vector.load %arg13[%c0_24, %c0_25] : memref<1x32xf32, #tpu.memory_space<vmem>>, vector<1x32xf32>
    %c0_26 = arith.constant 0 : index
    %c0_27 = arith.constant 0 : index
    %16 = vector.load %arg14[%c0_26, %c0_27] : memref<1x32xf32, #tpu.memory_space<vmem>>, vector<1x32xf32>
    %c0_28 = arith.constant 0 : index
    %c0_29 = arith.constant 0 : index
    %17 = vector.load %arg15[%c0_28, %c0_29] : memref<1x32xf32, #tpu.memory_space<vmem>>, vector<1x32xf32>
    %cst_30 = arith.constant dense<0.000000e+00> : vector<16x32xf32>
    %18 = tpu.matmul %8, %9, %cst_30 {dimension_numbers = #tpu.dot_dimension_numbers<[1], [0], [0], [1], [0, 0, 1, 1], [], []>} : vector<16x16xf32>, vector<16x32xf32>, vector<16x32xf32> -> vector<16x32xf32>
    %19 = vector.broadcast %10 : vector<1x32xf32> to vector<16x32xf32>
    %20 = arith.addf %18, %19 : vector<16x32xf32>
    %cst_31 = arith.constant dense<0.000000e+00> : vector<16x32xf32>
    %21 = tpu.matmul %8, %11, %cst_31 {dimension_numbers = #tpu.dot_dimension_numbers<[1], [0], [0], [1], [0, 0, 1, 1], [], []>} : vector<16x16xf32>, vector<16x32xf32>, vector<16x32xf32> -> vector<16x32xf32>
    %22 = vector.broadcast %12 : vector<1x32xf32> to vector<16x32xf32>
    %23 = arith.addf %21, %22 : vector<16x32xf32>
    %24 = vector.shape_cast %23 : vector<16x32xf32> to vector<16x1x32xf32>
    %25 = vector.shape_cast %20 : vector<16x32xf32> to vector<1x16x32xf32>
    %26 = vector.broadcast %24 : vector<16x1x32xf32> to vector<16x16x32xf32>
    %27 = vector.broadcast %25 : vector<1x16x32xf32> to vector<16x16x32xf32>
    %28 = arith.addf %26, %27 : vector<16x16x32xf32>
    %29 = vector.broadcast %0 : vector<16x16x1xf32> to vector<16x16x32xf32>
    %30 = vector.broadcast %13 : vector<1x1x32xf32> to vector<16x16x32xf32>
    %31 = arith.mulf %29, %30 : vector<16x16x32xf32>
    %32 = arith.addf %28, %31 : vector<16x16x32xf32>
    %cst_32 = arith.constant 0.000000e+00 : f32
    %33 = vector.broadcast %cst_32 : f32 to vector<16x16x32xf32>
    %34 = arith.cmpf ogt, %32, %33 : vector<16x16x32xf32>
    %cst_33 = arith.constant 2.000000e-01 : f32
    %35 = vector.broadcast %cst_33 : f32 to vector<16x16x32xf32>
    %36 = arith.mulf %35, %32 : vector<16x16x32xf32>
    %37 = arith.select %34, %32, %36 : vector<16x16x32xi1>, vector<16x16x32xf32>
    %38 = vector.shape_cast %37 : vector<16x16x32xf32> to vector<256x32xf32>
    %39 = arith.truncf %38 : vector<256x32xf32> to vector<256x32xbf16>
    %40 = arith.truncf %14 : vector<32x4xf32> to vector<32x4xbf16>
    %cst_34 = arith.constant dense<0.000000e+00> : vector<256x4xf32>
    %41 = tpu.matmul %39, %40, %cst_34 {dimension_numbers = #tpu.dot_dimension_numbers<[1], [0], [0], [1], [0, 0, 1, 1], [], []>} : vector<256x32xbf16>, vector<32x4xbf16>, vector<256x4xf32> -> vector<256x4xf32>
    %42 = vector.shape_cast %41 : vector<256x4xf32> to vector<16x16x4xf32>
    %43 = vector.broadcast %6 : vector<16x16x1xf32> to vector<16x16x4xf32>
    %44 = arith.addf %42, %43 : vector<16x16x4xf32>
    %cst_35 = arith.constant dense<0xFF800000> : vector<16x4xf32>
    %45 = vector.multi_reduction <maximumf>, %44, %cst_35 [1] : vector<16x16x4xf32> to vector<16x4xf32>
    %46 = vector.shape_cast %45 : vector<16x4xf32> to vector<16x1x4xf32>
    %47 = vector.broadcast %46 : vector<16x1x4xf32> to vector<16x16x4xf32>
    %48 = arith.subf %44, %47 : vector<16x16x4xf32>
    %49 = math.exp %48 : vector<16x16x4xf32>
    %cst_36 = arith.constant dense<0.000000e+00> : vector<16x4xf32>
    %50 = vector.multi_reduction <add>, %49, %cst_36 [1] : vector<16x16x4xf32> to vector<16x4xf32>
    %51 = vector.shape_cast %50 : vector<16x4xf32> to vector<16x1x4xf32>
    %52 = tpu.reciprocal %51 {approx = true} : vector<16x1x4xf32> -> vector<16x1x4xf32>
    %53 = vector.broadcast %52 : vector<16x1x4xf32> to vector<16x16x4xf32>
    %54 = arith.mulf %49, %53 : vector<16x16x4xf32>
    %55 = vector.shape_cast %54 : vector<16x16x4xf32> to vector<256x4xf32>
    %cst_37 = arith.constant dense<0.000000e+00> : vector<256x32xf32>
    %56 = tpu.matmul %55, %7, %cst_37 {dimension_numbers = #tpu.dot_dimension_numbers<[1], [0], [0], [1], [0, 0, 1, 1], [], []>} : vector<256x4xf32>, vector<4x32xf32>, vector<256x32xf32> -> vector<256x32xf32>
    %57 = vector.shape_cast %56 : vector<256x32xf32> to vector<16x16x32xf32>
    %58 = vector.shape_cast %20 : vector<16x32xf32> to vector<1x16x32xf32>
    %59 = vector.broadcast %58 : vector<1x16x32xf32> to vector<16x16x32xf32>
    %60 = arith.mulf %57, %59 : vector<16x16x32xf32>
    %cst_38 = arith.constant dense<0.000000e+00> : vector<16x32xf32>
    %61 = vector.multi_reduction <add>, %60, %cst_38 [1] : vector<16x16x32xf32> to vector<16x32xf32>
    %62 = vector.broadcast %15 : vector<1x32xf32> to vector<16x32xf32>
    %63 = arith.addf %61, %62 : vector<16x32xf32>
    %64 = vector.broadcast %16 : vector<1x32xf32> to vector<16x32xf32>
    %65 = arith.mulf %63, %64 : vector<16x32xf32>
    %66 = vector.broadcast %17 : vector<1x32xf32> to vector<16x32xf32>
    %67 = arith.addf %65, %66 : vector<16x32xf32>
    %cst_39 = arith.constant 0.000000e+00 : f32
    %68 = vector.broadcast %cst_39 : f32 to vector<16x32xf32>
    %69 = arith.cmpf ogt, %67, %68 : vector<16x32xf32>
    %cst_40 = arith.constant 0.000000e+00 : f32
    %70 = vector.broadcast %cst_40 : f32 to vector<16x32xf32>
    %71 = arith.minimumf %67, %70 : vector<16x32xf32>
    %72 = math.exp %71 : vector<16x32xf32>
    %cst_41 = arith.constant 1.000000e+00 : f32
    %73 = vector.broadcast %cst_41 : f32 to vector<16x32xf32>
    %74 = arith.subf %72, %73 : vector<16x32xf32>
    %75 = arith.select %69, %67, %74 : vector<16x32xi1>, vector<16x32xf32>
    %c0_42 = arith.constant 0 : index
    %c0_43 = arith.constant 0 : index
    %76 = vector.load %arg16[%c0_42, %c0_43] : memref<32x32xf32, #tpu.memory_space<vmem>>, vector<32x32xf32>
    %c0_44 = arith.constant 0 : index
    %c0_45 = arith.constant 0 : index
    %77 = vector.load %arg17[%c0_44, %c0_45] : memref<1x32xf32, #tpu.memory_space<vmem>>, vector<1x32xf32>
    %c0_46 = arith.constant 0 : index
    %c0_47 = arith.constant 0 : index
    %78 = vector.load %arg18[%c0_46, %c0_47] : memref<32x32xf32, #tpu.memory_space<vmem>>, vector<32x32xf32>
    %c0_48 = arith.constant 0 : index
    %c0_49 = arith.constant 0 : index
    %79 = vector.load %arg19[%c0_48, %c0_49] : memref<1x32xf32, #tpu.memory_space<vmem>>, vector<1x32xf32>
    %c0_50 = arith.constant 0 : index
    %c0_51 = arith.constant 0 : index
    %c0_52 = arith.constant 0 : index
    %80 = vector.load %arg20[%c0_50, %c0_51, %c0_52] : memref<1x1x32xf32, #tpu.memory_space<vmem>>, vector<1x1x32xf32>
    %c0_53 = arith.constant 0 : index
    %c0_54 = arith.constant 0 : index
    %81 = vector.load %arg21[%c0_53, %c0_54] : memref<32x4xf32, #tpu.memory_space<vmem>>, vector<32x4xf32>
    %c0_55 = arith.constant 0 : index
    %c0_56 = arith.constant 0 : index
    %82 = vector.load %arg22[%c0_55, %c0_56] : memref<1x32xf32, #tpu.memory_space<vmem>>, vector<1x32xf32>
    %c0_57 = arith.constant 0 : index
    %c0_58 = arith.constant 0 : index
    %83 = vector.load %arg23[%c0_57, %c0_58] : memref<1x32xf32, #tpu.memory_space<vmem>>, vector<1x32xf32>
    %c0_59 = arith.constant 0 : index
    %c0_60 = arith.constant 0 : index
    %84 = vector.load %arg24[%c0_59, %c0_60] : memref<1x32xf32, #tpu.memory_space<vmem>>, vector<1x32xf32>
    %cst_61 = arith.constant dense<0.000000e+00> : vector<16x32xf32>
    %85 = tpu.matmul %75, %76, %cst_61 {dimension_numbers = #tpu.dot_dimension_numbers<[1], [0], [0], [1], [0, 0, 1, 1], [], []>} : vector<16x32xf32>, vector<32x32xf32>, vector<16x32xf32> -> vector<16x32xf32>
    %86 = vector.broadcast %77 : vector<1x32xf32> to vector<16x32xf32>
    %87 = arith.addf %85, %86 : vector<16x32xf32>
    %cst_62 = arith.constant dense<0.000000e+00> : vector<16x32xf32>
    %88 = tpu.matmul %75, %78, %cst_62 {dimension_numbers = #tpu.dot_dimension_numbers<[1], [0], [0], [1], [0, 0, 1, 1], [], []>} : vector<16x32xf32>, vector<32x32xf32>, vector<16x32xf32> -> vector<16x32xf32>
    %89 = vector.broadcast %79 : vector<1x32xf32> to vector<16x32xf32>
    %90 = arith.addf %88, %89 : vector<16x32xf32>
    %91 = vector.shape_cast %90 : vector<16x32xf32> to vector<16x1x32xf32>
    %92 = vector.shape_cast %87 : vector<16x32xf32> to vector<1x16x32xf32>
    %93 = vector.broadcast %91 : vector<16x1x32xf32> to vector<16x16x32xf32>
    %94 = vector.broadcast %92 : vector<1x16x32xf32> to vector<16x16x32xf32>
    %95 = arith.addf %93, %94 : vector<16x16x32xf32>
    %96 = vector.broadcast %0 : vector<16x16x1xf32> to vector<16x16x32xf32>
    %97 = vector.broadcast %80 : vector<1x1x32xf32> to vector<16x16x32xf32>
    %98 = arith.mulf %96, %97 : vector<16x16x32xf32>
    %99 = arith.addf %95, %98 : vector<16x16x32xf32>
    %cst_63 = arith.constant 0.000000e+00 : f32
    %100 = vector.broadcast %cst_63 : f32 to vector<16x16x32xf32>
    %101 = arith.cmpf ogt, %99, %100 : vector<16x16x32xf32>
    %cst_64 = arith.constant 2.000000e-01 : f32
    %102 = vector.broadcast %cst_64 : f32 to vector<16x16x32xf32>
    %103 = arith.mulf %102, %99 : vector<16x16x32xf32>
    %104 = arith.select %101, %99, %103 : vector<16x16x32xi1>, vector<16x16x32xf32>
    %105 = vector.shape_cast %104 : vector<16x16x32xf32> to vector<256x32xf32>
    %106 = arith.truncf %105 : vector<256x32xf32> to vector<256x32xbf16>
    %107 = arith.truncf %81 : vector<32x4xf32> to vector<32x4xbf16>
    %cst_65 = arith.constant dense<0.000000e+00> : vector<256x4xf32>
    %108 = tpu.matmul %106, %107, %cst_65 {dimension_numbers = #tpu.dot_dimension_numbers<[1], [0], [0], [1], [0, 0, 1, 1], [], []>} : vector<256x32xbf16>, vector<32x4xbf16>, vector<256x4xf32> -> vector<256x4xf32>
    %109 = vector.shape_cast %108 : vector<256x4xf32> to vector<16x16x4xf32>
    %110 = vector.broadcast %6 : vector<16x16x1xf32> to vector<16x16x4xf32>
    %111 = arith.addf %109, %110 : vector<16x16x4xf32>
    %cst_66 = arith.constant dense<0xFF800000> : vector<16x4xf32>
    %112 = vector.multi_reduction <maximumf>, %111, %cst_66 [1] : vector<16x16x4xf32> to vector<16x4xf32>
    %113 = vector.shape_cast %112 : vector<16x4xf32> to vector<16x1x4xf32>
    %114 = vector.broadcast %113 : vector<16x1x4xf32> to vector<16x16x4xf32>
    %115 = arith.subf %111, %114 : vector<16x16x4xf32>
    %116 = math.exp %115 : vector<16x16x4xf32>
    %cst_67 = arith.constant dense<0.000000e+00> : vector<16x4xf32>
    %117 = vector.multi_reduction <add>, %116, %cst_67 [1] : vector<16x16x4xf32> to vector<16x4xf32>
    %118 = vector.shape_cast %117 : vector<16x4xf32> to vector<16x1x4xf32>
    %119 = tpu.reciprocal %118 {approx = true} : vector<16x1x4xf32> -> vector<16x1x4xf32>
    %120 = vector.broadcast %119 : vector<16x1x4xf32> to vector<16x16x4xf32>
    %121 = arith.mulf %116, %120 : vector<16x16x4xf32>
    %122 = vector.shape_cast %121 : vector<16x16x4xf32> to vector<256x4xf32>
    %cst_68 = arith.constant dense<0.000000e+00> : vector<256x32xf32>
    %123 = tpu.matmul %122, %7, %cst_68 {dimension_numbers = #tpu.dot_dimension_numbers<[1], [0], [0], [1], [0, 0, 1, 1], [], []>} : vector<256x4xf32>, vector<4x32xf32>, vector<256x32xf32> -> vector<256x32xf32>
    %124 = vector.shape_cast %123 : vector<256x32xf32> to vector<16x16x32xf32>
    %125 = vector.shape_cast %87 : vector<16x32xf32> to vector<1x16x32xf32>
    %126 = vector.broadcast %125 : vector<1x16x32xf32> to vector<16x16x32xf32>
    %127 = arith.mulf %124, %126 : vector<16x16x32xf32>
    %cst_69 = arith.constant dense<0.000000e+00> : vector<16x32xf32>
    %128 = vector.multi_reduction <add>, %127, %cst_69 [1] : vector<16x16x32xf32> to vector<16x32xf32>
    %129 = vector.broadcast %82 : vector<1x32xf32> to vector<16x32xf32>
    %130 = arith.addf %128, %129 : vector<16x32xf32>
    %131 = vector.broadcast %83 : vector<1x32xf32> to vector<16x32xf32>
    %132 = arith.mulf %130, %131 : vector<16x32xf32>
    %133 = vector.broadcast %84 : vector<1x32xf32> to vector<16x32xf32>
    %134 = arith.addf %132, %133 : vector<16x32xf32>
    %cst_70 = arith.constant 0.000000e+00 : f32
    %135 = vector.broadcast %cst_70 : f32 to vector<16x32xf32>
    %136 = arith.cmpf ogt, %134, %135 : vector<16x32xf32>
    %cst_71 = arith.constant 0.000000e+00 : f32
    %137 = vector.broadcast %cst_71 : f32 to vector<16x32xf32>
    %138 = arith.minimumf %134, %137 : vector<16x32xf32>
    %139 = math.exp %138 : vector<16x32xf32>
    %cst_72 = arith.constant 1.000000e+00 : f32
    %140 = vector.broadcast %cst_72 : f32 to vector<16x32xf32>
    %141 = arith.subf %139, %140 : vector<16x32xf32>
    %142 = arith.select %136, %134, %141 : vector<16x32xi1>, vector<16x32xf32>
    %c0_73 = arith.constant 0 : index
    %c0_74 = arith.constant 0 : index
    %143 = vector.load %arg25[%c0_73, %c0_74] : memref<32x32xf32, #tpu.memory_space<vmem>>, vector<32x32xf32>
    %c0_75 = arith.constant 0 : index
    %c0_76 = arith.constant 0 : index
    %144 = vector.load %arg26[%c0_75, %c0_76] : memref<1x32xf32, #tpu.memory_space<vmem>>, vector<1x32xf32>
    %c0_77 = arith.constant 0 : index
    %c0_78 = arith.constant 0 : index
    %145 = vector.load %arg27[%c0_77, %c0_78] : memref<32x32xf32, #tpu.memory_space<vmem>>, vector<32x32xf32>
    %c0_79 = arith.constant 0 : index
    %c0_80 = arith.constant 0 : index
    %146 = vector.load %arg28[%c0_79, %c0_80] : memref<1x32xf32, #tpu.memory_space<vmem>>, vector<1x32xf32>
    %c0_81 = arith.constant 0 : index
    %c0_82 = arith.constant 0 : index
    %c0_83 = arith.constant 0 : index
    %147 = vector.load %arg29[%c0_81, %c0_82, %c0_83] : memref<1x1x32xf32, #tpu.memory_space<vmem>>, vector<1x1x32xf32>
    %c0_84 = arith.constant 0 : index
    %c0_85 = arith.constant 0 : index
    %148 = vector.load %arg30[%c0_84, %c0_85] : memref<32x4xf32, #tpu.memory_space<vmem>>, vector<32x4xf32>
    %c0_86 = arith.constant 0 : index
    %c0_87 = arith.constant 0 : index
    %149 = vector.load %arg31[%c0_86, %c0_87] : memref<1x32xf32, #tpu.memory_space<vmem>>, vector<1x32xf32>
    %c0_88 = arith.constant 0 : index
    %c0_89 = arith.constant 0 : index
    %150 = vector.load %arg32[%c0_88, %c0_89] : memref<1x32xf32, #tpu.memory_space<vmem>>, vector<1x32xf32>
    %c0_90 = arith.constant 0 : index
    %c0_91 = arith.constant 0 : index
    %151 = vector.load %arg33[%c0_90, %c0_91] : memref<1x32xf32, #tpu.memory_space<vmem>>, vector<1x32xf32>
    %cst_92 = arith.constant dense<0.000000e+00> : vector<16x32xf32>
    %152 = tpu.matmul %142, %143, %cst_92 {dimension_numbers = #tpu.dot_dimension_numbers<[1], [0], [0], [1], [0, 0, 1, 1], [], []>} : vector<16x32xf32>, vector<32x32xf32>, vector<16x32xf32> -> vector<16x32xf32>
    %153 = vector.broadcast %144 : vector<1x32xf32> to vector<16x32xf32>
    %154 = arith.addf %152, %153 : vector<16x32xf32>
    %cst_93 = arith.constant dense<0.000000e+00> : vector<16x32xf32>
    %155 = tpu.matmul %142, %145, %cst_93 {dimension_numbers = #tpu.dot_dimension_numbers<[1], [0], [0], [1], [0, 0, 1, 1], [], []>} : vector<16x32xf32>, vector<32x32xf32>, vector<16x32xf32> -> vector<16x32xf32>
    %156 = vector.broadcast %146 : vector<1x32xf32> to vector<16x32xf32>
    %157 = arith.addf %155, %156 : vector<16x32xf32>
    %158 = vector.shape_cast %157 : vector<16x32xf32> to vector<16x1x32xf32>
    %159 = vector.shape_cast %154 : vector<16x32xf32> to vector<1x16x32xf32>
    %160 = vector.broadcast %158 : vector<16x1x32xf32> to vector<16x16x32xf32>
    %161 = vector.broadcast %159 : vector<1x16x32xf32> to vector<16x16x32xf32>
    %162 = arith.addf %160, %161 : vector<16x16x32xf32>
    %163 = vector.broadcast %0 : vector<16x16x1xf32> to vector<16x16x32xf32>
    %164 = vector.broadcast %147 : vector<1x1x32xf32> to vector<16x16x32xf32>
    %165 = arith.mulf %163, %164 : vector<16x16x32xf32>
    %166 = arith.addf %162, %165 : vector<16x16x32xf32>
    %cst_94 = arith.constant 0.000000e+00 : f32
    %167 = vector.broadcast %cst_94 : f32 to vector<16x16x32xf32>
    %168 = arith.cmpf ogt, %166, %167 : vector<16x16x32xf32>
    %cst_95 = arith.constant 2.000000e-01 : f32
    %169 = vector.broadcast %cst_95 : f32 to vector<16x16x32xf32>
    %170 = arith.mulf %169, %166 : vector<16x16x32xf32>
    %171 = arith.select %168, %166, %170 : vector<16x16x32xi1>, vector<16x16x32xf32>
    %172 = vector.shape_cast %171 : vector<16x16x32xf32> to vector<256x32xf32>
    %173 = arith.truncf %172 : vector<256x32xf32> to vector<256x32xbf16>
    %174 = arith.truncf %148 : vector<32x4xf32> to vector<32x4xbf16>
    %cst_96 = arith.constant dense<0.000000e+00> : vector<256x4xf32>
    %175 = tpu.matmul %173, %174, %cst_96 {dimension_numbers = #tpu.dot_dimension_numbers<[1], [0], [0], [1], [0, 0, 1, 1], [], []>} : vector<256x32xbf16>, vector<32x4xbf16>, vector<256x4xf32> -> vector<256x4xf32>
    %176 = vector.shape_cast %175 : vector<256x4xf32> to vector<16x16x4xf32>
    %177 = vector.broadcast %6 : vector<16x16x1xf32> to vector<16x16x4xf32>
    %178 = arith.addf %176, %177 : vector<16x16x4xf32>
    %cst_97 = arith.constant dense<0xFF800000> : vector<16x4xf32>
    %179 = vector.multi_reduction <maximumf>, %178, %cst_97 [1] : vector<16x16x4xf32> to vector<16x4xf32>
    %180 = vector.shape_cast %179 : vector<16x4xf32> to vector<16x1x4xf32>
    %181 = vector.broadcast %180 : vector<16x1x4xf32> to vector<16x16x4xf32>
    %182 = arith.subf %178, %181 : vector<16x16x4xf32>
    %183 = math.exp %182 : vector<16x16x4xf32>
    %cst_98 = arith.constant dense<0.000000e+00> : vector<16x4xf32>
    %184 = vector.multi_reduction <add>, %183, %cst_98 [1] : vector<16x16x4xf32> to vector<16x4xf32>
    %185 = vector.shape_cast %184 : vector<16x4xf32> to vector<16x1x4xf32>
    %186 = tpu.reciprocal %185 {approx = true} : vector<16x1x4xf32> -> vector<16x1x4xf32>
    %187 = vector.broadcast %186 : vector<16x1x4xf32> to vector<16x16x4xf32>
    %188 = arith.mulf %183, %187 : vector<16x16x4xf32>
    %189 = vector.shape_cast %188 : vector<16x16x4xf32> to vector<256x4xf32>
    %cst_99 = arith.constant dense<0.000000e+00> : vector<256x32xf32>
    %190 = tpu.matmul %189, %7, %cst_99 {dimension_numbers = #tpu.dot_dimension_numbers<[1], [0], [0], [1], [0, 0, 1, 1], [], []>} : vector<256x4xf32>, vector<4x32xf32>, vector<256x32xf32> -> vector<256x32xf32>
    %191 = vector.shape_cast %190 : vector<256x32xf32> to vector<16x16x32xf32>
    %192 = vector.shape_cast %154 : vector<16x32xf32> to vector<1x16x32xf32>
    %193 = vector.broadcast %192 : vector<1x16x32xf32> to vector<16x16x32xf32>
    %194 = arith.mulf %191, %193 : vector<16x16x32xf32>
    %cst_100 = arith.constant dense<0.000000e+00> : vector<16x32xf32>
    %195 = vector.multi_reduction <add>, %194, %cst_100 [1] : vector<16x16x32xf32> to vector<16x32xf32>
    %196 = vector.broadcast %149 : vector<1x32xf32> to vector<16x32xf32>
    %197 = arith.addf %195, %196 : vector<16x32xf32>
    %198 = vector.broadcast %150 : vector<1x32xf32> to vector<16x32xf32>
    %199 = arith.mulf %197, %198 : vector<16x32xf32>
    %200 = vector.broadcast %151 : vector<1x32xf32> to vector<16x32xf32>
    %201 = arith.addf %199, %200 : vector<16x32xf32>
    %cst_101 = arith.constant 0.000000e+00 : f32
    %202 = vector.broadcast %cst_101 : f32 to vector<16x32xf32>
    %203 = arith.cmpf ogt, %201, %202 : vector<16x32xf32>
    %cst_102 = arith.constant 0.000000e+00 : f32
    %204 = vector.broadcast %cst_102 : f32 to vector<16x32xf32>
    %205 = arith.minimumf %201, %204 : vector<16x32xf32>
    %206 = math.exp %205 : vector<16x32xf32>
    %cst_103 = arith.constant 1.000000e+00 : f32
    %207 = vector.broadcast %cst_103 : f32 to vector<16x32xf32>
    %208 = arith.subf %206, %207 : vector<16x32xf32>
    %209 = arith.select %203, %201, %208 : vector<16x32xi1>, vector<16x32xf32>
    %c0_104 = arith.constant 0 : index
    %c0_105 = arith.constant 0 : index
    %210 = vector.load %arg3[%c0_104, %c0_105] : memref<2x16xf32, #tpu.memory_space<vmem>>, vector<2x16xf32>
    %cst_106 = arith.constant dense<0.000000e+00> : vector<2x32xf32>
    %211 = tpu.matmul %210, %209, %cst_106 {dimension_numbers = #tpu.dot_dimension_numbers<[1], [0], [0], [1], [0, 0, 1, 1], [], []>} : vector<2x16xf32>, vector<16x32xf32>, vector<2x32xf32> -> vector<2x32xf32>
    %c0_107 = arith.constant 0 : index
    %c0_108 = arith.constant 0 : index
    %212 = vector.load %arg4[%c0_107, %c0_108] : memref<2x768xf32, #tpu.memory_space<vmem>>, vector<2x768xf32>
    %213 = arith.truncf %212 : vector<2x768xf32> to vector<2x768xbf16>
    %c0_109 = arith.constant 0 : index
    %c0_110 = arith.constant 0 : index
    %214 = vector.load %arg34[%c0_109, %c0_110] : memref<768x32xbf16, #tpu.memory_space<vmem>>, vector<768x32xbf16>
    %cst_111 = arith.constant dense<0.000000e+00> : vector<2x32xf32>
    %215 = tpu.matmul %213, %214, %cst_111 {dimension_numbers = #tpu.dot_dimension_numbers<[1], [0], [0], [1], [0, 0, 1, 1], [], []>} : vector<2x768xbf16>, vector<768x32xbf16>, vector<2x32xf32> -> vector<2x32xf32>
    %c0_112 = arith.constant 0 : index
    %c0_113 = arith.constant 0 : index
    %216 = vector.load %arg35[%c0_112, %c0_113] : memref<1x32xf32, #tpu.memory_space<vmem>>, vector<1x32xf32>
    %217 = vector.broadcast %216 : vector<1x32xf32> to vector<2x32xf32>
    %218 = arith.addf %215, %217 : vector<2x32xf32>
    %c0_114 = arith.constant 0 : index
    %c0_115 = arith.constant 0 : index
    %219 = vector.load %arg36[%c0_114, %c0_115] : memref<1x32xf32, #tpu.memory_space<vmem>>, vector<1x32xf32>
    %c0_116 = arith.constant 0 : index
    %c0_117 = arith.constant 0 : index
    %220 = vector.load %arg37[%c0_116, %c0_117] : memref<1x32xf32, #tpu.memory_space<vmem>>, vector<1x32xf32>
    %cst_118 = arith.constant dense<0.000000e+00> : vector<2xf32>
    %221 = vector.multi_reduction <add>, %218, %cst_118 [1] : vector<2x32xf32> to vector<2xf32>
    %222 = vector.shape_cast %221 : vector<2xf32> to vector<2x1xf32>
    %cst_119 = arith.constant 3.200000e+01 : f32
    %223 = vector.broadcast %cst_119 : f32 to vector<2x1xf32>
    %224 = arith.divf %222, %223 : vector<2x1xf32>
    %225 = vector.broadcast %224 : vector<2x1xf32> to vector<2x32xf32>
    %226 = arith.subf %218, %225 : vector<2x32xf32>
    %227 = arith.mulf %226, %226 : vector<2x32xf32>
    %cst_120 = arith.constant dense<0.000000e+00> : vector<2xf32>
    %228 = vector.multi_reduction <add>, %227, %cst_120 [1] : vector<2x32xf32> to vector<2xf32>
    %229 = vector.shape_cast %228 : vector<2xf32> to vector<2x1xf32>
    %cst_121 = arith.constant 3.200000e+01 : f32
    %230 = vector.broadcast %cst_121 : f32 to vector<2x1xf32>
    %231 = arith.divf %229, %230 : vector<2x1xf32>
    %232 = vector.broadcast %224 : vector<2x1xf32> to vector<2x32xf32>
    %233 = arith.subf %218, %232 : vector<2x32xf32>
    %cst_122 = arith.constant 9.99999974E-6 : f32
    %234 = vector.broadcast %cst_122 : f32 to vector<2x1xf32>
    %235 = arith.addf %231, %234 : vector<2x1xf32>
    %236 = math.rsqrt %235 : vector<2x1xf32>
    %237 = vector.broadcast %236 : vector<2x1xf32> to vector<2x32xf32>
    %238 = arith.mulf %233, %237 : vector<2x32xf32>
    %239 = vector.broadcast %219 : vector<1x32xf32> to vector<2x32xf32>
    %240 = arith.mulf %238, %239 : vector<2x32xf32>
    %241 = vector.broadcast %220 : vector<1x32xf32> to vector<2x32xf32>
    %242 = arith.addf %240, %241 : vector<2x32xf32>
    %c0_123 = arith.constant 0 : index
    %c0_124 = arith.constant 0 : index
    %243 = vector.load %arg38[%c0_123, %c0_124] : memref<32x32xf32, #tpu.memory_space<vmem>>, vector<32x32xf32>
    %cst_125 = arith.constant dense<0.000000e+00> : vector<2x32xf32>
    %244 = tpu.matmul %242, %243, %cst_125 {dimension_numbers = #tpu.dot_dimension_numbers<[1], [0], [0], [1], [0, 0, 1, 1], [], []>} : vector<2x32xf32>, vector<32x32xf32>, vector<2x32xf32> -> vector<2x32xf32>
    %c0_126 = arith.constant 0 : index
    %c0_127 = arith.constant 0 : index
    %245 = vector.load %arg39[%c0_126, %c0_127] : memref<1x32xf32, #tpu.memory_space<vmem>>, vector<1x32xf32>
    %246 = vector.broadcast %245 : vector<1x32xf32> to vector<2x32xf32>
    %247 = arith.addf %244, %246 : vector<2x32xf32>
    %c0_128 = arith.constant 0 : index
    %c0_129 = arith.constant 0 : index
    %248 = vector.load %arg40[%c0_128, %c0_129] : memref<32x32xf32, #tpu.memory_space<vmem>>, vector<32x32xf32>
    %cst_130 = arith.constant dense<0.000000e+00> : vector<2x32xf32>
    %249 = tpu.matmul %247, %248, %cst_130 {dimension_numbers = #tpu.dot_dimension_numbers<[1], [0], [0], [1], [0, 0, 1, 1], [], []>} : vector<2x32xf32>, vector<32x32xf32>, vector<2x32xf32> -> vector<2x32xf32>
    %c0_131 = arith.constant 0 : index
    %c0_132 = arith.constant 0 : index
    %250 = vector.load %arg41[%c0_131, %c0_132] : memref<1x32xf32, #tpu.memory_space<vmem>>, vector<1x32xf32>
    %251 = vector.broadcast %250 : vector<1x32xf32> to vector<2x32xf32>
    %252 = arith.addf %249, %251 : vector<2x32xf32>
    %cst_133 = arith.constant 0.000000e+00 : f32
    %253 = vector.broadcast %cst_133 : f32 to vector<2x32xf32>
    %254 = arith.maximumf %252, %253 : vector<2x32xf32>
    %c0_134 = arith.constant 0 : index
    %c0_135 = arith.constant 0 : index
    %255 = vector.load %arg42[%c0_134, %c0_135] : memref<32x32xf32, #tpu.memory_space<vmem>>, vector<32x32xf32>
    %cst_136 = arith.constant dense<0.000000e+00> : vector<2x32xf32>
    %256 = tpu.matmul %254, %255, %cst_136 {dimension_numbers = #tpu.dot_dimension_numbers<[1], [0], [0], [1], [0, 0, 1, 1], [], []>} : vector<2x32xf32>, vector<32x32xf32>, vector<2x32xf32> -> vector<2x32xf32>
    %c0_137 = arith.constant 0 : index
    %c0_138 = arith.constant 0 : index
    %257 = vector.load %arg43[%c0_137, %c0_138] : memref<1x32xf32, #tpu.memory_space<vmem>>, vector<1x32xf32>
    %258 = vector.broadcast %257 : vector<1x32xf32> to vector<2x32xf32>
    %259 = arith.addf %256, %258 : vector<2x32xf32>
    %260 = arith.addf %247, %259 : vector<2x32xf32>
    %c0_139 = arith.constant 0 : index
    %c0_140 = arith.constant 0 : index
    %261 = vector.load %arg44[%c0_139, %c0_140] : memref<1x32xf32, #tpu.memory_space<vmem>>, vector<1x32xf32>
    %c0_141 = arith.constant 0 : index
    %c0_142 = arith.constant 0 : index
    %262 = vector.load %arg45[%c0_141, %c0_142] : memref<1x32xf32, #tpu.memory_space<vmem>>, vector<1x32xf32>
    %cst_143 = arith.constant dense<0.000000e+00> : vector<2xf32>
    %263 = vector.multi_reduction <add>, %260, %cst_143 [1] : vector<2x32xf32> to vector<2xf32>
    %264 = vector.shape_cast %263 : vector<2xf32> to vector<2x1xf32>
    %cst_144 = arith.constant 3.200000e+01 : f32
    %265 = vector.broadcast %cst_144 : f32 to vector<2x1xf32>
    %266 = arith.divf %264, %265 : vector<2x1xf32>
    %267 = vector.broadcast %266 : vector<2x1xf32> to vector<2x32xf32>
    %268 = arith.subf %260, %267 : vector<2x32xf32>
    %269 = arith.mulf %268, %268 : vector<2x32xf32>
    %cst_145 = arith.constant dense<0.000000e+00> : vector<2xf32>
    %270 = vector.multi_reduction <add>, %269, %cst_145 [1] : vector<2x32xf32> to vector<2xf32>
    %271 = vector.shape_cast %270 : vector<2xf32> to vector<2x1xf32>
    %cst_146 = arith.constant 3.200000e+01 : f32
    %272 = vector.broadcast %cst_146 : f32 to vector<2x1xf32>
    %273 = arith.divf %271, %272 : vector<2x1xf32>
    %274 = vector.broadcast %266 : vector<2x1xf32> to vector<2x32xf32>
    %275 = arith.subf %260, %274 : vector<2x32xf32>
    %cst_147 = arith.constant 9.99999974E-6 : f32
    %276 = vector.broadcast %cst_147 : f32 to vector<2x1xf32>
    %277 = arith.addf %273, %276 : vector<2x1xf32>
    %278 = math.rsqrt %277 : vector<2x1xf32>
    %279 = vector.broadcast %278 : vector<2x1xf32> to vector<2x32xf32>
    %280 = arith.mulf %275, %279 : vector<2x32xf32>
    %281 = vector.broadcast %261 : vector<1x32xf32> to vector<2x32xf32>
    %282 = arith.mulf %280, %281 : vector<2x32xf32>
    %283 = vector.broadcast %262 : vector<1x32xf32> to vector<2x32xf32>
    %284 = arith.addf %282, %283 : vector<2x32xf32>
    %c0_148 = arith.constant 0 : index
    %c0_149 = arith.constant 0 : index
    %285 = vector.load %arg46[%c0_148, %c0_149] : memref<32x128xf32, #tpu.memory_space<vmem>>, vector<32x128xf32>
    %cst_150 = arith.constant dense<0.000000e+00> : vector<2x128xf32>
    %286 = tpu.matmul %284, %285, %cst_150 {dimension_numbers = #tpu.dot_dimension_numbers<[1], [0], [0], [1], [0, 0, 1, 1], [], []>} : vector<2x32xf32>, vector<32x128xf32>, vector<2x128xf32> -> vector<2x128xf32>
    %c0_151 = arith.constant 0 : index
    %c0_152 = arith.constant 0 : index
    %287 = vector.load %arg47[%c0_151, %c0_152] : memref<1x128xf32, #tpu.memory_space<vmem>>, vector<1x128xf32>
    %288 = vector.broadcast %287 : vector<1x128xf32> to vector<2x128xf32>
    %289 = arith.addf %286, %288 : vector<2x128xf32>
    %c0_153 = arith.constant 0 : index
    %c0_154 = arith.constant 0 : index
    %290 = vector.load %arg6[%c0_153, %c0_154] : memref<32x128xf32, #tpu.memory_space<vmem>>, vector<32x128xf32>
    %cst_155 = arith.constant dense<0.000000e+00> : vector<2x128xf32>
    %291 = tpu.matmul %211, %290, %cst_155 {dimension_numbers = #tpu.dot_dimension_numbers<[1], [0], [0], [1], [0, 0, 1, 1], [], []>} : vector<2x32xf32>, vector<32x128xf32>, vector<2x128xf32> -> vector<2x128xf32>
    %292 = arith.addf %289, %291 : vector<2x128xf32>
    %c0_156 = arith.constant 0 : index
    %c0_157 = arith.constant 0 : index
    %293 = vector.load %arg48[%c0_156, %c0_157] : memref<2x128xf32, #tpu.memory_space<vmem>>, vector<2x128xf32>
    tpu.vector_store %arg48[%c0_156, %c0_157], %292 {strides = array<i32>} : memref<2x128xf32, #tpu.memory_space<vmem>>, vector<2x128xf32>,
    return
  }
}

</mosaic_0001>

<llo_original>
// kernel: tpu_custom_call.1
$region0: #{tpu_custom_call.1}
  #allocation0 [shape = 'u32[]', space=smem, size = 0x4, offset = 0x4, fixed_abs, tag = 'smem constant byte address 0x4 - core index']
  #allocation1 [shape = 'u32[72,128]{1,0:T(1,128)}', space=vmem, size = 0x9000, scoped, tag = 'internal scratch']
  %s0 = inlined_call_operand.smem [shape: u32[49], index: -1, kind: input, shape index: {}]
  %s1 = sld [smem:[%s0]]
  %s2 = scalar_lea.smem %s0, 1
  %s3 = sld [smem:[%s2]]
  %s4 = scalar_lea.smem %s0, 2
  %s5 = sld [smem:[%s4]]
  %s6 = scalar_lea.smem %s0, 3
  %s7 = sld [smem:[%s6]]
  %s8 = scalar_lea.smem %s0, 4
  %s9 = sld [smem:[%s8]]
  %s10 = scalar_lea.smem %s0, 5
  %s11 = sld [smem:[%s10]]
  %s12 = scalar_lea.smem %s0, 6
  %s13 = sld [smem:[%s12]]
  %s14 = scalar_lea.smem %s0, 7
  %s15 = sld [smem:[%s14]]
  %s16 = scalar_lea.smem %s0, 8
  %s17 = sld [smem:[%s16]]
  %s18 = scalar_lea.smem %s0, 9
  %s19 = sld [smem:[%s18]]
  %s20 = scalar_lea.smem %s0, 10
  %s21 = sld [smem:[%s20]]
  %s22 = scalar_lea.smem %s0, 11
  %s23 = sld [smem:[%s22]]
  %s24 = scalar_lea.smem %s0, 12
  %s25 = sld [smem:[%s24]]
  %s26 = scalar_lea.smem %s0, 13
  %s27 = sld [smem:[%s26]]
  %s28 = scalar_lea.smem %s0, 14
  %s29 = sld [smem:[%s28]]
  %s30 = scalar_lea.smem %s0, 15
  %s31 = sld [smem:[%s30]]
  %s32 = scalar_lea.smem %s0, 16
  %s33 = sld [smem:[%s32]]
  %s34 = scalar_lea.smem %s0, 17
  %s35 = sld [smem:[%s34]]
  %s36 = scalar_lea.smem %s0, 18
  %s37 = sld [smem:[%s36]]
  %s38 = scalar_lea.smem %s0, 19
  %s39 = sld [smem:[%s38]]
  %s40 = scalar_lea.smem %s0, 20
  %s41 = sld [smem:[%s40]]
  %s42 = scalar_lea.smem %s0, 21
  %s43 = sld [smem:[%s42]]
  %s44 = scalar_lea.smem %s0, 22
  %s45 = sld [smem:[%s44]]
  %s46 = scalar_lea.smem %s0, 23
  %s47 = sld [smem:[%s46]]
  %s48 = scalar_lea.smem %s0, 24
  %s49 = sld [smem:[%s48]]
  %s50 = scalar_lea.smem %s0, 25
  %s51 = sld [smem:[%s50]]
  %s52 = scalar_lea.smem %s0, 26
  %s53 = sld [smem:[%s52]]
  %s54 = scalar_lea.smem %s0, 27
  %s55 = sld [smem:[%s54]]
  %s56 = scalar_lea.smem %s0, 28
  %s57 = sld [smem:[%s56]]
  %s58 = scalar_lea.smem %s0, 29
  %s59 = sld [smem:[%s58]]
  %s60 = scalar_lea.smem %s0, 30
  %s61 = sld [smem:[%s60]]
  %s62 = scalar_lea.smem %s0, 31
  %s63 = sld [smem:[%s62]]
  %s64 = scalar_lea.smem %s0, 32
  %s65 = sld [smem:[%s64]]
  %s66 = scalar_lea.smem %s0, 33
  %s67 = sld [smem:[%s66]]
  %s68 = scalar_lea.smem %s0, 34
  %s69 = sld [smem:[%s68]]
  %s70 = scalar_lea.smem %s0, 35
  %s71 = sld [smem:[%s70]]
  %s72 = scalar_lea.smem %s0, 36
  %s73 = sld [smem:[%s72]]
  %s74 = scalar_lea.smem %s0, 37
  %s75 = sld [smem:[%s74]]
  %s76 = scalar_lea.smem %s0, 38
  %s77 = sld [smem:[%s76]]
  %s78 = scalar_lea.smem %s0, 39
  %s79 = sld [smem:[%s78]]
  %s80 = scalar_lea.smem %s0, 40
  %s81 = sld [smem:[%s80]]
  %s82 = scalar_lea.smem %s0, 41
  %s83 = sld [smem:[%s82]]
  %s84 = scalar_lea.smem %s0, 42
  %s85 = sld [smem:[%s84]]
  %s86 = scalar_lea.smem %s0, 43
  %s87 = sld [smem:[%s86]]
  %s88 = scalar_lea.smem %s0, 44
  %s89 = sld [smem:[%s88]]
  %s90 = scalar_lea.smem %s0, 45
  %s91 = sld [smem:[%s90]]
  %s92 = scalar_lea.smem %s0, 46
  %s93 = sld [smem:[%s92]]
  %s94 = scalar_lea.smem %s0, 47
  %s95 = sld [smem:[%s94]]
  %s96 = scalar_lea.smem %s0, 48
  %s97 = sld [smem:[%s96]]
  %s98 = sld [smem:[#allocation0]]
  $region218: #{tpu_custom_call.1} parent=0
    _
  %s100 = ssub.s32 1, %s98
  %s101 = scalar_select 0, %s100, %s98
  $region1: #{tpu_custom_call.1} parent=0
    #allocation2 [shape = 'u8[512]{0}', space=vmem, size = 0x400, scoped, tag = 'input window, operand 43, single buffered']
    #allocation3 [shape = 's32[1]{0}', space=sflag, size = 0x4, scoped, tag = 'scoped memory for tpu_custom_call.1']
    #allocation4 [shape = 's32[1]{0}', space=sflag, size = 0x4, scoped, tag = 'scoped memory for tpu_custom_call.1']
    #allocation5 [shape = 'u8[512]{0}', space=vmem, size = 0x400, scoped, tag = 'input window, operand 44, single buffered']
    #allocation6 [shape = 's32[1]{0}', space=sflag, size = 0x4, scoped, tag = 'scoped memory for tpu_custom_call.1']
    #allocation7 [shape = 'u8[512]{0}', space=vmem, size = 0x400, scoped, tag = 'input window, operand 45, single buffered']
    #allocation8 [shape = 'u8[512]{0}', space=vmem, size = 0x400, scoped, tag = 'input window, operand 47, single buffered']
    #allocation9 [shape = 's32[1]{0}', space=sflag, size = 0x4, scoped, tag = 'scoped memory for tpu_custom_call.1']
    #allocation10 [shape = 'u8[1024]{0}', space=vmem, size = 0x400, scoped, tag = 'output window, operand 0, single buffered']
    %102 = vsyncpa [#allocation3], 0
    %103 = vsyncpa [#allocation6], 0
    %104 = vsyncpa [#allocation9], 0
    %105 = vsyncpa [#allocation4], 0
    // Predicated region
    $region2: #{tpu_custom_call.1} parent=1 // pred_check
      _
    $region3: #{tpu_custom_call.1} parent=1 // pred_check_branch
      %107 = sbr.rel (0) target = $region5
    $region4: #{tpu_custom_call.1} parent=1 // pred_region
      _
    $region5: #{tpu_custom_call.1} parent=1 // pred_fallthru
      _
    // Predicated region
    $region6: #{tpu_custom_call.1} parent=1 // pred_check
      _
    $region7: #{tpu_custom_call.1} parent=1 // pred_check_branch
      %109 = sbr.rel (0) target = $region9
    $region8: #{tpu_custom_call.1} parent=1 // pred_region
      _
    $region9: #{tpu_custom_call.1} parent=1 // pred_fallthru
      _
    // Predicated region
    $region10: #{tpu_custom_call.1} parent=1 // pred_check
      _
    $region11: #{tpu_custom_call.1} parent=1 // pred_check_branch
      %111 = sbr.rel (0) target = $region13
    $region12: #{tpu_custom_call.1} parent=1 // pred_region
      _
    $region13: #{tpu_custom_call.1} parent=1 // pred_fallthru
      _
    // Predicated region
    $region14: #{tpu_custom_call.1} parent=1 // pred_check
      _
    $region15: #{tpu_custom_call.1} parent=1 // pred_check_branch
      %113 = sbr.rel (0) target = $region17
    $region16: #{tpu_custom_call.1} parent=1 // pred_region
      _
    $region17: #{tpu_custom_call.1} parent=1 // pred_fallthru
      _
    // Predicated region
    $region18: #{tpu_custom_call.1} parent=1 // pred_check
      _
    $region19: #{tpu_custom_call.1} parent=1 // pred_check_branch
      %115 = sbr.rel (0) target = $region21
    $region20: #{tpu_custom_call.1} parent=1 // pred_region
      _
    $region21: #{tpu_custom_call.1} parent=1 // pred_fallthru
      _
    // Predicated region
    $region22: #{tpu_custom_call.1} parent=1 // pred_check
      _
    $region23: #{tpu_custom_call.1} parent=1 // pred_check_branch
      %117 = sbr.rel (0) target = $region25
    $region24: #{tpu_custom_call.1} parent=1 // pred_region
      _
    $region25: #{tpu_custom_call.1} parent=1 // pred_fallthru
      _
    // Predicated region
    $region26: #{tpu_custom_call.1} parent=1 // pred_check
      _
    $region27: #{tpu_custom_call.1} parent=1 // pred_check_branch
      %119 = sbr.rel (0) target = $region29
    $region28: #{tpu_custom_call.1} parent=1 // pred_region
      _
    $region29: #{tpu_custom_call.1} parent=1 // pred_fallthru
      _
    // Predicated region
    $region30: #{tpu_custom_call.1} parent=1 // pred_check
      _
    $region31: #{tpu_custom_call.1} parent=1 // pred_check_branch
      %121 = sbr.rel (0) target = $region33
    $region32: #{tpu_custom_call.1} parent=1 // pred_region
      _
    $region33: #{tpu_custom_call.1} parent=1 // pred_fallthru
      _
    // Predicated region
    $region34: #{tpu_custom_call.1} parent=1 // pred_check
      _
    $region35: #{tpu_custom_call.1} parent=1 // pred_check_branch
      %123 = sbr.rel (0) target = $region37
    $region36: #{tpu_custom_call.1} parent=1 // pred_region
      _
    $region37: #{tpu_custom_call.1} parent=1 // pred_fallthru
      _
    // Predicated region
    $region38: #{tpu_custom_call.1} parent=1 // pred_check
      _
    $region39: #{tpu_custom_call.1} parent=1 // pred_check_branch
      %125 = sbr.rel (0) target = $region41
    $region40: #{tpu_custom_call.1} parent=1 // pred_region
      _
    $region41: #{tpu_custom_call.1} parent=1 // pred_fallthru
      _
    // Predicated region
    $region42: #{tpu_custom_call.1} parent=1 // pred_check
      _
    $region43: #{tpu_custom_call.1} parent=1 // pred_check_branch
      %127 = sbr.rel (0) target = $region45
    $region44: #{tpu_custom_call.1} parent=1 // pred_region
      _
    $region45: #{tpu_custom_call.1} parent=1 // pred_fallthru
      _
    // Predicated region
    $region46: #{tpu_custom_call.1} parent=1 // pred_check
      _
    $region47: #{tpu_custom_call.1} parent=1 // pred_check_branch
      %129 = sbr.rel (0) target = $region49
    $region48: #{tpu_custom_call.1} parent=1 // pred_region
      _
    $region49: #{tpu_custom_call.1} parent=1 // pred_fallthru
      _
    // Predicated region
    $region50: #{tpu_custom_call.1} parent=1 // pred_check
      _
    $region51: #{tpu_custom_call.1} parent=1 // pred_check_branch
      %131 = sbr.rel (0) target = $region53
    $region52: #{tpu_custom_call.1} parent=1 // pred_region
      _
    $region53: #{tpu_custom_call.1} parent=1 // pred_fallthru
      _
    // Predicated region
    $region54: #{tpu_custom_call.1} parent=1 // pred_check
      _
    $region55: #{tpu_custom_call.1} parent=1 // pred_check_branch
      %133 = sbr.rel (0) target = $region57
    $region56: #{tpu_custom_call.1} parent=1 // pred_region
      _
    $region57: #{tpu_custom_call.1} parent=1 // pred_fallthru
      _
    // Predicated region
    $region58: #{tpu_custom_call.1} parent=1 // pred_check
      _
    $region59: #{tpu_custom_call.1} parent=1 // pred_check_branch
      %135 = sbr.rel (0) target = $region61
    $region60: #{tpu_custom_call.1} parent=1 // pred_region
      _
    $region61: #{tpu_custom_call.1} parent=1 // pred_fallthru
      _
    // Predicated region
    $region62: #{tpu_custom_call.1} parent=1 // pred_check
      _
    $region63: #{tpu_custom_call.1} parent=1 // pred_check_branch
      %137 = sbr.rel (0) target = $region65
    $region64: #{tpu_custom_call.1} parent=1 // pred_region
      _
    $region65: #{tpu_custom_call.1} parent=1 // pred_fallthru
      _
    // Predicated region
    $region66: #{tpu_custom_call.1} parent=1 // pred_check
      _
    $region67: #{tpu_custom_call.1} parent=1 // pred_check_branch
      %139 = sbr.rel (0) target = $region69
    $region68: #{tpu_custom_call.1} parent=1 // pred_region
      _
    $region69: #{tpu_custom_call.1} parent=1 // pred_fallthru
      _
    // Predicated region
    $region70: #{tpu_custom_call.1} parent=1 // pred_check
      _
    $region71: #{tpu_custom_call.1} parent=1 // pred_check_branch
      %141 = sbr.rel (0) target = $region73
    $region72: #{tpu_custom_call.1} parent=1 // pred_region
      _
    $region73: #{tpu_custom_call.1} parent=1 // pred_fallthru
      _
    // Predicated region
    $region74: #{tpu_custom_call.1} parent=1 // pred_check
      _
    $region75: #{tpu_custom_call.1} parent=1 // pred_check_branch
      %143 = sbr.rel (0) target = $region77
    $region76: #{tpu_custom_call.1} parent=1 // pred_region
      _
    $region77: #{tpu_custom_call.1} parent=1 // pred_fallthru
      _
    // Predicated region
    $region78: #{tpu_custom_call.1} parent=1 // pred_check
      _
    $region79: #{tpu_custom_call.1} parent=1 // pred_check_branch
      %145 = sbr.rel (0) target = $region81
    $region80: #{tpu_custom_call.1} parent=1 // pred_region
      _
    $region81: #{tpu_custom_call.1} parent=1 // pred_fallthru
      _
    // Predicated region
    $region82: #{tpu_custom_call.1} parent=1 // pred_check
      _
    $region83: #{tpu_custom_call.1} parent=1 // pred_check_branch
      %147 = sbr.rel (0) target = $region85
    $region84: #{tpu_custom_call.1} parent=1 // pred_region
      _
    $region85: #{tpu_custom_call.1} parent=1 // pred_fallthru
      _
    // Predicated region
    $region86: #{tpu_custom_call.1} parent=1 // pred_check
      _
    $region87: #{tpu_custom_call.1} parent=1 // pred_check_branch
      %149 = sbr.rel (0) target = $region89
    $region88: #{tpu_custom_call.1} parent=1 // pred_region
      _
    $region89: #{tpu_custom_call.1} parent=1 // pred_fallthru
      _
    // Predicated region
    $region90: #{tpu_custom_call.1} parent=1 // pred_check
      _
    $region91: #{tpu_custom_call.1} parent=1 // pred_check_branch
      %151 = sbr.rel (0) target = $region93
    $region92: #{tpu_custom_call.1} parent=1 // pred_region
      _
    $region93: #{tpu_custom_call.1} parent=1 // pred_fallthru
      _
    // Predicated region
    $region94: #{tpu_custom_call.1} parent=1 // pred_check
      _
    $region95: #{tpu_custom_call.1} parent=1 // pred_check_branch
      %153 = sbr.rel (0) target = $region97
    $region96: #{tpu_custom_call.1} parent=1 // pred_region
      _
    $region97: #{tpu_custom_call.1} parent=1 // pred_fallthru
      _
    // Predicated region
    $region98: #{tpu_custom_call.1} parent=1 // pred_check
      _
    $region99: #{tpu_custom_call.1} parent=1 // pred_check_branch
      %155 = sbr.rel (0) target = $region101
    $region100: #{tpu_custom_call.1} parent=1 // pred_region
      _
    $region101: #{tpu_custom_call.1} parent=1 // pred_fallthru
      _
    // Predicated region
    $region102: #{tpu_custom_call.1} parent=1 // pred_check
      _
    $region103: #{tpu_custom_call.1} parent=1 // pred_check_branch
      %157 = sbr.rel (0) target = $region105
    $region104: #{tpu_custom_call.1} parent=1 // pred_region
      _
    $region105: #{tpu_custom_call.1} parent=1 // pred_fallthru
      _
    // Predicated region
    $region106: #{tpu_custom_call.1} parent=1 // pred_check
      _
    $region107: #{tpu_custom_call.1} parent=1 // pred_check_branch
      %159 = sbr.rel (0) target = $region109
    $region108: #{tpu_custom_call.1} parent=1 // pred_region
      _
    $region109: #{tpu_custom_call.1} parent=1 // pred_fallthru
      _
    // Predicated region
    $region110: #{tpu_custom_call.1} parent=1 // pred_check
      _
    $region111: #{tpu_custom_call.1} parent=1 // pred_check_branch
      %161 = sbr.rel (0) target = $region113
    $region112: #{tpu_custom_call.1} parent=1 // pred_region
      _
    $region113: #{tpu_custom_call.1} parent=1 // pred_fallthru
      _
    // Predicated region
    $region114: #{tpu_custom_call.1} parent=1 // pred_check
      _
    $region115: #{tpu_custom_call.1} parent=1 // pred_check_branch
      %163 = sbr.rel (0) target = $region117
    $region116: #{tpu_custom_call.1} parent=1 // pred_region
      _
    $region117: #{tpu_custom_call.1} parent=1 // pred_fallthru
      _
    // Predicated region
    $region118: #{tpu_custom_call.1} parent=1 // pred_check
      _
    $region119: #{tpu_custom_call.1} parent=1 // pred_check_branch
      %165 = sbr.rel (0) target = $region121
    $region120: #{tpu_custom_call.1} parent=1 // pred_region
      _
    $region121: #{tpu_custom_call.1} parent=1 // pred_fallthru
      _
    // Predicated region
    $region122: #{tpu_custom_call.1} parent=1 // pred_check
      _
    $region123: #{tpu_custom_call.1} parent=1 // pred_check_branch
      %167 = sbr.rel (0) target = $region125
    $region124: #{tpu_custom_call.1} parent=1 // pred_region
      _
    $region125: #{tpu_custom_call.1} parent=1 // pred_fallthru
      _
    // Predicated region
    $region126: #{tpu_custom_call.1} parent=1 // pred_check
      _
    $region127: #{tpu_custom_call.1} parent=1 // pred_check_branch
      %169 = sbr.rel (0) target = $region129
    $region128: #{tpu_custom_call.1} parent=1 // pred_region
      _
    $region129: #{tpu_custom_call.1} parent=1 // pred_fallthru
      _
    // Predicated region
    $region130: #{tpu_custom_call.1} parent=1 // pred_check
      _
    $region131: #{tpu_custom_call.1} parent=1 // pred_check_branch
      %171 = sbr.rel (0) target = $region133
    $region132: #{tpu_custom_call.1} parent=1 // pred_region
      _
    $region133: #{tpu_custom_call.1} parent=1 // pred_fallthru
      _
    // Predicated region
    $region134: #{tpu_custom_call.1} parent=1 // pred_check
      _
    $region135: #{tpu_custom_call.1} parent=1 // pred_check_branch
      %173 = sbr.rel (0) target = $region137
    $region136: #{tpu_custom_call.1} parent=1 // pred_region
      _
    $region137: #{tpu_custom_call.1} parent=1 // pred_fallthru
      _
    // Predicated region
    $region138: #{tpu_custom_call.1} parent=1 // pred_check
      _
    $region139: #{tpu_custom_call.1} parent=1 // pred_check_branch
      %175 = sbr.rel (0) target = $region141
    $region140: #{tpu_custom_call.1} parent=1 // pred_region
      _
    $region141: #{tpu_custom_call.1} parent=1 // pred_fallthru
      _
    // Predicated region
    $region142: #{tpu_custom_call.1} parent=1 // pred_check
      _
    $region143: #{tpu_custom_call.1} parent=1 // pred_check_branch
      %177 = sbr.rel (0) target = $region145
    $region144: #{tpu_custom_call.1} parent=1 // pred_region
      _
    $region145: #{tpu_custom_call.1} parent=1 // pred_fallthru
      _
    // Predicated region
    $region146: #{tpu_custom_call.1} parent=1 // pred_check
      _
    $region147: #{tpu_custom_call.1} parent=1 // pred_check_branch
      %179 = sbr.rel (0) target = $region149
    $region148: #{tpu_custom_call.1} parent=1 // pred_region
      _
    $region149: #{tpu_custom_call.1} parent=1 // pred_fallthru
      _
    // Predicated region
    $region150: #{tpu_custom_call.1} parent=1 // pred_check
      _
    $region151: #{tpu_custom_call.1} parent=1 // pred_check_branch
      %181 = sbr.rel (0) target = $region153
    $region152: #{tpu_custom_call.1} parent=1 // pred_region
      _
    $region153: #{tpu_custom_call.1} parent=1 // pred_fallthru
      _
    // Predicated region
    $region154: #{tpu_custom_call.1} parent=1 // pred_check
      _
    $region155: #{tpu_custom_call.1} parent=1 // pred_check_branch
      %183 = sbr.rel (0) target = $region157
    $region156: #{tpu_custom_call.1} parent=1 // pred_region
      _
    $region157: #{tpu_custom_call.1} parent=1 // pred_fallthru
      _
    // Predicated region
    $region158: #{tpu_custom_call.1} parent=1 // pred_check
      _
    $region159: #{tpu_custom_call.1} parent=1 // pred_check_branch
      %185 = sbr.rel (0) target = $region161
    $region160: #{tpu_custom_call.1} parent=1 // pred_region
      _
    $region161: #{tpu_custom_call.1} parent=1 // pred_fallthru
      _
    // Predicated region
    $region162: #{tpu_custom_call.1} parent=1 // pred_check
      _
    $region163: #{tpu_custom_call.1} parent=1 // pred_check_branch
      %187 = sbr.rel (0) target = $region165
    $region164: #{tpu_custom_call.1} parent=1 // pred_region
      _
    $region165: #{tpu_custom_call.1} parent=1 // pred_fallthru
      _
    // Predicated region
    $region166: #{tpu_custom_call.1} parent=1 // pred_check
      _
    $region167: #{tpu_custom_call.1} parent=1 // pred_check_branch
      %189 = sbr.rel (0) target = $region169
    $region168: #{tpu_custom_call.1} parent=1 // pred_region
      _
    $region169: #{tpu_custom_call.1} parent=1 // pred_fallthru
      _
    // Predicated region
    $region170: #{tpu_custom_call.1} parent=1 // pred_check
      _
    $region171: #{tpu_custom_call.1} parent=1 // pred_check_branch
      %191 = sbr.rel (0) target = $region173
    $region172: #{tpu_custom_call.1} parent=1 // pred_region
      _
    $region173: #{tpu_custom_call.1} parent=1 // pred_fallthru
      _
    // Predicated region
    $region174: #{tpu_custom_call.1} parent=1 // pred_check
      _
    $region175: #{tpu_custom_call.1} parent=1 // pred_check_branch
      %193 = sbr.rel (0) target = $region177
    $region176: #{tpu_custom_call.1} parent=1 // pred_region
      %195 = vsyncadd [#allocation3], 0
      %s197 = sshll.u32 %s87, 4
      %s198 = int_to_ptr.hbm [resolvable:$true] %s197
      %s199 = sshll.u32 [#allocation2], 4
      %s200 = int_to_ptr.vmem [resolvable:$true] %s199
      %202 = dma.hbm_to_vmem [thread:$0]  %s198, 16, %s200, [#allocation3]
    $region177: #{tpu_custom_call.1} parent=1 // pred_fallthru
      _
    // Predicated region
    $region178: #{tpu_custom_call.1} parent=1 // pred_check
      _
    $region179: #{tpu_custom_call.1} parent=1 // pred_check_branch
      %204 = sbr.rel (0) target = $region181
    $region180: #{tpu_custom_call.1} parent=1 // pred_region
      %206 = vsyncadd [#allocation6], 0
      %s208 = sshll.u32 %s89, 4
      %s209 = int_to_ptr.hbm [resolvable:$true] %s208
      %s210 = sshll.u32 [#allocation5], 4
      %s211 = int_to_ptr.vmem [resolvable:$true] %s210
      %213 = dma.hbm_to_vmem [thread:$0]  %s209, 16, %s211, [#allocation6]
    $region181: #{tpu_custom_call.1} parent=1 // pred_fallthru
      _
    // Predicated region
    $region182: #{tpu_custom_call.1} parent=1 // pred_check
      _
    $region183: #{tpu_custom_call.1} parent=1 // pred_check_branch
      %215 = sbr.rel (0) target = $region185
    $region184: #{tpu_custom_call.1} parent=1 // pred_region
      %217 = vsyncadd [#allocation6], 0
      %s219 = sshll.u32 %s91, 4
      %s220 = int_to_ptr.hbm [resolvable:$true] %s219
      %s221 = sshll.u32 [#allocation7], 4
      %s222 = int_to_ptr.vmem [resolvable:$true] %s221
      %224 = dma.hbm_to_vmem [thread:$0]  %s220, 16, %s222, [#allocation6]
    $region185: #{tpu_custom_call.1} parent=1 // pred_fallthru
      _
    // Predicated region
    $region186: #{tpu_custom_call.1} parent=1 // pred_check
      _
    $region187: #{tpu_custom_call.1} parent=1 // pred_check_branch
      %226 = sbr.rel (0) target = $region189
    $region188: #{tpu_custom_call.1} parent=1 // pred_region
      _
    $region189: #{tpu_custom_call.1} parent=1 // pred_fallthru
      _
    // Predicated region
    $region190: #{tpu_custom_call.1} parent=1 // pred_check
      _
    $region191: #{tpu_custom_call.1} parent=1 // pred_check_branch
      %228 = sbr.rel (0) target = $region193
    $region192: #{tpu_custom_call.1} parent=1 // pred_region
      %230 = vsyncadd [#allocation9], 0
      %s232 = sshll.u32 %s95, 4
      %s233 = int_to_ptr.hbm [resolvable:$true] %s232
      %s234 = sshll.u32 [#allocation8], 4
      %s235 = int_to_ptr.vmem [resolvable:$true] %s234
      %237 = dma.hbm_to_vmem [thread:$0]  %s233, 16, %s235, [#allocation9]
    $region193: #{tpu_custom_call.1} parent=1 // pred_fallthru
      _
    // Predicated region
    $region194: #{tpu_custom_call.1} parent=1 // pred_check
      _
    $region195: #{tpu_custom_call.1} parent=1 // pred_check_branch
      %239 = sbr.rel (0) target = $region197
    $region196: #{tpu_custom_call.1} parent=1 // pred_region
      %241 = dma.done [#allocation3], 16
    $region197: #{tpu_custom_call.1} parent=1 // pred_fallthru
      _
    // Predicated region
    $region198: #{tpu_custom_call.1} parent=1 // pred_check
      _
    $region199: #{tpu_custom_call.1} parent=1 // pred_check_branch
      %243 = sbr.rel (0) target = $region201
    $region200: #{tpu_custom_call.1} parent=1 // pred_region
      %245 = dma.done [#allocation6], 16
    $region201: #{tpu_custom_call.1} parent=1 // pred_fallthru
      _
    // Predicated region
    $region202: #{tpu_custom_call.1} parent=1 // pred_check
      _
    $region203: #{tpu_custom_call.1} parent=1 // pred_check_branch
      %247 = sbr.rel (0) target = $region205
    $region204: #{tpu_custom_call.1} parent=1 // pred_region
      %249 = dma.done [#allocation6], 16
    $region205: #{tpu_custom_call.1} parent=1 // pred_fallthru
      _
    // Predicated region
    $region206: #{tpu_custom_call.1} parent=1 // pred_check
      _
    $region207: #{tpu_custom_call.1} parent=1 // pred_check_branch
      %251 = sbr.rel (0) target = $region209
    $region208: #{tpu_custom_call.1} parent=1 // pred_region
      %253 = dma.done [#allocation9], 16
    $region209: #{tpu_custom_call.1} parent=1 // pred_fallthru
      _
    %v255 = vld [vmem:[%s5] sm:$0xff]
    %v256 = vld [vmem:[%s5 + $0x8] sm:$0xff]
    %v257 = vld [vmem:[%s5 + $0x10] sm:$0xff]
    %v258 = vld [vmem:[%s5 + $0x18] sm:$0xff]
    %v259 = vld [vmem:[%s5 + $0x20] sm:$0xff]
    %v260 = vld [vmem:[%s5 + $0x28] sm:$0xff]
    %v261 = vld [vmem:[%s5 + $0x30] sm:$0xff]
    %v262 = vld [vmem:[%s5 + $0x38] sm:$0xff]
    %v263 = vld [vmem:[%s5 + $0x40] sm:$0xff]
    %v264 = vld [vmem:[%s5 + $0x48] sm:$0xff]
    %v265 = vld [vmem:[%s5 + $0x50] sm:$0xff]
    %v266 = vld [vmem:[%s5 + $0x58] sm:$0xff]
    %v267 = vld [vmem:[%s5 + $0x60] sm:$0xff]
    %v268 = vld [vmem:[%s5 + $0x68] sm:$0xff]
    %v269 = vld [vmem:[%s5 + $0x70] sm:$0xff]
    %v270 = vld [vmem:[%s5 + $0x78] sm:$0xff]
    %v271 = vld [vmem:[%s5 + $0x80] sm:$0xff]
    %v272 = vld [vmem:[%s5 + $0x88] sm:$0xff]
    %v273 = vld [vmem:[%s5 + $0x90] sm:$0xff]
    %v274 = vld [vmem:[%s5 + $0x98] sm:$0xff]
    %v275 = vld [vmem:[%s5 + $0xa0] sm:$0xff]
    %v276 = vld [vmem:[%s5 + $0xa8] sm:$0xff]
    %v277 = vld [vmem:[%s5 + $0xb0] sm:$0xff]
    %v278 = vld [vmem:[%s5 + $0xb8] sm:$0xff]
    %v279 = vld [vmem:[%s5 + $0xc0] sm:$0xff]
    %v280 = vld [vmem:[%s5 + $0xc8] sm:$0xff]
    %v281 = vld [vmem:[%s5 + $0xd0] sm:$0xff]
    %v282 = vld [vmem:[%s5 + $0xd8] sm:$0xff]
    %v283 = vld [vmem:[%s5 + $0xe0] sm:$0xff]
    %v284 = vld [vmem:[%s5 + $0xe8] sm:$0xff]
    %v285 = vld [vmem:[%s5 + $0xf0] sm:$0xff]
    %v286 = vld [vmem:[%s5 + $0xf8] sm:$0xff]
    %v287 = vld [vmem:[%s3] sm:$0xff]
    %v288 = vld [vmem:[%s3 + $0x8] sm:$0xff]
    %v289 = vld [vmem:[%s3 + $0x10] sm:$0xff]
    %v290 = vld [vmem:[%s3 + $0x18] sm:$0xff]
    %v291 = vld [vmem:[%s3 + $0x20] sm:$0xff]
    %v292 = vld [vmem:[%s3 + $0x28] sm:$0xff]
    %v293 = vld [vmem:[%s3 + $0x30] sm:$0xff]
    %v294 = vld [vmem:[%s3 + $0x38] sm:$0xff]
    %v295 = vld [vmem:[%s3 + $0x40] sm:$0xff]
    %v296 = vld [vmem:[%s3 + $0x48] sm:$0xff]
    %v297 = vld [vmem:[%s3 + $0x50] sm:$0xff]
    %v298 = vld [vmem:[%s3 + $0x58] sm:$0xff]
    %v299 = vld [vmem:[%s3 + $0x60] sm:$0xff]
    %v300 = vld [vmem:[%s3 + $0x68] sm:$0xff]
    %v301 = vld [vmem:[%s3 + $0x70] sm:$0xff]
    %v302 = vld [vmem:[%s3 + $0x78] sm:$0xff]
    %v303 = vld [vmem:[%s3 + $0x80] sm:$0xff]
    %v304 = vld [vmem:[%s3 + $0x88] sm:$0xff]
    %v305 = vld [vmem:[%s3 + $0x90] sm:$0xff]
    %v306 = vld [vmem:[%s3 + $0x98] sm:$0xff]
    %v307 = vld [vmem:[%s3 + $0xa0] sm:$0xff]
    %v308 = vld [vmem:[%s3 + $0xa8] sm:$0xff]
    %v309 = vld [vmem:[%s3 + $0xb0] sm:$0xff]
    %v310 = vld [vmem:[%s3 + $0xb8] sm:$0xff]
    %v311 = vld [vmem:[%s3 + $0xc0] sm:$0xff]
    %v312 = vld [vmem:[%s3 + $0xc8] sm:$0xff]
    %v313 = vld [vmem:[%s3 + $0xd0] sm:$0xff]
    %v314 = vld [vmem:[%s3 + $0xd8] sm:$0xff]
    %v315 = vld [vmem:[%s3 + $0xe0] sm:$0xff]
    %v316 = vld [vmem:[%s3 + $0xe8] sm:$0xff]
    %v317 = vld [vmem:[%s3 + $0xf0] sm:$0xff]
    %v318 = vld [vmem:[%s3 + $0xf8] sm:$0xff]
    %vm319 = vcmp.gt.f32.partialorder %v287, 0.0
    %vm320 = vcmp.gt.f32.partialorder %v288, 0.0
    %vm321 = vcmp.gt.f32.partialorder %v289, 0.0
    %vm322 = vcmp.gt.f32.partialorder %v290, 0.0
    %vm323 = vcmp.gt.f32.partialorder %v291, 0.0
    %vm324 = vcmp.gt.f32.partialorder %v292, 0.0
    %vm325 = vcmp.gt.f32.partialorder %v293, 0.0
    %vm326 = vcmp.gt.f32.partialorder %v294, 0.0
    %vm327 = vcmp.gt.f32.partialorder %v295, 0.0
    %vm328 = vcmp.gt.f32.partialorder %v296, 0.0
    %vm329 = vcmp.gt.f32.partialorder %v297, 0.0
    %vm330 = vcmp.gt.f32.partialorder %v298, 0.0
    %vm331 = vcmp.gt.f32.partialorder %v299, 0.0
    %vm332 = vcmp.gt.f32.partialorder %v300, 0.0
    %vm333 = vcmp.gt.f32.partialorder %v301, 0.0
    %vm334 = vcmp.gt.f32.partialorder %v302, 0.0
    %vm335 = vcmp.gt.f32.partialorder %v303, 0.0
    %vm336 = vcmp.gt.f32.partialorder %v304, 0.0
    %vm337 = vcmp.gt.f32.partialorder %v305, 0.0
    %vm338 = vcmp.gt.f32.partialorder %v306, 0.0
    %vm339 = vcmp.gt.f32.partialorder %v307, 0.0
    %vm340 = vcmp.gt.f32.partialorder %v308, 0.0
    %vm341 = vcmp.gt.f32.partialorder %v309, 0.0
    %vm342 = vcmp.gt.f32.partialorder %v310, 0.0
    %vm343 = vcmp.gt.f32.partialorder %v311, 0.0
    %vm344 = vcmp.gt.f32.partialorder %v312, 0.0
    %vm345 = vcmp.gt.f32.partialorder %v313, 0.0
    %vm346 = vcmp.gt.f32.partialorder %v314, 0.0
    %vm347 = vcmp.gt.f32.partialorder %v315, 0.0
    %vm348 = vcmp.gt.f32.partialorder %v316, 0.0
    %vm349 = vcmp.gt.f32.partialorder %v317, 0.0
    %vm350 = vcmp.gt.f32.partialorder %v318, 0.0
    %v351 = vsel %vm319, 0.0, -1e+30
    %v352 = vsel %vm320, 0.0, -1e+30
    %v353 = vsel %vm321, 0.0, -1e+30
    %v354 = vsel %vm322, 0.0, -1e+30
    %v355 = vsel %vm323, 0.0, -1e+30
    %v356 = vsel %vm324, 0.0, -1e+30
    %v357 = vsel %vm325, 0.0, -1e+30
    %v358 = vsel %vm326, 0.0, -1e+30
    %v359 = vsel %vm327, 0.0, -1e+30
    %v360 = vsel %vm328, 0.0, -1e+30
    %v361 = vsel %vm329, 0.0, -1e+30
    %v362 = vsel %vm330, 0.0, -1e+30
    %v363 = vsel %vm331, 0.0, -1e+30
    %v364 = vsel %vm332, 0.0, -1e+30
    %v365 = vsel %vm333, 0.0, -1e+30
    %v366 = vsel %vm334, 0.0, -1e+30
    %v367 = vsel %vm335, 0.0, -1e+30
    %v368 = vsel %vm336, 0.0, -1e+30
    %v369 = vsel %vm337, 0.0, -1e+30
    %v370 = vsel %vm338, 0.0, -1e+30
    %v371 = vsel %vm339, 0.0, -1e+30
    %v372 = vsel %vm340, 0.0, -1e+30
    %v373 = vsel %vm341, 0.0, -1e+30
    %v374 = vsel %vm342, 0.0, -1e+30
    %v375 = vsel %vm343, 0.0, -1e+30
    %v376 = vsel %vm344, 0.0, -1e+30
    %v377 = vsel %vm345, 0.0, -1e+30
    %v378 = vsel %vm346, 0.0, -1e+30
    %v379 = vsel %vm347, 0.0, -1e+30
    %v380 = vsel %vm348, 0.0, -1e+30
    %v381 = vsel %vm349, 0.0, -1e+30
    %v382 = vsel %vm350, 0.0, -1e+30
    %v383 = vld [vmem:[%s11] sm:$0xf]
    %v384 = vld [vmem:[%s1] sm:$0xff]
    %v385 = vld [vmem:[%s1 + $0x8] sm:$0xff]
    %v386 = vld [vmem:[%s15] sm:$0xff]
    %v387 = vld [vmem:[%s15 + $0x8] sm:$0xff]
    %v388 = vld [vmem:[%s17] sm:$0x1]
    %v389 = vld [vmem:[%s19] sm:$0xff]
    %v390 = vld [vmem:[%s19 + $0x8] sm:$0xff]
    %v391 = vld [vmem:[%s21] sm:$0x1]
    %v392 = vld [vmem:[%s23] sm:$0x1]
    %v393 = vld [vmem:[%s25] sm:$0xff]
    %v394 = vld [vmem:[%s25 + $0x8] sm:$0xff]
    %v395 = vld [vmem:[%s25 + $0x10] sm:$0xff]
    %v396 = vld [vmem:[%s25 + $0x18] sm:$0xff]
    %v397 = vld [vmem:[%s27] sm:$0x1]
    %v398 = vld [vmem:[%s29] sm:$0x1]
    %v399 = vld [vmem:[%s31] sm:$0x1]
    %v401 = vperm.slane %v388, 0
    %vm403 = vcmask 130048
    %v405 = vsel %vm403, %v384, 0
    %v408 = vsel %vm403, %v385, 0
    %410 = vmatpush.msra.mxu0 0.0
    %411 = vmatpush.msra.mxu0 0.0
    %412 = vmatpush.msra.mxu0 0.0
    %413 = vmatpush.msra.mxu0 0.0
    %414 = vmatpush.msra.mxu0 0.0
    %415 = vmatpush.msra.mxu0 0.0
    %416 = vmatpush.msra.mxu0 0.0
    %417 = vmatpush.msra.mxu0 0.0
    %418 = vmatpush.msra.mxu0 0.0
    %419 = vmatpush.msra.mxu0 0.0
    %420 = vmatpush.msra.mxu0 0.0
    %421 = vmatpush.msra.mxu0 0.0
    %422 = vmatpush.msra.mxu0 0.0
    %423 = vmatpush.msra.mxu0 0.0
    %424 = vmatpush.msra.mxu0 %v387
    %425 = vmatpush.msra.mxu0 %v386
    %426 = vmatmul.f32.gmra.mxu0 %v405
    %v427 = vpop.f32.mrf.mxu0
    %v428 = vadd.f32 %v401, %v427
    %429 = vmatmul.f32.gmra.mxu0 %v408
    %v430 = vpop.f32.mrf.mxu0
    %v431 = vadd.f32 %v401, %v430
    %432 = vdwg.mxu0
    %v434 = vperm.slane %v391, 0
    %436 = vmatpush.msra.mxu0 0.0
    %437 = vmatpush.msra.mxu0 0.0
    %438 = vmatpush.msra.mxu0 0.0
    %439 = vmatpush.msra.mxu0 0.0
    %440 = vmatpush.msra.mxu0 0.0
    %441 = vmatpush.msra.mxu0 0.0
    %442 = vmatpush.msra.mxu0 0.0
    %443 = vmatpush.msra.mxu0 0.0
    %444 = vmatpush.msra.mxu0 0.0
    %445 = vmatpush.msra.mxu0 0.0
    %446 = vmatpush.msra.mxu0 0.0
    %447 = vmatpush.msra.mxu0 0.0
    %448 = vmatpush.msra.mxu0 0.0
    %449 = vmatpush.msra.mxu0 0.0
    %450 = vmatpush.msra.mxu0 %v390
    %451 = vmatpush.msra.mxu0 %v389
    %452 = vmatmul.f32.gmra.mxu0 %v405
    %v453 = vpop.f32.mrf.mxu0
    %v454 = vadd.f32 %v434, %v453
    %455 = vmatmul.f32.gmra.mxu0 %v408
    %v456 = vpop.f32.mrf.mxu0
    %v457 = vadd.f32 %v434, %v456
    %458 = vdwg.mxu0
    %v461 = vrot.slane %v454, 1
    %v462 = vrot.slane %v454, 2
    %v463 = vrot.slane %v454, 3
    %v464 = vrot.slane %v454, 4
    %v465 = vrot.slane %v454, 5
    %v466 = vrot.slane %v454, 6
    %v467 = vrot.slane %v454, 7
    %v468 = vrot.slane %v457, 1
    %v469 = vrot.slane %v457, 2
    %v470 = vrot.slane %v457, 3
    %v471 = vrot.slane %v457, 4
    %v472 = vrot.slane %v457, 5
    %v473 = vrot.slane %v457, 6
    %v474 = vrot.slane %v457, 7
    %v475 = vperm.slane %v454, 0
    %v476 = vperm.slane %v461, 0
    %v477 = vperm.slane %v462, 0
    %v478 = vperm.slane %v463, 0
    %v479 = vperm.slane %v464, 0
    %v480 = vperm.slane %v465, 0
    %v481 = vperm.slane %v466, 0
    %v482 = vperm.slane %v467, 0
    %v483 = vperm.slane %v457, 0
    %v484 = vperm.slane %v468, 0
    %v485 = vperm.slane %v469, 0
    %v486 = vperm.slane %v470, 0
    %v487 = vperm.slane %v471, 0
    %v488 = vperm.slane %v472, 0
    %v489 = vperm.slane %v473, 0
    %v490 = vperm.slane %v474, 0
    %v507 = vadd.f32 %v475, %v428
    %v508 = vadd.f32 %v475, %v431
    %v509 = vadd.f32 %v476, %v428
    %v510 = vadd.f32 %v476, %v431
    %v511 = vadd.f32 %v477, %v428
    %v512 = vadd.f32 %v477, %v431
    %v513 = vadd.f32 %v478, %v428
    %v514 = vadd.f32 %v478, %v431
    %v515 = vadd.f32 %v479, %v428
    %v516 = vadd.f32 %v479, %v431
    %v517 = vadd.f32 %v480, %v428
    %v518 = vadd.f32 %v480, %v431
    %v519 = vadd.f32 %v481, %v428
    %v520 = vadd.f32 %v481, %v431
    %v521 = vadd.f32 %v482, %v428
    %v522 = vadd.f32 %v482, %v431
    %v523 = vadd.f32 %v483, %v428
    %v524 = vadd.f32 %v483, %v431
    %v525 = vadd.f32 %v484, %v428
    %v526 = vadd.f32 %v484, %v431
    %v527 = vadd.f32 %v485, %v428
    %v528 = vadd.f32 %v485, %v431
    %v529 = vadd.f32 %v486, %v428
    %v530 = vadd.f32 %v486, %v431
    %v531 = vadd.f32 %v487, %v428
    %v532 = vadd.f32 %v487, %v431
    %v533 = vadd.f32 %v488, %v428
    %v534 = vadd.f32 %v488, %v431
    %v535 = vadd.f32 %v489, %v428
    %v536 = vadd.f32 %v489, %v431
    %v537 = vadd.f32 %v490, %v428
    %v538 = vadd.f32 %v490, %v431
    %540 = vset.pattern.permute.xlu0 0
    %541 = vperm.xlu0 %540, %v255
    %v542 = vpop.permute.xlu0 %541
    %545 = vset.pattern.permute.xlu0 0
    %546 = vperm.xlu0 %545, %v256
    %v547 = vpop.permute.xlu0 %546
    %550 = vset.pattern.permute.xlu0 0
    %551 = vperm.xlu0 %550, %v257
    %v552 = vpop.permute.xlu0 %551
    %555 = vset.pattern.permute.xlu0 0
    %556 = vperm.xlu0 %555, %v258
    %v557 = vpop.permute.xlu0 %556
    %560 = vset.pattern.permute.xlu0 0
    %561 = vperm.xlu0 %560, %v259
    %v562 = vpop.permute.xlu0 %561
    %565 = vset.pattern.permute.xlu0 0
    %566 = vperm.xlu0 %565, %v260
    %v567 = vpop.permute.xlu0 %566
    %570 = vset.pattern.permute.xlu0 0
    %571 = vperm.xlu0 %570, %v261
    %v572 = vpop.permute.xlu0 %571
    %575 = vset.pattern.permute.xlu0 0
    %576 = vperm.xlu0 %575, %v262
    %v577 = vpop.permute.xlu0 %576
    %580 = vset.pattern.permute.xlu0 0
    %581 = vperm.xlu0 %580, %v263
    %v582 = vpop.permute.xlu0 %581
    %585 = vset.pattern.permute.xlu0 0
    %586 = vperm.xlu0 %585, %v264
    %v587 = vpop.permute.xlu0 %586
    %590 = vset.pattern.permute.xlu0 0
    %591 = vperm.xlu0 %590, %v265
    %v592 = vpop.permute.xlu0 %591
    %595 = vset.pattern.permute.xlu0 0
    %596 = vperm.xlu0 %595, %v266
    %v597 = vpop.permute.xlu0 %596
    %600 = vset.pattern.permute.xlu0 0
    %601 = vperm.xlu0 %600, %v267
    %v602 = vpop.permute.xlu0 %601
    %605 = vset.pattern.permute.xlu0 0
    %606 = vperm.xlu0 %605, %v268
    %v607 = vpop.permute.xlu0 %606
    %610 = vset.pattern.permute.xlu0 0
    %611 = vperm.xlu0 %610, %v269
    %v612 = vpop.permute.xlu0 %611
    %615 = vset.pattern.permute.xlu0 0
    %616 = vperm.xlu0 %615, %v270
    %v617 = vpop.permute.xlu0 %616
    %620 = vset.pattern.permute.xlu0 0
    %621 = vperm.xlu0 %620, %v271
    %v622 = vpop.permute.xlu0 %621
    %625 = vset.pattern.permute.xlu0 0
    %626 = vperm.xlu0 %625, %v272
    %v627 = vpop.permute.xlu0 %626
    %630 = vset.pattern.permute.xlu0 0
    %631 = vperm.xlu0 %630, %v273
    %v632 = vpop.permute.xlu0 %631
    %635 = vset.pattern.permute.xlu0 0
    %636 = vperm.xlu0 %635, %v274
    %v637 = vpop.permute.xlu0 %636
    %640 = vset.pattern.permute.xlu0 0
    %641 = vperm.xlu0 %640, %v275
    %v642 = vpop.permute.xlu0 %641
    %645 = vset.pattern.permute.xlu0 0
    %646 = vperm.xlu0 %645, %v276
    %v647 = vpop.permute.xlu0 %646
    %650 = vset.pattern.permute.xlu0 0
    %651 = vperm.xlu0 %650, %v277
    %v652 = vpop.permute.xlu0 %651
    %655 = vset.pattern.permute.xlu0 0
    %656 = vperm.xlu0 %655, %v278
    %v657 = vpop.permute.xlu0 %656
    %660 = vset.pattern.permute.xlu0 0
    %661 = vperm.xlu0 %660, %v279
    %v662 = vpop.permute.xlu0 %661
    %665 = vset.pattern.permute.xlu0 0
    %666 = vperm.xlu0 %665, %v280
    %v667 = vpop.permute.xlu0 %666
    %670 = vset.pattern.permute.xlu0 0
    %671 = vperm.xlu0 %670, %v281
    %v672 = vpop.permute.xlu0 %671
    %675 = vset.pattern.permute.xlu0 0
    %676 = vperm.xlu0 %675, %v282
    %v677 = vpop.permute.xlu0 %676
    %680 = vset.pattern.permute.xlu0 0
    %681 = vperm.xlu0 %680, %v283
    %v682 = vpop.permute.xlu0 %681
    %685 = vset.pattern.permute.xlu0 0
    %686 = vperm.xlu0 %685, %v284
    %v687 = vpop.permute.xlu0 %686
    %690 = vset.pattern.permute.xlu0 0
    %691 = vperm.xlu0 %690, %v285
    %v692 = vpop.permute.xlu0 %691
    %695 = vset.pattern.permute.xlu0 0
    %696 = vperm.xlu0 %695, %v286
    %v697 = vpop.permute.xlu0 %696
    %v700 = vperm.slane %v392, 0
    %v702 = vmul.f32 %v542, %v700
    %v703 = vmul.f32 %v547, %v700
    %v704 = vmul.f32 %v552, %v700
    %v705 = vmul.f32 %v557, %v700
    %v706 = vmul.f32 %v562, %v700
    %v707 = vmul.f32 %v567, %v700
    %v708 = vmul.f32 %v572, %v700
    %v709 = vmul.f32 %v577, %v700
    %v710 = vmul.f32 %v582, %v700
    %v711 = vmul.f32 %v587, %v700
    %v712 = vmul.f32 %v592, %v700
    %v713 = vmul.f32 %v597, %v700
    %v714 = vmul.f32 %v602, %v700
    %v715 = vmul.f32 %v607, %v700
    %v716 = vmul.f32 %v612, %v700
    %v717 = vmul.f32 %v617, %v700
    %v718 = vmul.f32 %v622, %v700
    %v719 = vmul.f32 %v627, %v700
    %v720 = vmul.f32 %v632, %v700
    %v721 = vmul.f32 %v637, %v700
    %v722 = vmul.f32 %v642, %v700
    %v723 = vmul.f32 %v647, %v700
    %v724 = vmul.f32 %v652, %v700
    %v725 = vmul.f32 %v657, %v700
    %v726 = vmul.f32 %v662, %v700
    %v727 = vmul.f32 %v667, %v700
    %v728 = vmul.f32 %v672, %v700
    %v729 = vmul.f32 %v677, %v700
    %v730 = vmul.f32 %v682, %v700
    %v731 = vmul.f32 %v687, %v700
    %v732 = vmul.f32 %v692, %v700
    %v733 = vmul.f32 %v697, %v700
    %v734 = vadd.f32 %v507, %v702
    %v735 = vadd.f32 %v508, %v703
    %v736 = vadd.f32 %v509, %v704
    %v737 = vadd.f32 %v510, %v705
    %v738 = vadd.f32 %v511, %v706
    %v739 = vadd.f32 %v512, %v707
    %v740 = vadd.f32 %v513, %v708
    %v741 = vadd.f32 %v514, %v709
    %v742 = vadd.f32 %v515, %v710
    %v743 = vadd.f32 %v516, %v711
    %v744 = vadd.f32 %v517, %v712
    %v745 = vadd.f32 %v518, %v713
    %v746 = vadd.f32 %v519, %v714
    %v747 = vadd.f32 %v520, %v715
    %v748 = vadd.f32 %v521, %v716
    %v749 = vadd.f32 %v522, %v717
    %v750 = vadd.f32 %v523, %v718
    %v751 = vadd.f32 %v524, %v719
    %v752 = vadd.f32 %v525, %v720
    %v753 = vadd.f32 %v526, %v721
    %v754 = vadd.f32 %v527, %v722
    %v755 = vadd.f32 %v528, %v723
    %v756 = vadd.f32 %v529, %v724
    %v757 = vadd.f32 %v530, %v725
    %v758 = vadd.f32 %v531, %v726
    %v759 = vadd.f32 %v532, %v727
    %v760 = vadd.f32 %v533, %v728
    %v761 = vadd.f32 %v534, %v729
    %v762 = vadd.f32 %v535, %v730
    %v763 = vadd.f32 %v536, %v731
    %v764 = vadd.f32 %v537, %v732
    %v765 = vadd.f32 %v538, %v733
    %vm766 = vcmp.gt.f32.partialorder %v734, 0.0
    %vm767 = vcmp.gt.f32.partialorder %v735, 0.0
    %vm768 = vcmp.gt.f32.partialorder %v736, 0.0
    %vm769 = vcmp.gt.f32.partialorder %v737, 0.0
    %vm770 = vcmp.gt.f32.partialorder %v738, 0.0
    %vm771 = vcmp.gt.f32.partialorder %v739, 0.0
    %vm772 = vcmp.gt.f32.partialorder %v740, 0.0
    %vm773 = vcmp.gt.f32.partialorder %v741, 0.0
    %vm774 = vcmp.gt.f32.partialorder %v742, 0.0
    %vm775 = vcmp.gt.f32.partialorder %v743, 0.0
    %vm776 = vcmp.gt.f32.partialorder %v744, 0.0
    %vm777 = vcmp.gt.f32.partialorder %v745, 0.0
    %vm778 = vcmp.gt.f32.partialorder %v746, 0.0
    %vm779 = vcmp.gt.f32.partialorder %v747, 0.0
    %vm780 = vcmp.gt.f32.partialorder %v748, 0.0
    %vm781 = vcmp.gt.f32.partialorder %v749, 0.0
    %vm782 = vcmp.gt.f32.partialorder %v750, 0.0
    %vm783 = vcmp.gt.f32.partialorder %v751, 0.0
    %vm784 = vcmp.gt.f32.partialorder %v752, 0.0
    %vm785 = vcmp.gt.f32.partialorder %v753, 0.0
    %vm786 = vcmp.gt.f32.partialorder %v754, 0.0
    %vm787 = vcmp.gt.f32.partialorder %v755, 0.0
    %vm788 = vcmp.gt.f32.partialorder %v756, 0.0
    %vm789 = vcmp.gt.f32.partialorder %v757, 0.0
    %vm790 = vcmp.gt.f32.partialorder %v758, 0.0
    %vm791 = vcmp.gt.f32.partialorder %v759, 0.0
    %vm792 = vcmp.gt.f32.partialorder %v760, 0.0
    %vm793 = vcmp.gt.f32.partialorder %v761, 0.0
    %vm794 = vcmp.gt.f32.partialorder %v762, 0.0
    %vm795 = vcmp.gt.f32.partialorder %v763, 0.0
    %vm796 = vcmp.gt.f32.partialorder %v764, 0.0
    %vm797 = vcmp.gt.f32.partialorder %v765, 0.0
    %v798 = vmul.f32 %v734, 0.2
    %v799 = vmul.f32 %v735, 0.2
    %v800 = vmul.f32 %v736, 0.2
    %v801 = vmul.f32 %v737, 0.2
    %v802 = vmul.f32 %v738, 0.2
    %v803 = vmul.f32 %v739, 0.2
    %v804 = vmul.f32 %v740, 0.2
    %v805 = vmul.f32 %v741, 0.2
    %v806 = vmul.f32 %v742, 0.2
    %v807 = vmul.f32 %v743, 0.2
    %v808 = vmul.f32 %v744, 0.2
    %v809 = vmul.f32 %v745, 0.2
    %v810 = vmul.f32 %v746, 0.2
    %v811 = vmul.f32 %v747, 0.2
    %v812 = vmul.f32 %v748, 0.2
    %v813 = vmul.f32 %v749, 0.2
    %v814 = vmul.f32 %v750, 0.2
    %v815 = vmul.f32 %v751, 0.2
    %v816 = vmul.f32 %v752, 0.2
    %v817 = vmul.f32 %v753, 0.2
    %v818 = vmul.f32 %v754, 0.2
    %v819 = vmul.f32 %v755, 0.2
    %v820 = vmul.f32 %v756, 0.2
    %v821 = vmul.f32 %v757, 0.2
    %v822 = vmul.f32 %v758, 0.2
    %v823 = vmul.f32 %v759, 0.2
    %v824 = vmul.f32 %v760, 0.2
    %v825 = vmul.f32 %v761, 0.2
    %v826 = vmul.f32 %v762, 0.2
    %v827 = vmul.f32 %v763, 0.2
    %v828 = vmul.f32 %v764, 0.2
    %v829 = vmul.f32 %v765, 0.2
    %v830 = vsel %vm766, %v734, %v798
    %v831 = vsel %vm767, %v735, %v799
    %v832 = vsel %vm768, %v736, %v800
    %v833 = vsel %vm769, %v737, %v801
    %v834 = vsel %vm770, %v738, %v802
    %v835 = vsel %vm771, %v739, %v803
    %v836 = vsel %vm772, %v740, %v804
    %v837 = vsel %vm773, %v741, %v805
    %v838 = vsel %vm774, %v742, %v806
    %v839 = vsel %vm775, %v743, %v807
    %v840 = vsel %vm776, %v744, %v808
    %v841 = vsel %vm777, %v745, %v809
    %v842 = vsel %vm778, %v746, %v810
    %v843 = vsel %vm779, %v747, %v811
    %v844 = vsel %vm780, %v748, %v812
    %v845 = vsel %vm781, %v749, %v813
    %v846 = vsel %vm782, %v750, %v814
    %v847 = vsel %vm783, %v751, %v815
    %v848 = vsel %vm784, %v752, %v816
    %v849 = vsel %vm785, %v753, %v817
    %v850 = vsel %vm786, %v754, %v818
    %v851 = vsel %vm787, %v755, %v819
    %v852 = vsel %vm788, %v756, %v820
    %v853 = vsel %vm789, %v757, %v821
    %v854 = vsel %vm790, %v758, %v822
    %v855 = vsel %vm791, %v759, %v823
    %v856 = vsel %vm792, %v760, %v824
    %v857 = vsel %vm793, %v761, %v825
    %v858 = vsel %vm794, %v762, %v826
    %v859 = vsel %vm795, %v763, %v827
    %v860 = vsel %vm796, %v764, %v828
    %v861 = vsel %vm797, %v765, %v829
    %v862 = vpack.c.bf16 %v831, %v830
    %v863 = vpack.c.bf16 %v833, %v832
    %v864 = vpack.c.bf16 %v835, %v834
    %v865 = vpack.c.bf16 %v837, %v836
    %v866 = vpack.c.bf16 %v839, %v838
    %v867 = vpack.c.bf16 %v841, %v840
    %v868 = vpack.c.bf16 %v843, %v842
    %v869 = vpack.c.bf16 %v845, %v844
    %v870 = vpack.c.bf16 %v847, %v846
    %v871 = vpack.c.bf16 %v849, %v848
    %v872 = vpack.c.bf16 %v851, %v850
    %v873 = vpack.c.bf16 %v853, %v852
    %v874 = vpack.c.bf16 %v855, %v854
    %v875 = vpack.c.bf16 %v857, %v856
    %v876 = vpack.c.bf16 %v859, %v858
    %v877 = vpack.c.bf16 %v861, %v860
    %v878 = vpack.c.bf16 %v394, %v393
    %v879 = vpack.c.bf16 %v396, %v395
    %vm880 = vcmask 261120
    %v882 = vsel %vm880, %v862, 0
    %v885 = vsel %vm880, %v863, 0
    %v888 = vsel %vm880, %v864, 0
    %v891 = vsel %vm880, %v865, 0
    %v894 = vsel %vm880, %v866, 0
    %v897 = vsel %vm880, %v867, 0
    %v900 = vsel %vm880, %v868, 0
    %v903 = vsel %vm880, %v869, 0
    %v906 = vsel %vm880, %v870, 0
    %v909 = vsel %vm880, %v871, 0
    %v912 = vsel %vm880, %v872, 0
    %v915 = vsel %vm880, %v873, 0
    %v918 = vsel %vm880, %v874, 0
    %v921 = vsel %vm880, %v875, 0
    %v924 = vsel %vm880, %v876, 0
    %v927 = vsel %vm880, %v877, 0
    %929 = vmatpush.bf16.msra.mxu0 0
    %930 = vmatpush.bf16.msra.mxu0 0
    %931 = vmatpush.bf16.msra.mxu0 0
    %932 = vmatpush.bf16.msra.mxu0 0
    %933 = vmatpush.bf16.msra.mxu0 0
    %934 = vmatpush.bf16.msra.mxu0 0
    %935 = vmatpush.bf16.msra.mxu0 %v879
    %936 = vmatpush.bf16.msra.mxu0 %v878
    %937 = vmatmul.bf16.gmra.mxu0 %v882
    %v938 = vpop.f32.mrf.mxu0
    %v939 = vadd.f32 0.0, %v938
    %v940 = vpop.f32.mrf.mxu0
    %v941 = vadd.f32 0.0, %v940
    %942 = vmatmul.bf16.gmra.mxu0 %v885
    %v943 = vpop.f32.mrf.mxu0
    %v944 = vadd.f32 0.0, %v943
    %v945 = vpop.f32.mrf.mxu0
    %v946 = vadd.f32 0.0, %v945
    %947 = vmatmul.bf16.gmra.mxu0 %v888
    %v948 = vpop.f32.mrf.mxu0
    %v949 = vadd.f32 0.0, %v948
    %v950 = vpop.f32.mrf.mxu0
    %v951 = vadd.f32 0.0, %v950
    %952 = vmatmul.bf16.gmra.mxu0 %v891
    %v953 = vpop.f32.mrf.mxu0
    %v954 = vadd.f32 0.0, %v953
    %v955 = vpop.f32.mrf.mxu0
    %v956 = vadd.f32 0.0, %v955
    %957 = vmatmul.bf16.gmra.mxu0 %v894
    %v958 = vpop.f32.mrf.mxu0
    %v959 = vadd.f32 0.0, %v958
    %v960 = vpop.f32.mrf.mxu0
    %v961 = vadd.f32 0.0, %v960
    %962 = vmatmul.bf16.gmra.mxu0 %v897
    %v963 = vpop.f32.mrf.mxu0
    %v964 = vadd.f32 0.0, %v963
    %v965 = vpop.f32.mrf.mxu0
    %v966 = vadd.f32 0.0, %v965
    %967 = vmatmul.bf16.gmra.mxu0 %v900
    %v968 = vpop.f32.mrf.mxu0
    %v969 = vadd.f32 0.0, %v968
    %v970 = vpop.f32.mrf.mxu0
    %v971 = vadd.f32 0.0, %v970
    %972 = vmatmul.bf16.gmra.mxu0 %v903
    %v973 = vpop.f32.mrf.mxu0
    %v974 = vadd.f32 0.0, %v973
    %v975 = vpop.f32.mrf.mxu0
    %v976 = vadd.f32 0.0, %v975
    %977 = vmatmul.bf16.gmra.mxu0 %v906
    %v978 = vpop.f32.mrf.mxu0
    %v979 = vadd.f32 0.0, %v978
    %v980 = vpop.f32.mrf.mxu0
    %v981 = vadd.f32 0.0, %v980
    %982 = vmatmul.bf16.gmra.mxu0 %v909
    %v983 = vpop.f32.mrf.mxu0
    %v984 = vadd.f32 0.0, %v983
    %v985 = vpop.f32.mrf.mxu0
    %v986 = vadd.f32 0.0, %v985
    %987 = vmatmul.bf16.gmra.mxu0 %v912
    %v988 = vpop.f32.mrf.mxu0
    %v989 = vadd.f32 0.0, %v988
    %v990 = vpop.f32.mrf.mxu0
    %v991 = vadd.f32 0.0, %v990
    %992 = vmatmul.bf16.gmra.mxu0 %v915
    %v993 = vpop.f32.mrf.mxu0
    %v994 = vadd.f32 0.0, %v993
    %v995 = vpop.f32.mrf.mxu0
    %v996 = vadd.f32 0.0, %v995
    %997 = vmatmul.bf16.gmra.mxu0 %v918
    %v998 = vpop.f32.mrf.mxu0
    %v999 = vadd.f32 0.0, %v998
    %v1000 = vpop.f32.mrf.mxu0
    %v1001 = vadd.f32 0.0, %v1000
    %1002 = vmatmul.bf16.gmra.mxu0 %v921
    %v1003 = vpop.f32.mrf.mxu0
    %v1004 = vadd.f32 0.0, %v1003
    %v1005 = vpop.f32.mrf.mxu0
    %v1006 = vadd.f32 0.0, %v1005
    %1007 = vmatmul.bf16.gmra.mxu0 %v924
    %v1008 = vpop.f32.mrf.mxu0
    %v1009 = vadd.f32 0.0, %v1008
    %v1010 = vpop.f32.mrf.mxu0
    %v1011 = vadd.f32 0.0, %v1010
    %1012 = vmatmul.bf16.gmra.mxu0 %v927
    %v1013 = vpop.f32.mrf.mxu0
    %v1014 = vadd.f32 0.0, %v1013
    %v1015 = vpop.f32.mrf.mxu0
    %v1016 = vadd.f32 0.0, %v1015
    %1017 = vdwg.mxu0
    %1019 = vset.pattern.permute.xlu0 0
    %1020 = vperm.xlu0 %1019, %v351
    %v1021 = vpop.permute.xlu0 %1020
    %1024 = vset.pattern.permute.xlu0 0
    %1025 = vperm.xlu0 %1024, %v352
    %v1026 = vpop.permute.xlu0 %1025
    %1029 = vset.pattern.permute.xlu0 0
    %1030 = vperm.xlu0 %1029, %v353
    %v1031 = vpop.permute.xlu0 %1030
    %1034 = vset.pattern.permute.xlu0 0
    %1035 = vperm.xlu0 %1034, %v354
    %v1036 = vpop.permute.xlu0 %1035
    %1039 = vset.pattern.permute.xlu0 0
    %1040 = vperm.xlu0 %1039, %v355
    %v1041 = vpop.permute.xlu0 %1040
    %1044 = vset.pattern.permute.xlu0 0
    %1045 = vperm.xlu0 %1044, %v356
    %v1046 = vpop.permute.xlu0 %1045
    %1049 = vset.pattern.permute.xlu0 0
    %1050 = vperm.xlu0 %1049, %v357
    %v1051 = vpop.permute.xlu0 %1050
    %1054 = vset.pattern.permute.xlu0 0
    %1055 = vperm.xlu0 %1054, %v358
    %v1056 = vpop.permute.xlu0 %1055
    %1059 = vset.pattern.permute.xlu0 0
    %1060 = vperm.xlu0 %1059, %v359
    %v1061 = vpop.permute.xlu0 %1060
    %1064 = vset.pattern.permute.xlu0 0
    %1065 = vperm.xlu0 %1064, %v360
    %v1066 = vpop.permute.xlu0 %1065
    %1069 = vset.pattern.permute.xlu0 0
    %1070 = vperm.xlu0 %1069, %v361
    %v1071 = vpop.permute.xlu0 %1070
    %1074 = vset.pattern.permute.xlu0 0
    %1075 = vperm.xlu0 %1074, %v362
    %v1076 = vpop.permute.xlu0 %1075
    %1079 = vset.pattern.permute.xlu0 0
    %1080 = vperm.xlu0 %1079, %v363
    %v1081 = vpop.permute.xlu0 %1080
    %1084 = vset.pattern.permute.xlu0 0
    %1085 = vperm.xlu0 %1084, %v364
    %v1086 = vpop.permute.xlu0 %1085
    %1089 = vset.pattern.permute.xlu0 0
    %1090 = vperm.xlu0 %1089, %v365
    %v1091 = vpop.permute.xlu0 %1090
    %1094 = vset.pattern.permute.xlu0 0
    %1095 = vperm.xlu0 %1094, %v366
    %v1096 = vpop.permute.xlu0 %1095
    %1099 = vset.pattern.permute.xlu0 0
    %1100 = vperm.xlu0 %1099, %v367
    %v1101 = vpop.permute.xlu0 %1100
    %1104 = vset.pattern.permute.xlu0 0
    %1105 = vperm.xlu0 %1104, %v368
    %v1106 = vpop.permute.xlu0 %1105
    %1109 = vset.pattern.permute.xlu0 0
    %1110 = vperm.xlu0 %1109, %v369
    %v1111 = vpop.permute.xlu0 %1110
    %1114 = vset.pattern.permute.xlu0 0
    %1115 = vperm.xlu0 %1114, %v370
    %v1116 = vpop.permute.xlu0 %1115
    %1119 = vset.pattern.permute.xlu0 0
    %1120 = vperm.xlu0 %1119, %v371
    %v1121 = vpop.permute.xlu0 %1120
    %1124 = vset.pattern.permute.xlu0 0
    %1125 = vperm.xlu0 %1124, %v372
    %v1126 = vpop.permute.xlu0 %1125
    %1129 = vset.pattern.permute.xlu0 0
    %1130 = vperm.xlu0 %1129, %v373
    %v1131 = vpop.permute.xlu0 %1130
    %1134 = vset.pattern.permute.xlu0 0
    %1135 = vperm.xlu0 %1134, %v374
    %v1136 = vpop.permute.xlu0 %1135
    %1139 = vset.pattern.permute.xlu0 0
    %1140 = vperm.xlu0 %1139, %v375
    %v1141 = vpop.permute.xlu0 %1140
    %1144 = vset.pattern.permute.xlu0 0
    %1145 = vperm.xlu0 %1144, %v376
    %v1146 = vpop.permute.xlu0 %1145
    %1149 = vset.pattern.permute.xlu0 0
    %1150 = vperm.xlu0 %1149, %v377
    %v1151 = vpop.permute.xlu0 %1150
    %1154 = vset.pattern.permute.xlu0 0
    %1155 = vperm.xlu0 %1154, %v378
    %v1156 = vpop.permute.xlu0 %1155
    %1159 = vset.pattern.permute.xlu0 0
    %1160 = vperm.xlu0 %1159, %v379
    %v1161 = vpop.permute.xlu0 %1160
    %1164 = vset.pattern.permute.xlu0 0
    %1165 = vperm.xlu0 %1164, %v380
    %v1166 = vpop.permute.xlu0 %1165
    %1169 = vset.pattern.permute.xlu0 0
    %1170 = vperm.xlu0 %1169, %v381
    %v1171 = vpop.permute.xlu0 %1170
    %1174 = vset.pattern.permute.xlu0 0
    %1175 = vperm.xlu0 %1174, %v382
    %v1176 = vpop.permute.xlu0 %1175
    %v1178 = vadd.f32 %v939, %v1021
    %v1179 = vadd.f32 %v941, %v1026
    %v1180 = vadd.f32 %v944, %v1031
    %v1181 = vadd.f32 %v946, %v1036
    %v1182 = vadd.f32 %v949, %v1041
    %v1183 = vadd.f32 %v951, %v1046
    %v1184 = vadd.f32 %v954, %v1051
    %v1185 = vadd.f32 %v956, %v1056
    %v1186 = vadd.f32 %v959, %v1061
    %v1187 = vadd.f32 %v961, %v1066
    %v1188 = vadd.f32 %v964, %v1071
    %v1189 = vadd.f32 %v966, %v1076
    %v1190 = vadd.f32 %v969, %v1081
    %v1191 = vadd.f32 %v971, %v1086
    %v1192 = vadd.f32 %v974, %v1091
    %v1193 = vadd.f32 %v976, %v1096
    %v1194 = vadd.f32 %v979, %v1101
    %v1195 = vadd.f32 %v981, %v1106
    %v1196 = vadd.f32 %v984, %v1111
    %v1197 = vadd.f32 %v986, %v1116
    %v1198 = vadd.f32 %v989, %v1121
    %v1199 = vadd.f32 %v991, %v1126
    %v1200 = vadd.f32 %v994, %v1131
    %v1201 = vadd.f32 %v996, %v1136
    %v1202 = vadd.f32 %v999, %v1141
    %v1203 = vadd.f32 %v1001, %v1146
    %v1204 = vadd.f32 %v1004, %v1151
    %v1205 = vadd.f32 %v1006, %v1156
    %v1206 = vadd.f32 %v1009, %v1161
    %v1207 = vadd.f32 %v1011, %v1166
    %v1208 = vadd.f32 %v1014, %v1171
    %v1209 = vadd.f32 %v1016, %v1176
    %vm1210 = vcmask 31744
    %v1211 = vsel %vm1210, %v1178, -inf
    %v1212 = vsel %vm1210, %v1179, -inf
    %v1213 = vmax.f32 %v1211, %v1212
    %v1214 = vrot.slane %v1213, 4
    %v1215 = vmax.f32 %v1213, %v1214
    %v1216 = vrot.slane %v1215, 2
    %v1217 = vmax.f32 %v1215, %v1216
    %v1218 = vrot.slane %v1217, 1
    %v1219 = vmax.f32 %v1217, %v1218
    %v1220 = vsel %vm1210, %v1180, -inf
    %v1221 = vsel %vm1210, %v1181, -inf
    %v1222 = vmax.f32 %v1220, %v1221
    %v1223 = vrot.slane %v1222, 4
    %v1224 = vmax.f32 %v1222, %v1223
    %v1225 = vrot.slane %v1224, 2
    %v1226 = vmax.f32 %v1224, %v1225
    %v1227 = vrot.slane %v1226, 1
    %v1228 = vmax.f32 %v1226, %v1227
    %v1229 = vsel %vm1210, %v1182, -inf
    %v1230 = vsel %vm1210, %v1183, -inf
    %v1231 = vmax.f32 %v1229, %v1230
    %v1232 = vrot.slane %v1231, 4
    %v1233 = vmax.f32 %v1231, %v1232
    %v1234 = vrot.slane %v1233, 2
    %v1235 = vmax.f32 %v1233, %v1234
    %v1236 = vrot.slane %v1235, 1
    %v1237 = vmax.f32 %v1235, %v1236
    %v1238 = vsel %vm1210, %v1184, -inf
    %v1239 = vsel %vm1210, %v1185, -inf
    %v1240 = vmax.f32 %v1238, %v1239
    %v1241 = vrot.slane %v1240, 4
    %v1242 = vmax.f32 %v1240, %v1241
    %v1243 = vrot.slane %v1242, 2
    %v1244 = vmax.f32 %v1242, %v1243
    %v1245 = vrot.slane %v1244, 1
    %v1246 = vmax.f32 %v1244, %v1245
    %v1247 = vsel %vm1210, %v1186, -inf
    %v1248 = vsel %vm1210, %v1187, -inf
    %v1249 = vmax.f32 %v1247, %v1248
    %v1250 = vrot.slane %v1249, 4
    %v1251 = vmax.f32 %v1249, %v1250
    %v1252 = vrot.slane %v1251, 2
    %v1253 = vmax.f32 %v1251, %v1252
    %v1254 = vrot.slane %v1253, 1
    %v1255 = vmax.f32 %v1253, %v1254
    %v1256 = vsel %vm1210, %v1188, -inf
    %v1257 = vsel %vm1210, %v1189, -inf
    %v1258 = vmax.f32 %v1256, %v1257
    %v1259 = vrot.slane %v1258, 4
    %v1260 = vmax.f32 %v1258, %v1259
    %v1261 = vrot.slane %v1260, 2
    %v1262 = vmax.f32 %v1260, %v1261
    %v1263 = vrot.slane %v1262, 1
    %v1264 = vmax.f32 %v1262, %v1263
    %v1265 = vsel %vm1210, %v1190, -inf
    %v1266 = vsel %vm1210, %v1191, -inf
    %v1267 = vmax.f32 %v1265, %v1266
    %v1268 = vrot.slane %v1267, 4
    %v1269 = vmax.f32 %v1267, %v1268
    %v1270 = vrot.slane %v1269, 2
    %v1271 = vmax.f32 %v1269, %v1270
    %v1272 = vrot.slane %v1271, 1
    %v1273 = vmax.f32 %v1271, %v1272
    %v1274 = vsel %vm1210, %v1192, -inf
    %v1275 = vsel %vm1210, %v1193, -inf
    %v1276 = vmax.f32 %v1274, %v1275
    %v1277 = vrot.slane %v1276, 4
    %v1278 = vmax.f32 %v1276, %v1277
    %v1279 = vrot.slane %v1278, 2
    %v1280 = vmax.f32 %v1278, %v1279
    %v1281 = vrot.slane %v1280, 1
    %v1282 = vmax.f32 %v1280, %v1281
    %v1283 = vsel %vm1210, %v1194, -inf
    %v1284 = vsel %vm1210, %v1195, -inf
    %v1285 = vmax.f32 %v1283, %v1284
    %v1286 = vrot.slane %v1285, 4
    %v1287 = vmax.f32 %v1285, %v1286
    %v1288 = vrot.slane %v1287, 2
    %v1289 = vmax.f32 %v1287, %v1288
    %v1290 = vrot.slane %v1289, 1
    %v1291 = vmax.f32 %v1289, %v1290
    %v1292 = vsel %vm1210, %v1196, -inf
    %v1293 = vsel %vm1210, %v1197, -inf
    %v1294 = vmax.f32 %v1292, %v1293
    %v1295 = vrot.slane %v1294, 4
    %v1296 = vmax.f32 %v1294, %v1295
    %v1297 = vrot.slane %v1296, 2
    %v1298 = vmax.f32 %v1296, %v1297
    %v1299 = vrot.slane %v1298, 1
    %v1300 = vmax.f32 %v1298, %v1299
    %v1301 = vsel %vm1210, %v1198, -inf
    %v1302 = vsel %vm1210, %v1199, -inf
    %v1303 = vmax.f32 %v1301, %v1302
    %v1304 = vrot.slane %v1303, 4
    %v1305 = vmax.f32 %v1303, %v1304
    %v1306 = vrot.slane %v1305, 2
    %v1307 = vmax.f32 %v1305, %v1306
    %v1308 = vrot.slane %v1307, 1
    %v1309 = vmax.f32 %v1307, %v1308
    %v1310 = vsel %vm1210, %v1200, -inf
    %v1311 = vsel %vm1210, %v1201, -inf
    %v1312 = vmax.f32 %v1310, %v1311
    %v1313 = vrot.slane %v1312, 4
    %v1314 = vmax.f32 %v1312, %v1313
    %v1315 = vrot.slane %v1314, 2
    %v1316 = vmax.f32 %v1314, %v1315
    %v1317 = vrot.slane %v1316, 1
    %v1318 = vmax.f32 %v1316, %v1317
    %v1319 = vsel %vm1210, %v1202, -inf
    %v1320 = vsel %vm1210, %v1203, -inf
    %v1321 = vmax.f32 %v1319, %v1320
    %v1322 = vrot.slane %v1321, 4
    %v1323 = vmax.f32 %v1321, %v1322
    %v1324 = vrot.slane %v1323, 2
    %v1325 = vmax.f32 %v1323, %v1324
    %v1326 = vrot.slane %v1325, 1
    %v1327 = vmax.f32 %v1325, %v1326
    %v1328 = vsel %vm1210, %v1204, -inf
    %v1329 = vsel %vm1210, %v1205, -inf
    %v1330 = vmax.f32 %v1328, %v1329
    %v1331 = vrot.slane %v1330, 4
    %v1332 = vmax.f32 %v1330, %v1331
    %v1333 = vrot.slane %v1332, 2
    %v1334 = vmax.f32 %v1332, %v1333
    %v1335 = vrot.slane %v1334, 1
    %v1336 = vmax.f32 %v1334, %v1335
    %v1337 = vsel %vm1210, %v1206, -inf
    %v1338 = vsel %vm1210, %v1207, -inf
    %v1339 = vmax.f32 %v1337, %v1338
    %v1340 = vrot.slane %v1339, 4
    %v1341 = vmax.f32 %v1339, %v1340
    %v1342 = vrot.slane %v1341, 2
    %v1343 = vmax.f32 %v1341, %v1342
    %v1344 = vrot.slane %v1343, 1
    %v1345 = vmax.f32 %v1343, %v1344
    %v1346 = vsel %vm1210, %v1208, -inf
    %v1347 = vsel %vm1210, %v1209, -inf
    %v1348 = vmax.f32 %v1346, %v1347
    %v1349 = vrot.slane %v1348, 4
    %v1350 = vmax.f32 %v1348, %v1349
    %v1351 = vrot.slane %v1350, 2
    %v1352 = vmax.f32 %v1350, %v1351
    %v1353 = vrot.slane %v1352, 1
    %v1354 = vmax.f32 %v1352, %v1353
    %v1355 = vsub.f32 %v1178, %v1219
    %v1356 = vsub.f32 %v1179, %v1219
    %v1357 = vsub.f32 %v1180, %v1228
    %v1358 = vsub.f32 %v1181, %v1228
    %v1359 = vsub.f32 %v1182, %v1237
    %v1360 = vsub.f32 %v1183, %v1237
    %v1361 = vsub.f32 %v1184, %v1246
    %v1362 = vsub.f32 %v1185, %v1246
    %v1363 = vsub.f32 %v1186, %v1255
    %v1364 = vsub.f32 %v1187, %v1255
    %v1365 = vsub.f32 %v1188, %v1264
    %v1366 = vsub.f32 %v1189, %v1264
    %v1367 = vsub.f32 %v1190, %v1273
    %v1368 = vsub.f32 %v1191, %v1273
    %v1369 = vsub.f32 %v1192, %v1282
    %v1370 = vsub.f32 %v1193, %v1282
    %v1371 = vsub.f32 %v1194, %v1291
    %v1372 = vsub.f32 %v1195, %v1291
    %v1373 = vsub.f32 %v1196, %v1300
    %v1374 = vsub.f32 %v1197, %v1300
    %v1375 = vsub.f32 %v1198, %v1309
    %v1376 = vsub.f32 %v1199, %v1309
    %v1377 = vsub.f32 %v1200, %v1318
    %v1378 = vsub.f32 %v1201, %v1318
    %v1379 = vsub.f32 %v1202, %v1327
    %v1380 = vsub.f32 %v1203, %v1327
    %v1381 = vsub.f32 %v1204, %v1336
    %v1382 = vsub.f32 %v1205, %v1336
    %v1383 = vsub.f32 %v1206, %v1345
    %v1384 = vsub.f32 %v1207, %v1345
    %v1385 = vsub.f32 %v1208, %v1354
    %v1386 = vsub.f32 %v1209, %v1354
    %v1387 = vmul.f32 %v1355, 1.442695
    %v1388 = vpow.pop %v1387
    %v1389 = vmul.f32 %v1356, 1.442695
    %v1390 = vpow.pop %v1389
    %v1391 = vmul.f32 %v1357, 1.442695
    %v1392 = vpow.pop %v1391
    %v1393 = vmul.f32 %v1358, 1.442695
    %v1394 = vpow.pop %v1393
    %v1395 = vmul.f32 %v1359, 1.442695
    %v1396 = vpow.pop %v1395
    %v1397 = vmul.f32 %v1360, 1.442695
    %v1398 = vpow.pop %v1397
    %v1399 = vmul.f32 %v1361, 1.442695
    %v1400 = vpow.pop %v1399
    %v1401 = vmul.f32 %v1362, 1.442695
    %v1402 = vpow.pop %v1401
    %v1403 = vmul.f32 %v1363, 1.442695
    %v1404 = vpow.pop %v1403
    %v1405 = vmul.f32 %v1364, 1.442695
    %v1406 = vpow.pop %v1405
    %v1407 = vmul.f32 %v1365, 1.442695
    %v1408 = vpow.pop %v1407
    %v1409 = vmul.f32 %v1366, 1.442695
    %v1410 = vpow.pop %v1409
    %v1411 = vmul.f32 %v1367, 1.442695
    %v1412 = vpow.pop %v1411
    %v1413 = vmul.f32 %v1368, 1.442695
    %v1414 = vpow.pop %v1413
    %v1415 = vmul.f32 %v1369, 1.442695
    %v1416 = vpow.pop %v1415
    %v1417 = vmul.f32 %v1370, 1.442695
    %v1418 = vpow.pop %v1417
    %v1419 = vmul.f32 %v1371, 1.442695
    %v1420 = vpow.pop %v1419
    %v1421 = vmul.f32 %v1372, 1.442695
    %v1422 = vpow.pop %v1421
    %v1423 = vmul.f32 %v1373, 1.442695
    %v1424 = vpow.pop %v1423
    %v1425 = vmul.f32 %v1374, 1.442695
    %v1426 = vpow.pop %v1425
    %v1427 = vmul.f32 %v1375, 1.442695
    %v1428 = vpow.pop %v1427
    %v1429 = vmul.f32 %v1376, 1.442695
    %v1430 = vpow.pop %v1429
    %v1431 = vmul.f32 %v1377, 1.442695
    %v1432 = vpow.pop %v1431
    %v1433 = vmul.f32 %v1378, 1.442695
    %v1434 = vpow.pop %v1433
    %v1435 = vmul.f32 %v1379, 1.442695
    %v1436 = vpow.pop %v1435
    %v1437 = vmul.f32 %v1380, 1.442695
    %v1438 = vpow.pop %v1437
    %v1439 = vmul.f32 %v1381, 1.442695
    %v1440 = vpow.pop %v1439
    %v1441 = vmul.f32 %v1382, 1.442695
    %v1442 = vpow.pop %v1441
    %v1443 = vmul.f32 %v1383, 1.442695
    %v1444 = vpow.pop %v1443
    %v1445 = vmul.f32 %v1384, 1.442695
    %v1446 = vpow.pop %v1445
    %v1447 = vmul.f32 %v1385, 1.442695
    %v1448 = vpow.pop %v1447
    %v1449 = vmul.f32 %v1386, 1.442695
    %v1450 = vpow.pop %v1449
    %v1451 = vsel %vm1210, %v1388, 0.0
    %v1452 = vsel %vm1210, %v1390, 0.0
    %v1453 = vadd.f32 %v1451, %v1452
    %v1454 = vrot.slane %v1453, 4
    %v1455 = vadd.f32 %v1453, %v1454
    %v1456 = vrot.slane %v1455, 2
    %v1457 = vadd.f32 %v1455, %v1456
    %v1458 = vrot.slane %v1457, 1
    %v1459 = vadd.f32 %v1457, %v1458
    %v1460 = vsel %vm1210, %v1392, 0.0
    %v1461 = vsel %vm1210, %v1394, 0.0
    %v1462 = vadd.f32 %v1460, %v1461
    %v1463 = vrot.slane %v1462, 4
    %v1464 = vadd.f32 %v1462, %v1463
    %v1465 = vrot.slane %v1464, 2
    %v1466 = vadd.f32 %v1464, %v1465
    %v1467 = vrot.slane %v1466, 1
    %v1468 = vadd.f32 %v1466, %v1467
    %v1469 = vsel %vm1210, %v1396, 0.0
    %v1470 = vsel %vm1210, %v1398, 0.0
    %v1471 = vadd.f32 %v1469, %v1470
    %v1472 = vrot.slane %v1471, 4
    %v1473 = vadd.f32 %v1471, %v1472
    %v1474 = vrot.slane %v1473, 2
    %v1475 = vadd.f32 %v1473, %v1474
    %v1476 = vrot.slane %v1475, 1
    %v1477 = vadd.f32 %v1475, %v1476
    %v1478 = vsel %vm1210, %v1400, 0.0
    %v1479 = vsel %vm1210, %v1402, 0.0
    %v1480 = vadd.f32 %v1478, %v1479
    %v1481 = vrot.slane %v1480, 4
    %v1482 = vadd.f32 %v1480, %v1481
    %v1483 = vrot.slane %v1482, 2
    %v1484 = vadd.f32 %v1482, %v1483
    %v1485 = vrot.slane %v1484, 1
    %v1486 = vadd.f32 %v1484, %v1485
    %v1487 = vsel %vm1210, %v1404, 0.0
    %v1488 = vsel %vm1210, %v1406, 0.0
    %v1489 = vadd.f32 %v1487, %v1488
    %v1490 = vrot.slane %v1489, 4
    %v1491 = vadd.f32 %v1489, %v1490
    %v1492 = vrot.slane %v1491, 2
    %v1493 = vadd.f32 %v1491, %v1492
    %v1494 = vrot.slane %v1493, 1
    %v1495 = vadd.f32 %v1493, %v1494
    %v1496 = vsel %vm1210, %v1408, 0.0
    %v1497 = vsel %vm1210, %v1410, 0.0
    %v1498 = vadd.f32 %v1496, %v1497
    %v1499 = vrot.slane %v1498, 4
    %v1500 = vadd.f32 %v1498, %v1499
    %v1501 = vrot.slane %v1500, 2
    %v1502 = vadd.f32 %v1500, %v1501
    %v1503 = vrot.slane %v1502, 1
    %v1504 = vadd.f32 %v1502, %v1503
    %v1505 = vsel %vm1210, %v1412, 0.0
    %v1506 = vsel %vm1210, %v1414, 0.0
    %v1507 = vadd.f32 %v1505, %v1506
    %v1508 = vrot.slane %v1507, 4
    %v1509 = vadd.f32 %v1507, %v1508
    %v1510 = vrot.slane %v1509, 2
    %v1511 = vadd.f32 %v1509, %v1510
    %v1512 = vrot.slane %v1511, 1
    %v1513 = vadd.f32 %v1511, %v1512
    %v1514 = vsel %vm1210, %v1416, 0.0
    %v1515 = vsel %vm1210, %v1418, 0.0
    %v1516 = vadd.f32 %v1514, %v1515
    %v1517 = vrot.slane %v1516, 4
    %v1518 = vadd.f32 %v1516, %v1517
    %v1519 = vrot.slane %v1518, 2
    %v1520 = vadd.f32 %v1518, %v1519
    %v1521 = vrot.slane %v1520, 1
    %v1522 = vadd.f32 %v1520, %v1521
    %v1523 = vsel %vm1210, %v1420, 0.0
    %v1524 = vsel %vm1210, %v1422, 0.0
    %v1525 = vadd.f32 %v1523, %v1524
    %v1526 = vrot.slane %v1525, 4
    %v1527 = vadd.f32 %v1525, %v1526
    %v1528 = vrot.slane %v1527, 2
    %v1529 = vadd.f32 %v1527, %v1528
    %v1530 = vrot.slane %v1529, 1
    %v1531 = vadd.f32 %v1529, %v1530
    %v1532 = vsel %vm1210, %v1424, 0.0
    %v1533 = vsel %vm1210, %v1426, 0.0
    %v1534 = vadd.f32 %v1532, %v1533
    %v1535 = vrot.slane %v1534, 4
    %v1536 = vadd.f32 %v1534, %v1535
    %v1537 = vrot.slane %v1536, 2
    %v1538 = vadd.f32 %v1536, %v1537
    %v1539 = vrot.slane %v1538, 1
    %v1540 = vadd.f32 %v1538, %v1539
    %v1541 = vsel %vm1210, %v1428, 0.0
    %v1542 = vsel %vm1210, %v1430, 0.0
    %v1543 = vadd.f32 %v1541, %v1542
    %v1544 = vrot.slane %v1543, 4
    %v1545 = vadd.f32 %v1543, %v1544
    %v1546 = vrot.slane %v1545, 2
    %v1547 = vadd.f32 %v1545, %v1546
    %v1548 = vrot.slane %v1547, 1
    %v1549 = vadd.f32 %v1547, %v1548
    %v1550 = vsel %vm1210, %v1432, 0.0
    %v1551 = vsel %vm1210, %v1434, 0.0
    %v1552 = vadd.f32 %v1550, %v1551
    %v1553 = vrot.slane %v1552, 4
    %v1554 = vadd.f32 %v1552, %v1553
    %v1555 = vrot.slane %v1554, 2
    %v1556 = vadd.f32 %v1554, %v1555
    %v1557 = vrot.slane %v1556, 1
    %v1558 = vadd.f32 %v1556, %v1557
    %v1559 = vsel %vm1210, %v1436, 0.0
    %v1560 = vsel %vm1210, %v1438, 0.0
    %v1561 = vadd.f32 %v1559, %v1560
    %v1562 = vrot.slane %v1561, 4
    %v1563 = vadd.f32 %v1561, %v1562
    %v1564 = vrot.slane %v1563, 2
    %v1565 = vadd.f32 %v1563, %v1564
    %v1566 = vrot.slane %v1565, 1
    %v1567 = vadd.f32 %v1565, %v1566
    %v1568 = vsel %vm1210, %v1440, 0.0
    %v1569 = vsel %vm1210, %v1442, 0.0
    %v1570 = vadd.f32 %v1568, %v1569
    %v1571 = vrot.slane %v1570, 4
    %v1572 = vadd.f32 %v1570, %v1571
    %v1573 = vrot.slane %v1572, 2
    %v1574 = vadd.f32 %v1572, %v1573
    %v1575 = vrot.slane %v1574, 1
    %v1576 = vadd.f32 %v1574, %v1575
    %v1577 = vsel %vm1210, %v1444, 0.0
    %v1578 = vsel %vm1210, %v1446, 0.0
    %v1579 = vadd.f32 %v1577, %v1578
    %v1580 = vrot.slane %v1579, 4
    %v1581 = vadd.f32 %v1579, %v1580
    %v1582 = vrot.slane %v1581, 2
    %v1583 = vadd.f32 %v1581, %v1582
    %v1584 = vrot.slane %v1583, 1
    %v1585 = vadd.f32 %v1583, %v1584
    %v1586 = vsel %vm1210, %v1448, 0.0
    %v1587 = vsel %vm1210, %v1450, 0.0
    %v1588 = vadd.f32 %v1586, %v1587
    %v1589 = vrot.slane %v1588, 4
    %v1590 = vadd.f32 %v1588, %v1589
    %v1591 = vrot.slane %v1590, 2
    %v1592 = vadd.f32 %v1590, %v1591
    %v1593 = vrot.slane %v1592, 1
    %v1594 = vadd.f32 %v1592, %v1593
    %v1595 = vrcp.pop %v1459
    %v1596 = vrcp.pop %v1468
    %v1597 = vrcp.pop %v1477
    %v1598 = vrcp.pop %v1486
    %v1599 = vrcp.pop %v1495
    %v1600 = vrcp.pop %v1504
    %v1601 = vrcp.pop %v1513
    %v1602 = vrcp.pop %v1522
    %v1603 = vrcp.pop %v1531
    %v1604 = vrcp.pop %v1540
    %v1605 = vrcp.pop %v1549
    %v1606 = vrcp.pop %v1558
    %v1607 = vrcp.pop %v1567
    %v1608 = vrcp.pop %v1576
    %v1609 = vrcp.pop %v1585
    %v1610 = vrcp.pop %v1594
    %v1611 = vmul.f32 %v1388, %v1595
    %v1612 = vmul.f32 %v1390, %v1595
    %v1613 = vmul.f32 %v1392, %v1596
    %v1614 = vmul.f32 %v1394, %v1596
    %v1615 = vmul.f32 %v1396, %v1597
    %v1616 = vmul.f32 %v1398, %v1597
    %v1617 = vmul.f32 %v1400, %v1598
    %v1618 = vmul.f32 %v1402, %v1598
    %v1619 = vmul.f32 %v1404, %v1599
    %v1620 = vmul.f32 %v1406, %v1599
    %v1621 = vmul.f32 %v1408, %v1600
    %v1622 = vmul.f32 %v1410, %v1600
    %v1623 = vmul.f32 %v1412, %v1601
    %v1624 = vmul.f32 %v1414, %v1601
    %v1625 = vmul.f32 %v1416, %v1602
    %v1626 = vmul.f32 %v1418, %v1602
    %v1627 = vmul.f32 %v1420, %v1603
    %v1628 = vmul.f32 %v1422, %v1603
    %v1629 = vmul.f32 %v1424, %v1604
    %v1630 = vmul.f32 %v1426, %v1604
    %v1631 = vmul.f32 %v1428, %v1605
    %v1632 = vmul.f32 %v1430, %v1605
    %v1633 = vmul.f32 %v1432, %v1606
    %v1634 = vmul.f32 %v1434, %v1606
    %v1635 = vmul.f32 %v1436, %v1607
    %v1636 = vmul.f32 %v1438, %v1607
    %v1637 = vmul.f32 %v1440, %v1608
    %v1638 = vmul.f32 %v1442, %v1608
    %v1639 = vmul.f32 %v1444, %v1609
    %v1640 = vmul.f32 %v1446, %v1609
    %v1641 = vmul.f32 %v1448, %v1610
    %v1642 = vmul.f32 %v1450, %v1610
    %v1644 = vsel %vm1210, %v1611, 0
    %v1647 = vsel %vm1210, %v1612, 0
    %v1650 = vsel %vm1210, %v1613, 0
    %v1653 = vsel %vm1210, %v1614, 0
    %v1656 = vsel %vm1210, %v1615, 0
    %v1659 = vsel %vm1210, %v1616, 0
    %v1662 = vsel %vm1210, %v1617, 0
    %v1665 = vsel %vm1210, %v1618, 0
    %v1668 = vsel %vm1210, %v1619, 0
    %v1671 = vsel %vm1210, %v1620, 0
    %v1674 = vsel %vm1210, %v1621, 0
    %v1677 = vsel %vm1210, %v1622, 0
    %v1680 = vsel %vm1210, %v1623, 0
    %v1683 = vsel %vm1210, %v1624, 0
    %v1686 = vsel %vm1210, %v1625, 0
    %v1689 = vsel %vm1210, %v1626, 0
    %v1692 = vsel %vm1210, %v1627, 0
    %v1695 = vsel %vm1210, %v1628, 0
    %v1698 = vsel %vm1210, %v1629, 0
    %v1701 = vsel %vm1210, %v1630, 0
    %v1704 = vsel %vm1210, %v1631, 0
    %v1707 = vsel %vm1210, %v1632, 0
    %v1710 = vsel %vm1210, %v1633, 0
    %v1713 = vsel %vm1210, %v1634, 0
    %v1716 = vsel %vm1210, %v1635, 0
    %v1719 = vsel %vm1210, %v1636, 0
    %v1722 = vsel %vm1210, %v1637, 0
    %v1725 = vsel %vm1210, %v1638, 0
    %v1728 = vsel %vm1210, %v1639, 0
    %v1731 = vsel %vm1210, %v1640, 0
    %v1734 = vsel %vm1210, %v1641, 0
    %v1737 = vsel %vm1210, %v1642, 0
    %vm1739 = vcmask 1043456
    %v1741 = vsel %vm1739, %v383, 0
    %1743 = vmatpush.msra.mxu0 0.0
    %1744 = vmatpush.msra.mxu0 0.0
    %1745 = vmatpush.msra.mxu0 0.0
    %1746 = vmatpush.msra.mxu0 0.0
    %1747 = vmatpush.msra.mxu0 0.0
    %1748 = vmatpush.msra.mxu0 0.0
    %1749 = vmatpush.msra.mxu0 0.0
    %1750 = vmatpush.msra.mxu0 0.0
    %1751 = vmatpush.msra.mxu0 0.0
    %1752 = vmatpush.msra.mxu0 0.0
    %1753 = vmatpush.msra.mxu0 0.0
    %1754 = vmatpush.msra.mxu0 0.0
    %1755 = vmatpush.msra.mxu0 0.0
    %1756 = vmatpush.msra.mxu0 0.0
    %1757 = vmatpush.msra.mxu0 0.0
    %1758 = vmatpush.msra.mxu0 %v1741
    %1759 = vmatmul.f32.gmra.mxu0 %v1644
    %v1760 = vpop.f32.mrf.mxu0
    %v1761 = vadd.f32 0.0, %v1760
    %1762 = vmatmul.f32.gmra.mxu0 %v1647
    %v1763 = vpop.f32.mrf.mxu0
    %v1764 = vadd.f32 0.0, %v1763
    %1765 = vmatmul.f32.gmra.mxu0 %v1650
    %v1766 = vpop.f32.mrf.mxu0
    %v1767 = vadd.f32 0.0, %v1766
    %1768 = vmatmul.f32.gmra.mxu0 %v1653
    %v1769 = vpop.f32.mrf.mxu0
    %v1770 = vadd.f32 0.0, %v1769
    %1771 = vmatmul.f32.gmra.mxu0 %v1656
    %v1772 = vpop.f32.mrf.mxu0
    %v1773 = vadd.f32 0.0, %v1772
    %1774 = vmatmul.f32.gmra.mxu0 %v1659
    %v1775 = vpop.f32.mrf.mxu0
    %v1776 = vadd.f32 0.0, %v1775
    %1777 = vmatmul.f32.gmra.mxu0 %v1662
    %v1778 = vpop.f32.mrf.mxu0
    %v1779 = vadd.f32 0.0, %v1778
    %1780 = vmatmul.f32.gmra.mxu0 %v1665
    %v1781 = vpop.f32.mrf.mxu0
    %v1782 = vadd.f32 0.0, %v1781
    %1783 = vmatmul.f32.gmra.mxu0 %v1668
    %v1784 = vpop.f32.mrf.mxu0
    %v1785 = vadd.f32 0.0, %v1784
    %1786 = vmatmul.f32.gmra.mxu0 %v1671
    %v1787 = vpop.f32.mrf.mxu0
    %v1788 = vadd.f32 0.0, %v1787
    %1789 = vmatmul.f32.gmra.mxu0 %v1674
    %v1790 = vpop.f32.mrf.mxu0
    %v1791 = vadd.f32 0.0, %v1790
    %1792 = vmatmul.f32.gmra.mxu0 %v1677
    %v1793 = vpop.f32.mrf.mxu0
    %v1794 = vadd.f32 0.0, %v1793
    %1795 = vmatmul.f32.gmra.mxu0 %v1680
    %v1796 = vpop.f32.mrf.mxu0
    %v1797 = vadd.f32 0.0, %v1796
    %1798 = vmatmul.f32.gmra.mxu0 %v1683
    %v1799 = vpop.f32.mrf.mxu0
    %v1800 = vadd.f32 0.0, %v1799
    %1801 = vmatmul.f32.gmra.mxu0 %v1686
    %v1802 = vpop.f32.mrf.mxu0
    %v1803 = vadd.f32 0.0, %v1802
    %1804 = vmatmul.f32.gmra.mxu0 %v1689
    %v1805 = vpop.f32.mrf.mxu0
    %v1806 = vadd.f32 0.0, %v1805
    %1807 = vmatmul.f32.gmra.mxu0 %v1692
    %v1808 = vpop.f32.mrf.mxu0
    %v1809 = vadd.f32 0.0, %v1808
    %1810 = vmatmul.f32.gmra.mxu0 %v1695
    %v1811 = vpop.f32.mrf.mxu0
    %v1812 = vadd.f32 0.0, %v1811
    %1813 = vmatmul.f32.gmra.mxu0 %v1698
    %v1814 = vpop.f32.mrf.mxu0
    %v1815 = vadd.f32 0.0, %v1814
    %1816 = vmatmul.f32.gmra.mxu0 %v1701
    %v1817 = vpop.f32.mrf.mxu0
    %v1818 = vadd.f32 0.0, %v1817
    %1819 = vmatmul.f32.gmra.mxu0 %v1704
    %v1820 = vpop.f32.mrf.mxu0
    %v1821 = vadd.f32 0.0, %v1820
    %1822 = vmatmul.f32.gmra.mxu0 %v1707
    %v1823 = vpop.f32.mrf.mxu0
    %v1824 = vadd.f32 0.0, %v1823
    %1825 = vmatmul.f32.gmra.mxu0 %v1710
    %v1826 = vpop.f32.mrf.mxu0
    %v1827 = vadd.f32 0.0, %v1826
    %1828 = vmatmul.f32.gmra.mxu0 %v1713
    %v1829 = vpop.f32.mrf.mxu0
    %v1830 = vadd.f32 0.0, %v1829
    %1831 = vmatmul.f32.gmra.mxu0 %v1716
    %v1832 = vpop.f32.mrf.mxu0
    %v1833 = vadd.f32 0.0, %v1832
    %1834 = vmatmul.f32.gmra.mxu0 %v1719
    %v1835 = vpop.f32.mrf.mxu0
    %v1836 = vadd.f32 0.0, %v1835
    %1837 = vmatmul.f32.gmra.mxu0 %v1722
    %v1838 = vpop.f32.mrf.mxu0
    %v1839 = vadd.f32 0.0, %v1838
    %1840 = vmatmul.f32.gmra.mxu0 %v1725
    %v1841 = vpop.f32.mrf.mxu0
    %v1842 = vadd.f32 0.0, %v1841
    %1843 = vmatmul.f32.gmra.mxu0 %v1728
    %v1844 = vpop.f32.mrf.mxu0
    %v1845 = vadd.f32 0.0, %v1844
    %1846 = vmatmul.f32.gmra.mxu0 %v1731
    %v1847 = vpop.f32.mrf.mxu0
    %v1848 = vadd.f32 0.0, %v1847
    %1849 = vmatmul.f32.gmra.mxu0 %v1734
    %v1850 = vpop.f32.mrf.mxu0
    %v1851 = vadd.f32 0.0, %v1850
    %1852 = vmatmul.f32.gmra.mxu0 %v1737
    %v1853 = vpop.f32.mrf.mxu0
    %v1854 = vadd.f32 0.0, %v1853
    %1855 = vdwg.mxu0
    %v1856 = vmul.f32 %v1761, %v428
    %v1857 = vmul.f32 %v1764, %v431
    %v1858 = vmul.f32 %v1767, %v428
    %v1859 = vmul.f32 %v1770, %v431
    %v1860 = vmul.f32 %v1773, %v428
    %v1861 = vmul.f32 %v1776, %v431
    %v1862 = vmul.f32 %v1779, %v428
    %v1863 = vmul.f32 %v1782, %v431
    %v1864 = vmul.f32 %v1785, %v428
    %v1865 = vmul.f32 %v1788, %v431
    %v1866 = vmul.f32 %v1791, %v428
    %v1867 = vmul.f32 %v1794, %v431
    %v1868 = vmul.f32 %v1797, %v428
    %v1869 = vmul.f32 %v1800, %v431
    %v1870 = vmul.f32 %v1803, %v428
    %v1871 = vmul.f32 %v1806, %v431
    %v1872 = vmul.f32 %v1809, %v428
    %v1873 = vmul.f32 %v1812, %v431
    %v1874 = vmul.f32 %v1815, %v428
    %v1875 = vmul.f32 %v1818, %v431
    %v1876 = vmul.f32 %v1821, %v428
    %v1877 = vmul.f32 %v1824, %v431
    %v1878 = vmul.f32 %v1827, %v428
    %v1879 = vmul.f32 %v1830, %v431
    %v1880 = vmul.f32 %v1833, %v428
    %v1881 = vmul.f32 %v1836, %v431
    %v1882 = vmul.f32 %v1839, %v428
    %v1883 = vmul.f32 %v1842, %v431
    %v1884 = vmul.f32 %v1845, %v428
    %v1885 = vmul.f32 %v1848, %v431
    %v1886 = vmul.f32 %v1851, %v428
    %v1887 = vmul.f32 %v1854, %v431
    %v1888 = vsel %vm880, %v1856, 0.0
    %v1889 = vsel %vm880, %v1857, 0.0
    %v1890 = vadd.f32 %v1888, %v1889
    %v1891 = vrot.slane %v1890, 4
    %v1892 = vadd.f32 %v1890, %v1891
    %v1893 = vrot.slane %v1892, 2
    %v1894 = vadd.f32 %v1892, %v1893
    %v1895 = vrot.slane %v1894, 1
    %v1896 = vadd.f32 %v1894, %v1895
    %v1897 = vsel %vm880, %v1858, 0.0
    %v1898 = vsel %vm880, %v1859, 0.0
    %v1899 = vadd.f32 %v1897, %v1898
    %v1900 = vrot.slane %v1899, 4
    %v1901 = vadd.f32 %v1899, %v1900
    %v1902 = vrot.slane %v1901, 2
    %v1903 = vadd.f32 %v1901, %v1902
    %v1904 = vrot.slane %v1903, 1
    %v1905 = vadd.f32 %v1903, %v1904
    %v1906 = vsel %vm880, %v1860, 0.0
    %v1907 = vsel %vm880, %v1861, 0.0
    %v1908 = vadd.f32 %v1906, %v1907
    %v1909 = vrot.slane %v1908, 4
    %v1910 = vadd.f32 %v1908, %v1909
    %v1911 = vrot.slane %v1910, 2
    %v1912 = vadd.f32 %v1910, %v1911
    %v1913 = vrot.slane %v1912, 1
    %v1914 = vadd.f32 %v1912, %v1913
    %v1915 = vsel %vm880, %v1862, 0.0
    %v1916 = vsel %vm880, %v1863, 0.0
    %v1917 = vadd.f32 %v1915, %v1916
    %v1918 = vrot.slane %v1917, 4
    %v1919 = vadd.f32 %v1917, %v1918
    %v1920 = vrot.slane %v1919, 2
    %v1921 = vadd.f32 %v1919, %v1920
    %v1922 = vrot.slane %v1921, 1
    %v1923 = vadd.f32 %v1921, %v1922
    %v1924 = vsel %vm880, %v1864, 0.0
    %v1925 = vsel %vm880, %v1865, 0.0
    %v1926 = vadd.f32 %v1924, %v1925
    %v1927 = vrot.slane %v1926, 4
    %v1928 = vadd.f32 %v1926, %v1927
    %v1929 = vrot.slane %v1928, 2
    %v1930 = vadd.f32 %v1928, %v1929
    %v1931 = vrot.slane %v1930, 1
    %v1932 = vadd.f32 %v1930, %v1931
    %v1933 = vsel %vm880, %v1866, 0.0
    %v1934 = vsel %vm880, %v1867, 0.0
    %v1935 = vadd.f32 %v1933, %v1934
    %v1936 = vrot.slane %v1935, 4
    %v1937 = vadd.f32 %v1935, %v1936
    %v1938 = vrot.slane %v1937, 2
    %v1939 = vadd.f32 %v1937, %v1938
    %v1940 = vrot.slane %v1939, 1
    %v1941 = vadd.f32 %v1939, %v1940
    %v1942 = vsel %vm880, %v1868, 0.0
    %v1943 = vsel %vm880, %v1869, 0.0
    %v1944 = vadd.f32 %v1942, %v1943
    %v1945 = vrot.slane %v1944, 4
    %v1946 = vadd.f32 %v1944, %v1945
    %v1947 = vrot.slane %v1946, 2
    %v1948 = vadd.f32 %v1946, %v1947
    %v1949 = vrot.slane %v1948, 1
    %v1950 = vadd.f32 %v1948, %v1949
    %v1951 = vsel %vm880, %v1870, 0.0
    %v1952 = vsel %vm880, %v1871, 0.0
    %v1953 = vadd.f32 %v1951, %v1952
    %v1954 = vrot.slane %v1953, 4
    %v1955 = vadd.f32 %v1953, %v1954
    %v1956 = vrot.slane %v1955, 2
    %v1957 = vadd.f32 %v1955, %v1956
    %v1958 = vrot.slane %v1957, 1
    %v1959 = vadd.f32 %v1957, %v1958
    %v1960 = vsel %vm880, %v1872, 0.0
    %v1961 = vsel %vm880, %v1873, 0.0
    %v1962 = vadd.f32 %v1960, %v1961
    %v1963 = vrot.slane %v1962, 4
    %v1964 = vadd.f32 %v1962, %v1963
    %v1965 = vrot.slane %v1964, 2
    %v1966 = vadd.f32 %v1964, %v1965
    %v1967 = vrot.slane %v1966, 1
    %v1968 = vadd.f32 %v1966, %v1967
    %v1969 = vsel %vm880, %v1874, 0.0
    %v1970 = vsel %vm880, %v1875, 0.0
    %v1971 = vadd.f32 %v1969, %v1970
    %v1972 = vrot.slane %v1971, 4
    %v1973 = vadd.f32 %v1971, %v1972
    %v1974 = vrot.slane %v1973, 2
    %v1975 = vadd.f32 %v1973, %v1974
    %v1976 = vrot.slane %v1975, 1
    %v1977 = vadd.f32 %v1975, %v1976
    %v1978 = vsel %vm880, %v1876, 0.0
    %v1979 = vsel %vm880, %v1877, 0.0
    %v1980 = vadd.f32 %v1978, %v1979
    %v1981 = vrot.slane %v1980, 4
    %v1982 = vadd.f32 %v1980, %v1981
    %v1983 = vrot.slane %v1982, 2
    %v1984 = vadd.f32 %v1982, %v1983
    %v1985 = vrot.slane %v1984, 1
    %v1986 = vadd.f32 %v1984, %v1985
    %v1987 = vsel %vm880, %v1878, 0.0
    %v1988 = vsel %vm880, %v1879, 0.0
    %v1989 = vadd.f32 %v1987, %v1988
    %v1990 = vrot.slane %v1989, 4
    %v1991 = vadd.f32 %v1989, %v1990
    %v1992 = vrot.slane %v1991, 2
    %v1993 = vadd.f32 %v1991, %v1992
    %v1994 = vrot.slane %v1993, 1
    %v1995 = vadd.f32 %v1993, %v1994
    %v1996 = vsel %vm880, %v1880, 0.0
    %v1997 = vsel %vm880, %v1881, 0.0
    %v1998 = vadd.f32 %v1996, %v1997
    %v1999 = vrot.slane %v1998, 4
    %v2000 = vadd.f32 %v1998, %v1999
    %v2001 = vrot.slane %v2000, 2
    %v2002 = vadd.f32 %v2000, %v2001
    %v2003 = vrot.slane %v2002, 1
    %v2004 = vadd.f32 %v2002, %v2003
    %v2005 = vsel %vm880, %v1882, 0.0
    %v2006 = vsel %vm880, %v1883, 0.0
    %v2007 = vadd.f32 %v2005, %v2006
    %v2008 = vrot.slane %v2007, 4
    %v2009 = vadd.f32 %v2007, %v2008
    %v2010 = vrot.slane %v2009, 2
    %v2011 = vadd.f32 %v2009, %v2010
    %v2012 = vrot.slane %v2011, 1
    %v2013 = vadd.f32 %v2011, %v2012
    %v2014 = vsel %vm880, %v1884, 0.0
    %v2015 = vsel %vm880, %v1885, 0.0
    %v2016 = vadd.f32 %v2014, %v2015
    %v2017 = vrot.slane %v2016, 4
    %v2018 = vadd.f32 %v2016, %v2017
    %v2019 = vrot.slane %v2018, 2
    %v2020 = vadd.f32 %v2018, %v2019
    %v2021 = vrot.slane %v2020, 1
    %v2022 = vadd.f32 %v2020, %v2021
    %v2023 = vsel %vm880, %v1886, 0.0
    %v2024 = vsel %vm880, %v1887, 0.0
    %v2025 = vadd.f32 %v2023, %v2024
    %v2026 = vrot.slane %v2025, 4
    %v2027 = vadd.f32 %v2025, %v2026
    %v2028 = vrot.slane %v2027, 2
    %v2029 = vadd.f32 %v2027, %v2028
    %v2030 = vrot.slane %v2029, 1
    %v2031 = vadd.f32 %v2029, %v2030
    %v2033 = vperm.slane %v397, 0
    %v2035 = vadd.f32 %v1896, %v2033
    %v2036 = vadd.f32 %v1905, %v2033
    %v2037 = vadd.f32 %v1914, %v2033
    %v2038 = vadd.f32 %v1923, %v2033
    %v2039 = vadd.f32 %v1932, %v2033
    %v2040 = vadd.f32 %v1941, %v2033
    %v2041 = vadd.f32 %v1950, %v2033
    %v2042 = vadd.f32 %v1959, %v2033
    %v2043 = vadd.f32 %v1968, %v2033
    %v2044 = vadd.f32 %v1977, %v2033
    %v2045 = vadd.f32 %v1986, %v2033
    %v2046 = vadd.f32 %v1995, %v2033
    %v2047 = vadd.f32 %v2004, %v2033
    %v2048 = vadd.f32 %v2013, %v2033
    %v2049 = vadd.f32 %v2022, %v2033
    %v2050 = vadd.f32 %v2031, %v2033
    %v2052 = vperm.slane %v398, 0
    %v2054 = vmul.f32 %v2035, %v2052
    %v2055 = vmul.f32 %v2036, %v2052
    %v2056 = vmul.f32 %v2037, %v2052
    %v2057 = vmul.f32 %v2038, %v2052
    %v2058 = vmul.f32 %v2039, %v2052
    %v2059 = vmul.f32 %v2040, %v2052
    %v2060 = vmul.f32 %v2041, %v2052
    %v2061 = vmul.f32 %v2042, %v2052
    %v2062 = vmul.f32 %v2043, %v2052
    %v2063 = vmul.f32 %v2044, %v2052
    %v2064 = vmul.f32 %v2045, %v2052
    %v2065 = vmul.f32 %v2046, %v2052
    %v2066 = vmul.f32 %v2047, %v2052
    %v2067 = vmul.f32 %v2048, %v2052
    %v2068 = vmul.f32 %v2049, %v2052
    %v2069 = vmul.f32 %v2050, %v2052
    %v2071 = vperm.slane %v399, 0
    %v2073 = vadd.f32 %v2054, %v2071
    %v2074 = vadd.f32 %v2055, %v2071
    %v2075 = vadd.f32 %v2056, %v2071
    %v2076 = vadd.f32 %v2057, %v2071
    %v2077 = vadd.f32 %v2058, %v2071
    %v2078 = vadd.f32 %v2059, %v2071
    %v2079 = vadd.f32 %v2060, %v2071
    %v2080 = vadd.f32 %v2061, %v2071
    %v2081 = vadd.f32 %v2062, %v2071
    %v2082 = vadd.f32 %v2063, %v2071
    %v2083 = vadd.f32 %v2064, %v2071
    %v2084 = vadd.f32 %v2065, %v2071
    %v2085 = vadd.f32 %v2066, %v2071
    %v2086 = vadd.f32 %v2067, %v2071
    %v2087 = vadd.f32 %v2068, %v2071
    %v2088 = vadd.f32 %v2069, %v2071
    %vm2089 = vcmp.gt.f32.partialorder %v2073, 0.0
    %vm2090 = vcmp.gt.f32.partialorder %v2074, 0.0
    %vm2091 = vcmp.gt.f32.partialorder %v2075, 0.0
    %vm2092 = vcmp.gt.f32.partialorder %v2076, 0.0
    %vm2093 = vcmp.gt.f32.partialorder %v2077, 0.0
    %vm2094 = vcmp.gt.f32.partialorder %v2078, 0.0
    %vm2095 = vcmp.gt.f32.partialorder %v2079, 0.0
    %vm2096 = vcmp.gt.f32.partialorder %v2080, 0.0
    %vm2097 = vcmp.gt.f32.partialorder %v2081, 0.0
    %vm2098 = vcmp.gt.f32.partialorder %v2082, 0.0
    %vm2099 = vcmp.gt.f32.partialorder %v2083, 0.0
    %vm2100 = vcmp.gt.f32.partialorder %v2084, 0.0
    %vm2101 = vcmp.gt.f32.partialorder %v2085, 0.0
    %vm2102 = vcmp.gt.f32.partialorder %v2086, 0.0
    %vm2103 = vcmp.gt.f32.partialorder %v2087, 0.0
    %vm2104 = vcmp.gt.f32.partialorder %v2088, 0.0
    %v2105 = vmin.f32 %v2073, 0.0
    %v2106 = vmin.f32 %v2074, 0.0
    %v2107 = vmin.f32 %v2075, 0.0
    %v2108 = vmin.f32 %v2076, 0.0
    %v2109 = vmin.f32 %v2077, 0.0
    %v2110 = vmin.f32 %v2078, 0.0
    %v2111 = vmin.f32 %v2079, 0.0
    %v2112 = vmin.f32 %v2080, 0.0
    %v2113 = vmin.f32 %v2081, 0.0
    %v2114 = vmin.f32 %v2082, 0.0
    %v2115 = vmin.f32 %v2083, 0.0
    %v2116 = vmin.f32 %v2084, 0.0
    %v2117 = vmin.f32 %v2085, 0.0
    %v2118 = vmin.f32 %v2086, 0.0
    %v2119 = vmin.f32 %v2087, 0.0
    %v2120 = vmin.f32 %v2088, 0.0
    %v2121 = vmul.f32 %v2105, 1.442695
    %v2122 = vpow.pop %v2121
    %v2123 = vmul.f32 %v2106, 1.442695
    %v2124 = vpow.pop %v2123
    %v2125 = vmul.f32 %v2107, 1.442695
    %v2126 = vpow.pop %v2125
    %v2127 = vmul.f32 %v2108, 1.442695
    %v2128 = vpow.pop %v2127
    %v2129 = vmul.f32 %v2109, 1.442695
    %v2130 = vpow.pop %v2129
    %v2131 = vmul.f32 %v2110, 1.442695
    %v2132 = vpow.pop %v2131
    %v2133 = vmul.f32 %v2111, 1.442695
    %v2134 = vpow.pop %v2133
    %v2135 = vmul.f32 %v2112, 1.442695
    %v2136 = vpow.pop %v2135
    %v2137 = vmul.f32 %v2113, 1.442695
    %v2138 = vpow.pop %v2137
    %v2139 = vmul.f32 %v2114, 1.442695
    %v2140 = vpow.pop %v2139
    %v2141 = vmul.f32 %v2115, 1.442695
    %v2142 = vpow.pop %v2141
    %v2143 = vmul.f32 %v2116, 1.442695
    %v2144 = vpow.pop %v2143
    %v2145 = vmul.f32 %v2117, 1.442695
    %v2146 = vpow.pop %v2145
    %v2147 = vmul.f32 %v2118, 1.442695
    %v2148 = vpow.pop %v2147
    %v2149 = vmul.f32 %v2119, 1.442695
    %v2150 = vpow.pop %v2149
    %v2151 = vmul.f32 %v2120, 1.442695
    %v2152 = vpow.pop %v2151
    %v2153 = vsub.f32 %v2122, 1.0
    %v2154 = vsub.f32 %v2124, 1.0
    %v2155 = vsub.f32 %v2126, 1.0
    %v2156 = vsub.f32 %v2128, 1.0
    %v2157 = vsub.f32 %v2130, 1.0
    %v2158 = vsub.f32 %v2132, 1.0
    %v2159 = vsub.f32 %v2134, 1.0
    %v2160 = vsub.f32 %v2136, 1.0
    %v2161 = vsub.f32 %v2138, 1.0
    %v2162 = vsub.f32 %v2140, 1.0
    %v2163 = vsub.f32 %v2142, 1.0
    %v2164 = vsub.f32 %v2144, 1.0
    %v2165 = vsub.f32 %v2146, 1.0
    %v2166 = vsub.f32 %v2148, 1.0
    %v2167 = vsub.f32 %v2150, 1.0
    %v2168 = vsub.f32 %v2152, 1.0
    %v2169 = vsel %vm2089, %v2073, %v2153
    %v2170 = vsel %vm2090, %v2074, %v2154
    %v2171 = vsel %vm2091, %v2075, %v2155
    %v2172 = vsel %vm2092, %v2076, %v2156
    %v2173 = vsel %vm2093, %v2077, %v2157
    %v2174 = vsel %vm2094, %v2078, %v2158
    %v2175 = vsel %vm2095, %v2079, %v2159
    %v2176 = vsel %vm2096, %v2080, %v2160
    %v2177 = vsel %vm2097, %v2081, %v2161
    %v2178 = vsel %vm2098, %v2082, %v2162
    %v2179 = vsel %vm2099, %v2083, %v2163
    %v2180 = vsel %vm2100, %v2084, %v2164
    %v2181 = vsel %vm2101, %v2085, %v2165
    %v2182 = vsel %vm2102, %v2086, %v2166
    %v2183 = vsel %vm2103, %v2087, %v2167
    %v2184 = vsel %vm2104, %v2088, %v2168
    %v2185 = vld [vmem:[%s33] sm:$0xff]
    %v2186 = vld [vmem:[%s33 + $0x8] sm:$0xff]
    %v2187 = vld [vmem:[%s33 + $0x10] sm:$0xff]
    %v2188 = vld [vmem:[%s33 + $0x18] sm:$0xff]
    %v2189 = vld [vmem:[%s35] sm:$0x1]
    %v2190 = vld [vmem:[%s37] sm:$0xff]
    %v2191 = vld [vmem:[%s37 + $0x8] sm:$0xff]
    %v2192 = vld [vmem:[%s37 + $0x10] sm:$0xff]
    %v2193 = vld [vmem:[%s37 + $0x18] sm:$0xff]
    %v2194 = vld [vmem:[%s39] sm:$0x1]
    %v2195 = vld [vmem:[%s41] sm:$0x1]
    %v2196 = vld [vmem:[%s43] sm:$0xff]
    %v2197 = vld [vmem:[%s43 + $0x8] sm:$0xff]
    %v2198 = vld [vmem:[%s43 + $0x10] sm:$0xff]
    %v2199 = vld [vmem:[%s43 + $0x18] sm:$0xff]
    %v2200 = vld [vmem:[%s45] sm:$0x1]
    %v2201 = vld [vmem:[%s47] sm:$0x1]
    %v2202 = vld [vmem:[%s49] sm:$0x1]
    %v2204 = vperm.slane %v2189, 0
    %v2222 = vrot.slane %v2170, 7
    %vm2223 = vcmask 1041409
    %v2224 = vsel %vm2223, %v2222, %v2169
    %v2225 = vrot.slane %v2171, 6
    %vm2226 = vcmask 1042434
    %v2227 = vsel %vm2226, %v2225, %v2224
    %v2228 = vrot.slane %v2172, 5
    %vm2229 = vcmask 1043459
    %v2230 = vsel %vm2229, %v2228, %v2227
    %v2231 = vrot.slane %v2173, 4
    %vm2232 = vcmask 1044484
    %v2233 = vsel %vm2232, %v2231, %v2230
    %v2234 = vrot.slane %v2174, 3
    %vm2235 = vcmask 1045509
    %v2236 = vsel %vm2235, %v2234, %v2233
    %v2237 = vrot.slane %v2175, 2
    %vm2238 = vcmask 1046534
    %v2239 = vsel %vm2238, %v2237, %v2236
    %v2240 = vrot.slane %v2176, 1
    %vm2241 = vcmask 1047559
    %v2242 = vsel %vm2241, %v2240, %v2239
    %v2243 = vrot.slane %v2178, 7
    %v2244 = vsel %vm2223, %v2243, %v2177
    %v2245 = vrot.slane %v2179, 6
    %v2246 = vsel %vm2226, %v2245, %v2244
    %v2247 = vrot.slane %v2180, 5
    %v2248 = vsel %vm2229, %v2247, %v2246
    %v2249 = vrot.slane %v2181, 4
    %v2250 = vsel %vm2232, %v2249, %v2248
    %v2251 = vrot.slane %v2182, 3
    %v2252 = vsel %vm2235, %v2251, %v2250
    %v2253 = vrot.slane %v2183, 2
    %v2254 = vsel %vm2238, %v2253, %v2252
    %v2255 = vrot.slane %v2184, 1
    %v2256 = vsel %vm2241, %v2255, %v2254
    %v2257 = vsel %vm880, %v2242, 0
    %v2259 = vsel %vm880, %v2256, 0
    %2261 = vmatpush.msra.mxu0 0.0
    %2262 = vmatpush.msra.mxu0 0.0
    %2263 = vmatpush.msra.mxu0 0.0
    %2264 = vmatpush.msra.mxu0 0.0
    %2265 = vmatpush.msra.mxu0 0.0
    %2266 = vmatpush.msra.mxu0 0.0
    %2267 = vmatpush.msra.mxu0 0.0
    %2268 = vmatpush.msra.mxu0 0.0
    %2269 = vmatpush.msra.mxu0 0.0
    %2270 = vmatpush.msra.mxu0 0.0
    %2271 = vmatpush.msra.mxu0 0.0
    %2272 = vmatpush.msra.mxu0 0.0
    %2273 = vmatpush.msra.mxu0 %v2188
    %2274 = vmatpush.msra.mxu0 %v2187
    %2275 = vmatpush.msra.mxu0 %v2186
    %2276 = vmatpush.msra.mxu0 %v2185
    %2277 = vmatmul.f32.gmra.mxu0 %v2257
    %v2278 = vpop.f32.mrf.mxu0
    %v2279 = vadd.f32 %v2204, %v2278
    %2280 = vmatmul.f32.gmra.mxu0 %v2259
    %v2281 = vpop.f32.mrf.mxu0
    %v2282 = vadd.f32 %v2204, %v2281
    %2283 = vdwg.mxu0
    %v2285 = vperm.slane %v2194, 0
    %2287 = vmatpush.msra.mxu0 0.0
    %2288 = vmatpush.msra.mxu0 0.0
    %2289 = vmatpush.msra.mxu0 0.0
    %2290 = vmatpush.msra.mxu0 0.0
    %2291 = vmatpush.msra.mxu0 0.0
    %2292 = vmatpush.msra.mxu0 0.0
    %2293 = vmatpush.msra.mxu0 0.0
    %2294 = vmatpush.msra.mxu0 0.0
    %2295 = vmatpush.msra.mxu0 0.0
    %2296 = vmatpush.msra.mxu0 0.0
    %2297 = vmatpush.msra.mxu0 0.0
    %2298 = vmatpush.msra.mxu0 0.0
    %2299 = vmatpush.msra.mxu0 %v2193
    %2300 = vmatpush.msra.mxu0 %v2192
    %2301 = vmatpush.msra.mxu0 %v2191
    %2302 = vmatpush.msra.mxu0 %v2190
    %2303 = vmatmul.f32.gmra.mxu0 %v2257
    %v2304 = vpop.f32.mrf.mxu0
    %v2305 = vadd.f32 %v2285, %v2304
    %2306 = vmatmul.f32.gmra.mxu0 %v2259
    %v2307 = vpop.f32.mrf.mxu0
    %v2308 = vadd.f32 %v2285, %v2307
    %2309 = vdwg.mxu0
    %v2312 = vrot.slane %v2305, 1
    %v2313 = vrot.slane %v2305, 2
    %v2314 = vrot.slane %v2305, 3
    %v2315 = vrot.slane %v2305, 4
    %v2316 = vrot.slane %v2305, 5
    %v2317 = vrot.slane %v2305, 6
    %v2318 = vrot.slane %v2305, 7
    %v2319 = vrot.slane %v2308, 1
    %v2320 = vrot.slane %v2308, 2
    %v2321 = vrot.slane %v2308, 3
    %v2322 = vrot.slane %v2308, 4
    %v2323 = vrot.slane %v2308, 5
    %v2324 = vrot.slane %v2308, 6
    %v2325 = vrot.slane %v2308, 7
    %v2326 = vperm.slane %v2305, 0
    %v2327 = vperm.slane %v2312, 0
    %v2328 = vperm.slane %v2313, 0
    %v2329 = vperm.slane %v2314, 0
    %v2330 = vperm.slane %v2315, 0
    %v2331 = vperm.slane %v2316, 0
    %v2332 = vperm.slane %v2317, 0
    %v2333 = vperm.slane %v2318, 0
    %v2334 = vperm.slane %v2308, 0
    %v2335 = vperm.slane %v2319, 0
    %v2336 = vperm.slane %v2320, 0
    %v2337 = vperm.slane %v2321, 0
    %v2338 = vperm.slane %v2322, 0
    %v2339 = vperm.slane %v2323, 0
    %v2340 = vperm.slane %v2324, 0
    %v2341 = vperm.slane %v2325, 0
    %v2358 = vadd.f32 %v2326, %v2279
    %v2359 = vadd.f32 %v2326, %v2282
    %v2360 = vadd.f32 %v2327, %v2279
    %v2361 = vadd.f32 %v2327, %v2282
    %v2362 = vadd.f32 %v2328, %v2279
    %v2363 = vadd.f32 %v2328, %v2282
    %v2364 = vadd.f32 %v2329, %v2279
    %v2365 = vadd.f32 %v2329, %v2282
    %v2366 = vadd.f32 %v2330, %v2279
    %v2367 = vadd.f32 %v2330, %v2282
    %v2368 = vadd.f32 %v2331, %v2279
    %v2369 = vadd.f32 %v2331, %v2282
    %v2370 = vadd.f32 %v2332, %v2279
    %v2371 = vadd.f32 %v2332, %v2282
    %v2372 = vadd.f32 %v2333, %v2279
    %v2373 = vadd.f32 %v2333, %v2282
    %v2374 = vadd.f32 %v2334, %v2279
    %v2375 = vadd.f32 %v2334, %v2282
    %v2376 = vadd.f32 %v2335, %v2279
    %v2377 = vadd.f32 %v2335, %v2282
    %v2378 = vadd.f32 %v2336, %v2279
    %v2379 = vadd.f32 %v2336, %v2282
    %v2380 = vadd.f32 %v2337, %v2279
    %v2381 = vadd.f32 %v2337, %v2282
    %v2382 = vadd.f32 %v2338, %v2279
    %v2383 = vadd.f32 %v2338, %v2282
    %v2384 = vadd.f32 %v2339, %v2279
    %v2385 = vadd.f32 %v2339, %v2282
    %v2386 = vadd.f32 %v2340, %v2279
    %v2387 = vadd.f32 %v2340, %v2282
    %v2388 = vadd.f32 %v2341, %v2279
    %v2389 = vadd.f32 %v2341, %v2282
    %v2391 = vperm.slane %v2195, 0
    %v2393 = vmul.f32 %v542, %v2391
    %v2394 = vmul.f32 %v547, %v2391
    %v2395 = vmul.f32 %v552, %v2391
    %v2396 = vmul.f32 %v557, %v2391
    %v2397 = vmul.f32 %v562, %v2391
    %v2398 = vmul.f32 %v567, %v2391
    %v2399 = vmul.f32 %v572, %v2391
    %v2400 = vmul.f32 %v577, %v2391
    %v2401 = vmul.f32 %v582, %v2391
    %v2402 = vmul.f32 %v587, %v2391
    %v2403 = vmul.f32 %v592, %v2391
    %v2404 = vmul.f32 %v597, %v2391
    %v2405 = vmul.f32 %v602, %v2391
    %v2406 = vmul.f32 %v607, %v2391
    %v2407 = vmul.f32 %v612, %v2391
    %v2408 = vmul.f32 %v617, %v2391
    %v2409 = vmul.f32 %v622, %v2391
    %v2410 = vmul.f32 %v627, %v2391
    %v2411 = vmul.f32 %v632, %v2391
    %v2412 = vmul.f32 %v637, %v2391
    %v2413 = vmul.f32 %v642, %v2391
    %v2414 = vmul.f32 %v647, %v2391
    %v2415 = vmul.f32 %v652, %v2391
    %v2416 = vmul.f32 %v657, %v2391
    %v2417 = vmul.f32 %v662, %v2391
    %v2418 = vmul.f32 %v667, %v2391
    %v2419 = vmul.f32 %v672, %v2391
    %v2420 = vmul.f32 %v677, %v2391
    %v2421 = vmul.f32 %v682, %v2391
    %v2422 = vmul.f32 %v687, %v2391
    %v2423 = vmul.f32 %v692, %v2391
    %v2424 = vmul.f32 %v697, %v2391
    %v2425 = vadd.f32 %v2358, %v2393
    %v2426 = vadd.f32 %v2359, %v2394
    %v2427 = vadd.f32 %v2360, %v2395
    %v2428 = vadd.f32 %v2361, %v2396
    %v2429 = vadd.f32 %v2362, %v2397
    %v2430 = vadd.f32 %v2363, %v2398
    %v2431 = vadd.f32 %v2364, %v2399
    %v2432 = vadd.f32 %v2365, %v2400
    %v2433 = vadd.f32 %v2366, %v2401
    %v2434 = vadd.f32 %v2367, %v2402
    %v2435 = vadd.f32 %v2368, %v2403
    %v2436 = vadd.f32 %v2369, %v2404
    %v2437 = vadd.f32 %v2370, %v2405
    %v2438 = vadd.f32 %v2371, %v2406
    %v2439 = vadd.f32 %v2372, %v2407
    %v2440 = vadd.f32 %v2373, %v2408
    %v2441 = vadd.f32 %v2374, %v2409
    %v2442 = vadd.f32 %v2375, %v2410
    %v2443 = vadd.f32 %v2376, %v2411
    %v2444 = vadd.f32 %v2377, %v2412
    %v2445 = vadd.f32 %v2378, %v2413
    %v2446 = vadd.f32 %v2379, %v2414
    %v2447 = vadd.f32 %v2380, %v2415
    %v2448 = vadd.f32 %v2381, %v2416
    %v2449 = vadd.f32 %v2382, %v2417
    %v2450 = vadd.f32 %v2383, %v2418
    %v2451 = vadd.f32 %v2384, %v2419
    %v2452 = vadd.f32 %v2385, %v2420
    %v2453 = vadd.f32 %v2386, %v2421
    %v2454 = vadd.f32 %v2387, %v2422
    %v2455 = vadd.f32 %v2388, %v2423
    %v2456 = vadd.f32 %v2389, %v2424
    %vm2457 = vcmp.gt.f32.partialorder %v2425, 0.0
    %vm2458 = vcmp.gt.f32.partialorder %v2426, 0.0
    %vm2459 = vcmp.gt.f32.partialorder %v2427, 0.0
    %vm2460 = vcmp.gt.f32.partialorder %v2428, 0.0
    %vm2461 = vcmp.gt.f32.partialorder %v2429, 0.0
    %vm2462 = vcmp.gt.f32.partialorder %v2430, 0.0
    %vm2463 = vcmp.gt.f32.partialorder %v2431, 0.0
    %vm2464 = vcmp.gt.f32.partialorder %v2432, 0.0
    %vm2465 = vcmp.gt.f32.partialorder %v2433, 0.0
    %vm2466 = vcmp.gt.f32.partialorder %v2434, 0.0
    %vm2467 = vcmp.gt.f32.partialorder %v2435, 0.0
    %vm2468 = vcmp.gt.f32.partialorder %v2436, 0.0
    %vm2469 = vcmp.gt.f32.partialorder %v2437, 0.0
    %vm2470 = vcmp.gt.f32.partialorder %v2438, 0.0
    %vm2471 = vcmp.gt.f32.partialorder %v2439, 0.0
    %vm2472 = vcmp.gt.f32.partialorder %v2440, 0.0
    %vm2473 = vcmp.gt.f32.partialorder %v2441, 0.0
    %vm2474 = vcmp.gt.f32.partialorder %v2442, 0.0
    %vm2475 = vcmp.gt.f32.partialorder %v2443, 0.0
    %vm2476 = vcmp.gt.f32.partialorder %v2444, 0.0
    %vm2477 = vcmp.gt.f32.partialorder %v2445, 0.0
    %vm2478 = vcmp.gt.f32.partialorder %v2446, 0.0
    %vm2479 = vcmp.gt.f32.partialorder %v2447, 0.0
    %vm2480 = vcmp.gt.f32.partialorder %v2448, 0.0
    %vm2481 = vcmp.gt.f32.partialorder %v2449, 0.0
    %vm2482 = vcmp.gt.f32.partialorder %v2450, 0.0
    %vm2483 = vcmp.gt.f32.partialorder %v2451, 0.0
    %vm2484 = vcmp.gt.f32.partialorder %v2452, 0.0
    %vm2485 = vcmp.gt.f32.partialorder %v2453, 0.0
    %vm2486 = vcmp.gt.f32.partialorder %v2454, 0.0
    %vm2487 = vcmp.gt.f32.partialorder %v2455, 0.0
    %vm2488 = vcmp.gt.f32.partialorder %v2456, 0.0
    %v2489 = vmul.f32 %v2425, 0.2
    %v2490 = vmul.f32 %v2426, 0.2
    %v2491 = vmul.f32 %v2427, 0.2
    %v2492 = vmul.f32 %v2428, 0.2
    %v2493 = vmul.f32 %v2429, 0.2
    %v2494 = vmul.f32 %v2430, 0.2
    %v2495 = vmul.f32 %v2431, 0.2
    %v2496 = vmul.f32 %v2432, 0.2
    %v2497 = vmul.f32 %v2433, 0.2
    %v2498 = vmul.f32 %v2434, 0.2
    %v2499 = vmul.f32 %v2435, 0.2
    %v2500 = vmul.f32 %v2436, 0.2
    %v2501 = vmul.f32 %v2437, 0.2
    %v2502 = vmul.f32 %v2438, 0.2
    %v2503 = vmul.f32 %v2439, 0.2
    %v2504 = vmul.f32 %v2440, 0.2
    %v2505 = vmul.f32 %v2441, 0.2
    %v2506 = vmul.f32 %v2442, 0.2
    %v2507 = vmul.f32 %v2443, 0.2
    %v2508 = vmul.f32 %v2444, 0.2
    %v2509 = vmul.f32 %v2445, 0.2
    %v2510 = vmul.f32 %v2446, 0.2
    %v2511 = vmul.f32 %v2447, 0.2
    %v2512 = vmul.f32 %v2448, 0.2
    %v2513 = vmul.f32 %v2449, 0.2
    %v2514 = vmul.f32 %v2450, 0.2
    %v2515 = vmul.f32 %v2451, 0.2
    %v2516 = vmul.f32 %v2452, 0.2
    %v2517 = vmul.f32 %v2453, 0.2
    %v2518 = vmul.f32 %v2454, 0.2
    %v2519 = vmul.f32 %v2455, 0.2
    %v2520 = vmul.f32 %v2456, 0.2
    %v2521 = vsel %vm2457, %v2425, %v2489
    %v2522 = vsel %vm2458, %v2426, %v2490
    %v2523 = vsel %vm2459, %v2427, %v2491
    %v2524 = vsel %vm2460, %v2428, %v2492
    %v2525 = vsel %vm2461, %v2429, %v2493
    %v2526 = vsel %vm2462, %v2430, %v2494
    %v2527 = vsel %vm2463, %v2431, %v2495
    %v2528 = vsel %vm2464, %v2432, %v2496
    %v2529 = vsel %vm2465, %v2433, %v2497
    %v2530 = vsel %vm2466, %v2434, %v2498
    %v2531 = vsel %vm2467, %v2435, %v2499
    %v2532 = vsel %vm2468, %v2436, %v2500
    %v2533 = vsel %vm2469, %v2437, %v2501
    %v2534 = vsel %vm2470, %v2438, %v2502
    %v2535 = vsel %vm2471, %v2439, %v2503
    %v2536 = vsel %vm2472, %v2440, %v2504
    %v2537 = vsel %vm2473, %v2441, %v2505
    %v2538 = vsel %vm2474, %v2442, %v2506
    %v2539 = vsel %vm2475, %v2443, %v2507
    %v2540 = vsel %vm2476, %v2444, %v2508
    %v2541 = vsel %vm2477, %v2445, %v2509
    %v2542 = vsel %vm2478, %v2446, %v2510
    %v2543 = vsel %vm2479, %v2447, %v2511
    %v2544 = vsel %vm2480, %v2448, %v2512
    %v2545 = vsel %vm2481, %v2449, %v2513
    %v2546 = vsel %vm2482, %v2450, %v2514
    %v2547 = vsel %vm2483, %v2451, %v2515
    %v2548 = vsel %vm2484, %v2452, %v2516
    %v2549 = vsel %vm2485, %v2453, %v2517
    %v2550 = vsel %vm2486, %v2454, %v2518
    %v2551 = vsel %vm2487, %v2455, %v2519
    %v2552 = vsel %vm2488, %v2456, %v2520
    %v2553 = vpack.c.bf16 %v2522, %v2521
    %v2554 = vpack.c.bf16 %v2524, %v2523
    %v2555 = vpack.c.bf16 %v2526, %v2525
    %v2556 = vpack.c.bf16 %v2528, %v2527
    %v2557 = vpack.c.bf16 %v2530, %v2529
    %v2558 = vpack.c.bf16 %v2532, %v2531
    %v2559 = vpack.c.bf16 %v2534, %v2533
    %v2560 = vpack.c.bf16 %v2536, %v2535
    %v2561 = vpack.c.bf16 %v2538, %v2537
    %v2562 = vpack.c.bf16 %v2540, %v2539
    %v2563 = vpack.c.bf16 %v2542, %v2541
    %v2564 = vpack.c.bf16 %v2544, %v2543
    %v2565 = vpack.c.bf16 %v2546, %v2545
    %v2566 = vpack.c.bf16 %v2548, %v2547
    %v2567 = vpack.c.bf16 %v2550, %v2549
    %v2568 = vpack.c.bf16 %v2552, %v2551
    %v2569 = vpack.c.bf16 %v2197, %v2196
    %v2570 = vpack.c.bf16 %v2199, %v2198
    %v2572 = vsel %vm880, %v2553, 0
    %v2575 = vsel %vm880, %v2554, 0
    %v2578 = vsel %vm880, %v2555, 0
    %v2581 = vsel %vm880, %v2556, 0
    %v2584 = vsel %vm880, %v2557, 0
    %v2587 = vsel %vm880, %v2558, 0
    %v2590 = vsel %vm880, %v2559, 0
    %v2593 = vsel %vm880, %v2560, 0
    %v2596 = vsel %vm880, %v2561, 0
    %v2599 = vsel %vm880, %v2562, 0
    %v2602 = vsel %vm880, %v2563, 0
    %v2605 = vsel %vm880, %v2564, 0
    %v2608 = vsel %vm880, %v2565, 0
    %v2611 = vsel %vm880, %v2566, 0
    %v2614 = vsel %vm880, %v2567, 0
    %v2617 = vsel %vm880, %v2568, 0
    %2619 = vmatpush.bf16.msra.mxu0 0
    %2620 = vmatpush.bf16.msra.mxu0 0
    %2621 = vmatpush.bf16.msra.mxu0 0
    %2622 = vmatpush.bf16.msra.mxu0 0
    %2623 = vmatpush.bf16.msra.mxu0 0
    %2624 = vmatpush.bf16.msra.mxu0 0
    %2625 = vmatpush.bf16.msra.mxu0 %v2570
    %2626 = vmatpush.bf16.msra.mxu0 %v2569
    %2627 = vmatmul.bf16.gmra.mxu0 %v2572
    %v2628 = vpop.f32.mrf.mxu0
    %v2629 = vadd.f32 0.0, %v2628
    %v2630 = vpop.f32.mrf.mxu0
    %v2631 = vadd.f32 0.0, %v2630
    %2632 = vmatmul.bf16.gmra.mxu0 %v2575
    %v2633 = vpop.f32.mrf.mxu0
    %v2634 = vadd.f32 0.0, %v2633
    %v2635 = vpop.f32.mrf.mxu0
    %v2636 = vadd.f32 0.0, %v2635
    %2637 = vmatmul.bf16.gmra.mxu0 %v2578
    %v2638 = vpop.f32.mrf.mxu0
    %v2639 = vadd.f32 0.0, %v2638
    %v2640 = vpop.f32.mrf.mxu0
    %v2641 = vadd.f32 0.0, %v2640
    %2642 = vmatmul.bf16.gmra.mxu0 %v2581
    %v2643 = vpop.f32.mrf.mxu0
    %v2644 = vadd.f32 0.0, %v2643
    %v2645 = vpop.f32.mrf.mxu0
    %v2646 = vadd.f32 0.0, %v2645
    %2647 = vmatmul.bf16.gmra.mxu0 %v2584
    %v2648 = vpop.f32.mrf.mxu0
    %v2649 = vadd.f32 0.0, %v2648
    %v2650 = vpop.f32.mrf.mxu0
    %v2651 = vadd.f32 0.0, %v2650
    %2652 = vmatmul.bf16.gmra.mxu0 %v2587
    %v2653 = vpop.f32.mrf.mxu0
    %v2654 = vadd.f32 0.0, %v2653
    %v2655 = vpop.f32.mrf.mxu0
    %v2656 = vadd.f32 0.0, %v2655
    %2657 = vmatmul.bf16.gmra.mxu0 %v2590
    %v2658 = vpop.f32.mrf.mxu0
    %v2659 = vadd.f32 0.0, %v2658
    %v2660 = vpop.f32.mrf.mxu0
    %v2661 = vadd.f32 0.0, %v2660
    %2662 = vmatmul.bf16.gmra.mxu0 %v2593
    %v2663 = vpop.f32.mrf.mxu0
    %v2664 = vadd.f32 0.0, %v2663
    %v2665 = vpop.f32.mrf.mxu0
    %v2666 = vadd.f32 0.0, %v2665
    %2667 = vmatmul.bf16.gmra.mxu0 %v2596
    %v2668 = vpop.f32.mrf.mxu0
    %v2669 = vadd.f32 0.0, %v2668
    %v2670 = vpop.f32.mrf.mxu0
    %v2671 = vadd.f32 0.0, %v2670
    %2672 = vmatmul.bf16.gmra.mxu0 %v2599
    %v2673 = vpop.f32.mrf.mxu0
    %v2674 = vadd.f32 0.0, %v2673
    %v2675 = vpop.f32.mrf.mxu0
    %v2676 = vadd.f32 0.0, %v2675
    %2677 = vmatmul.bf16.gmra.mxu0 %v2602
    %v2678 = vpop.f32.mrf.mxu0
    %v2679 = vadd.f32 0.0, %v2678
    %v2680 = vpop.f32.mrf.mxu0
    %v2681 = vadd.f32 0.0, %v2680
    %2682 = vmatmul.bf16.gmra.mxu0 %v2605
    %v2683 = vpop.f32.mrf.mxu0
    %v2684 = vadd.f32 0.0, %v2683
    %v2685 = vpop.f32.mrf.mxu0
    %v2686 = vadd.f32 0.0, %v2685
    %2687 = vmatmul.bf16.gmra.mxu0 %v2608
    %v2688 = vpop.f32.mrf.mxu0
    %v2689 = vadd.f32 0.0, %v2688
    %v2690 = vpop.f32.mrf.mxu0
    %v2691 = vadd.f32 0.0, %v2690
    %2692 = vmatmul.bf16.gmra.mxu0 %v2611
    %v2693 = vpop.f32.mrf.mxu0
    %v2694 = vadd.f32 0.0, %v2693
    %v2695 = vpop.f32.mrf.mxu0
    %v2696 = vadd.f32 0.0, %v2695
    %2697 = vmatmul.bf16.gmra.mxu0 %v2614
    %v2698 = vpop.f32.mrf.mxu0
    %v2699 = vadd.f32 0.0, %v2698
    %v2700 = vpop.f32.mrf.mxu0
    %v2701 = vadd.f32 0.0, %v2700
    %2702 = vmatmul.bf16.gmra.mxu0 %v2617
    %v2703 = vpop.f32.mrf.mxu0
    %v2704 = vadd.f32 0.0, %v2703
    %v2705 = vpop.f32.mrf.mxu0
    %v2706 = vadd.f32 0.0, %v2705
    %2707 = vdwg.mxu0
    %v2708 = vadd.f32 %v2629, %v1021
    %v2709 = vadd.f32 %v2631, %v1026
    %v2710 = vadd.f32 %v2634, %v1031
    %v2711 = vadd.f32 %v2636, %v1036
    %v2712 = vadd.f32 %v2639, %v1041
    %v2713 = vadd.f32 %v2641, %v1046
    %v2714 = vadd.f32 %v2644, %v1051
    %v2715 = vadd.f32 %v2646, %v1056
    %v2716 = vadd.f32 %v2649, %v1061
    %v2717 = vadd.f32 %v2651, %v1066
    %v2718 = vadd.f32 %v2654, %v1071
    %v2719 = vadd.f32 %v2656, %v1076
    %v2720 = vadd.f32 %v2659, %v1081
    %v2721 = vadd.f32 %v2661, %v1086
    %v2722 = vadd.f32 %v2664, %v1091
    %v2723 = vadd.f32 %v2666, %v1096
    %v2724 = vadd.f32 %v2669, %v1101
    %v2725 = vadd.f32 %v2671, %v1106
    %v2726 = vadd.f32 %v2674, %v1111
    %v2727 = vadd.f32 %v2676, %v1116
    %v2728 = vadd.f32 %v2679, %v1121
    %v2729 = vadd.f32 %v2681, %v1126
    %v2730 = vadd.f32 %v2684, %v1131
    %v2731 = vadd.f32 %v2686, %v1136
    %v2732 = vadd.f32 %v2689, %v1141
    %v2733 = vadd.f32 %v2691, %v1146
    %v2734 = vadd.f32 %v2694, %v1151
    %v2735 = vadd.f32 %v2696, %v1156
    %v2736 = vadd.f32 %v2699, %v1161
    %v2737 = vadd.f32 %v2701, %v1166
    %v2738 = vadd.f32 %v2704, %v1171
    %v2739 = vadd.f32 %v2706, %v1176
    %v2740 = vsel %vm1210, %v2708, -inf
    %v2741 = vsel %vm1210, %v2709, -inf
    %v2742 = vmax.f32 %v2740, %v2741
    %v2743 = vrot.slane %v2742, 4
    %v2744 = vmax.f32 %v2742, %v2743
    %v2745 = vrot.slane %v2744, 2
    %v2746 = vmax.f32 %v2744, %v2745
    %v2747 = vrot.slane %v2746, 1
    %v2748 = vmax.f32 %v2746, %v2747
    %v2749 = vsel %vm1210, %v2710, -inf
    %v2750 = vsel %vm1210, %v2711, -inf
    %v2751 = vmax.f32 %v2749, %v2750
    %v2752 = vrot.slane %v2751, 4
    %v2753 = vmax.f32 %v2751, %v2752
    %v2754 = vrot.slane %v2753, 2
    %v2755 = vmax.f32 %v2753, %v2754
    %v2756 = vrot.slane %v2755, 1
    %v2757 = vmax.f32 %v2755, %v2756
    %v2758 = vsel %vm1210, %v2712, -inf
    %v2759 = vsel %vm1210, %v2713, -inf
    %v2760 = vmax.f32 %v2758, %v2759
    %v2761 = vrot.slane %v2760, 4
    %v2762 = vmax.f32 %v2760, %v2761
    %v2763 = vrot.slane %v2762, 2
    %v2764 = vmax.f32 %v2762, %v2763
    %v2765 = vrot.slane %v2764, 1
    %v2766 = vmax.f32 %v2764, %v2765
    %v2767 = vsel %vm1210, %v2714, -inf
    %v2768 = vsel %vm1210, %v2715, -inf
    %v2769 = vmax.f32 %v2767, %v2768
    %v2770 = vrot.slane %v2769, 4
    %v2771 = vmax.f32 %v2769, %v2770
    %v2772 = vrot.slane %v2771, 2
    %v2773 = vmax.f32 %v2771, %v2772
    %v2774 = vrot.slane %v2773, 1
    %v2775 = vmax.f32 %v2773, %v2774
    %v2776 = vsel %vm1210, %v2716, -inf
    %v2777 = vsel %vm1210, %v2717, -inf
    %v2778 = vmax.f32 %v2776, %v2777
    %v2779 = vrot.slane %v2778, 4
    %v2780 = vmax.f32 %v2778, %v2779
    %v2781 = vrot.slane %v2780, 2
    %v2782 = vmax.f32 %v2780, %v2781
    %v2783 = vrot.slane %v2782, 1
    %v2784 = vmax.f32 %v2782, %v2783
    %v2785 = vsel %vm1210, %v2718, -inf
    %v2786 = vsel %vm1210, %v2719, -inf
    %v2787 = vmax.f32 %v2785, %v2786
    %v2788 = vrot.slane %v2787, 4
    %v2789 = vmax.f32 %v2787, %v2788
    %v2790 = vrot.slane %v2789, 2
    %v2791 = vmax.f32 %v2789, %v2790
    %v2792 = vrot.slane %v2791, 1
    %v2793 = vmax.f32 %v2791, %v2792
    %v2794 = vsel %vm1210, %v2720, -inf
    %v2795 = vsel %vm1210, %v2721, -inf
    %v2796 = vmax.f32 %v2794, %v2795
    %v2797 = vrot.slane %v2796, 4
    %v2798 = vmax.f32 %v2796, %v2797
    %v2799 = vrot.slane %v2798, 2
    %v2800 = vmax.f32 %v2798, %v2799
    %v2801 = vrot.slane %v2800, 1
    %v2802 = vmax.f32 %v2800, %v2801
    %v2803 = vsel %vm1210, %v2722, -inf
    %v2804 = vsel %vm1210, %v2723, -inf
    %v2805 = vmax.f32 %v2803, %v2804
    %v2806 = vrot.slane %v2805, 4
    %v2807 = vmax.f32 %v2805, %v2806
    %v2808 = vrot.slane %v2807, 2
    %v2809 = vmax.f32 %v2807, %v2808
    %v2810 = vrot.slane %v2809, 1
    %v2811 = vmax.f32 %v2809, %v2810
    %v2812 = vsel %vm1210, %v2724, -inf
    %v2813 = vsel %vm1210, %v2725, -inf
    %v2814 = vmax.f32 %v2812, %v2813
    %v2815 = vrot.slane %v2814, 4
    %v2816 = vmax.f32 %v2814, %v2815
    %v2817 = vrot.slane %v2816, 2
    %v2818 = vmax.f32 %v2816, %v2817
    %v2819 = vrot.slane %v2818, 1
    %v2820 = vmax.f32 %v2818, %v2819
    %v2821 = vsel %vm1210, %v2726, -inf
    %v2822 = vsel %vm1210, %v2727, -inf
    %v2823 = vmax.f32 %v2821, %v2822
    %v2824 = vrot.slane %v2823, 4
    %v2825 = vmax.f32 %v2823, %v2824
    %v2826 = vrot.slane %v2825, 2
    %v2827 = vmax.f32 %v2825, %v2826
    %v2828 = vrot.slane %v2827, 1
    %v2829 = vmax.f32 %v2827, %v2828
    %v2830 = vsel %vm1210, %v2728, -inf
    %v2831 = vsel %vm1210, %v2729, -inf
    %v2832 = vmax.f32 %v2830, %v2831
    %v2833 = vrot.slane %v2832, 4
    %v2834 = vmax.f32 %v2832, %v2833
    %v2835 = vrot.slane %v2834, 2
    %v2836 = vmax.f32 %v2834, %v2835
    %v2837 = vrot.slane %v2836, 1
    %v2838 = vmax.f32 %v2836, %v2837
    %v2839 = vsel %vm1210, %v2730, -inf
    %v2840 = vsel %vm1210, %v2731, -inf
    %v2841 = vmax.f32 %v2839, %v2840
    %v2842 = vrot.slane %v2841, 4
    %v2843 = vmax.f32 %v2841, %v2842
    %v2844 = vrot.slane %v2843, 2
    %v2845 = vmax.f32 %v2843, %v2844
    %v2846 = vrot.slane %v2845, 1
    %v2847 = vmax.f32 %v2845, %v2846
    %v2848 = vsel %vm1210, %v2732, -inf
    %v2849 = vsel %vm1210, %v2733, -inf
    %v2850 = vmax.f32 %v2848, %v2849
    %v2851 = vrot.slane %v2850, 4
    %v2852 = vmax.f32 %v2850, %v2851
    %v2853 = vrot.slane %v2852, 2
    %v2854 = vmax.f32 %v2852, %v2853
    %v2855 = vrot.slane %v2854, 1
    %v2856 = vmax.f32 %v2854, %v2855
    %v2857 = vsel %vm1210, %v2734, -inf
    %v2858 = vsel %vm1210, %v2735, -inf
    %v2859 = vmax.f32 %v2857, %v2858
    %v2860 = vrot.slane %v2859, 4
    %v2861 = vmax.f32 %v2859, %v2860
    %v2862 = vrot.slane %v2861, 2
    %v2863 = vmax.f32 %v2861, %v2862
    %v2864 = vrot.slane %v2863, 1
    %v2865 = vmax.f32 %v2863, %v2864
    %v2866 = vsel %vm1210, %v2736, -inf
    %v2867 = vsel %vm1210, %v2737, -inf
    %v2868 = vmax.f32 %v2866, %v2867
    %v2869 = vrot.slane %v2868, 4
    %v2870 = vmax.f32 %v2868, %v2869
    %v2871 = vrot.slane %v2870, 2
    %v2872 = vmax.f32 %v2870, %v2871
    %v2873 = vrot.slane %v2872, 1
    %v2874 = vmax.f32 %v2872, %v2873
    %v2875 = vsel %vm1210, %v2738, -inf
    %v2876 = vsel %vm1210, %v2739, -inf
    %v2877 = vmax.f32 %v2875, %v2876
    %v2878 = vrot.slane %v2877, 4
    %v2879 = vmax.f32 %v2877, %v2878
    %v2880 = vrot.slane %v2879, 2
    %v2881 = vmax.f32 %v2879, %v2880
    %v2882 = vrot.slane %v2881, 1
    %v2883 = vmax.f32 %v2881, %v2882
    %v2884 = vsub.f32 %v2708, %v2748
    %v2885 = vsub.f32 %v2709, %v2748
    %v2886 = vsub.f32 %v2710, %v2757
    %v2887 = vsub.f32 %v2711, %v2757
    %v2888 = vsub.f32 %v2712, %v2766
    %v2889 = vsub.f32 %v2713, %v2766
    %v2890 = vsub.f32 %v2714, %v2775
    %v2891 = vsub.f32 %v2715, %v2775
    %v2892 = vsub.f32 %v2716, %v2784
    %v2893 = vsub.f32 %v2717, %v2784
    %v2894 = vsub.f32 %v2718, %v2793
    %v2895 = vsub.f32 %v2719, %v2793
    %v2896 = vsub.f32 %v2720, %v2802
    %v2897 = vsub.f32 %v2721, %v2802
    %v2898 = vsub.f32 %v2722, %v2811
    %v2899 = vsub.f32 %v2723, %v2811
    %v2900 = vsub.f32 %v2724, %v2820
    %v2901 = vsub.f32 %v2725, %v2820
    %v2902 = vsub.f32 %v2726, %v2829
    %v2903 = vsub.f32 %v2727, %v2829
    %v2904 = vsub.f32 %v2728, %v2838
    %v2905 = vsub.f32 %v2729, %v2838
    %v2906 = vsub.f32 %v2730, %v2847
    %v2907 = vsub.f32 %v2731, %v2847
    %v2908 = vsub.f32 %v2732, %v2856
    %v2909 = vsub.f32 %v2733, %v2856
    %v2910 = vsub.f32 %v2734, %v2865
    %v2911 = vsub.f32 %v2735, %v2865
    %v2912 = vsub.f32 %v2736, %v2874
    %v2913 = vsub.f32 %v2737, %v2874
    %v2914 = vsub.f32 %v2738, %v2883
    %v2915 = vsub.f32 %v2739, %v2883
    %v2916 = vmul.f32 %v2884, 1.442695
    %v2917 = vpow.pop %v2916
    %v2918 = vmul.f32 %v2885, 1.442695
    %v2919 = vpow.pop %v2918
    %v2920 = vmul.f32 %v2886, 1.442695
    %v2921 = vpow.pop %v2920
    %v2922 = vmul.f32 %v2887, 1.442695
    %v2923 = vpow.pop %v2922
    %v2924 = vmul.f32 %v2888, 1.442695
    %v2925 = vpow.pop %v2924
    %v2926 = vmul.f32 %v2889, 1.442695
    %v2927 = vpow.pop %v2926
    %v2928 = vmul.f32 %v2890, 1.442695
    %v2929 = vpow.pop %v2928
    %v2930 = vmul.f32 %v2891, 1.442695
    %v2931 = vpow.pop %v2930
    %v2932 = vmul.f32 %v2892, 1.442695
    %v2933 = vpow.pop %v2932
    %v2934 = vmul.f32 %v2893, 1.442695
    %v2935 = vpow.pop %v2934
    %v2936 = vmul.f32 %v2894, 1.442695
    %v2937 = vpow.pop %v2936
    %v2938 = vmul.f32 %v2895, 1.442695
    %v2939 = vpow.pop %v2938
    %v2940 = vmul.f32 %v2896, 1.442695
    %v2941 = vpow.pop %v2940
    %v2942 = vmul.f32 %v2897, 1.442695
    %v2943 = vpow.pop %v2942
    %v2944 = vmul.f32 %v2898, 1.442695
    %v2945 = vpow.pop %v2944
    %v2946 = vmul.f32 %v2899, 1.442695
    %v2947 = vpow.pop %v2946
    %v2948 = vmul.f32 %v2900, 1.442695
    %v2949 = vpow.pop %v2948
    %v2950 = vmul.f32 %v2901, 1.442695
    %v2951 = vpow.pop %v2950
    %v2952 = vmul.f32 %v2902, 1.442695
    %v2953 = vpow.pop %v2952
    %v2954 = vmul.f32 %v2903, 1.442695
    %v2955 = vpow.pop %v2954
    %v2956 = vmul.f32 %v2904, 1.442695
    %v2957 = vpow.pop %v2956
    %v2958 = vmul.f32 %v2905, 1.442695
    %v2959 = vpow.pop %v2958
    %v2960 = vmul.f32 %v2906, 1.442695
    %v2961 = vpow.pop %v2960
    %v2962 = vmul.f32 %v2907, 1.442695
    %v2963 = vpow.pop %v2962
    %v2964 = vmul.f32 %v2908, 1.442695
    %v2965 = vpow.pop %v2964
    %v2966 = vmul.f32 %v2909, 1.442695
    %v2967 = vpow.pop %v2966
    %v2968 = vmul.f32 %v2910, 1.442695
    %v2969 = vpow.pop %v2968
    %v2970 = vmul.f32 %v2911, 1.442695
    %v2971 = vpow.pop %v2970
    %v2972 = vmul.f32 %v2912, 1.442695
    %v2973 = vpow.pop %v2972
    %v2974 = vmul.f32 %v2913, 1.442695
    %v2975 = vpow.pop %v2974
    %v2976 = vmul.f32 %v2914, 1.442695
    %v2977 = vpow.pop %v2976
    %v2978 = vmul.f32 %v2915, 1.442695
    %v2979 = vpow.pop %v2978
    %v2980 = vsel %vm1210, %v2917, 0.0
    %v2981 = vsel %vm1210, %v2919, 0.0
    %v2982 = vadd.f32 %v2980, %v2981
    %v2983 = vrot.slane %v2982, 4
    %v2984 = vadd.f32 %v2982, %v2983
    %v2985 = vrot.slane %v2984, 2
    %v2986 = vadd.f32 %v2984, %v2985
    %v2987 = vrot.slane %v2986, 1
    %v2988 = vadd.f32 %v2986, %v2987
    %v2989 = vsel %vm1210, %v2921, 0.0
    %v2990 = vsel %vm1210, %v2923, 0.0
    %v2991 = vadd.f32 %v2989, %v2990
    %v2992 = vrot.slane %v2991, 4
    %v2993 = vadd.f32 %v2991, %v2992
    %v2994 = vrot.slane %v2993, 2
    %v2995 = vadd.f32 %v2993, %v2994
    %v2996 = vrot.slane %v2995, 1
    %v2997 = vadd.f32 %v2995, %v2996
    %v2998 = vsel %vm1210, %v2925, 0.0
    %v2999 = vsel %vm1210, %v2927, 0.0
    %v3000 = vadd.f32 %v2998, %v2999
    %v3001 = vrot.slane %v3000, 4
    %v3002 = vadd.f32 %v3000, %v3001
    %v3003 = vrot.slane %v3002, 2
    %v3004 = vadd.f32 %v3002, %v3003
    %v3005 = vrot.slane %v3004, 1
    %v3006 = vadd.f32 %v3004, %v3005
    %v3007 = vsel %vm1210, %v2929, 0.0
    %v3008 = vsel %vm1210, %v2931, 0.0
    %v3009 = vadd.f32 %v3007, %v3008
    %v3010 = vrot.slane %v3009, 4
    %v3011 = vadd.f32 %v3009, %v3010
    %v3012 = vrot.slane %v3011, 2
    %v3013 = vadd.f32 %v3011, %v3012
    %v3014 = vrot.slane %v3013, 1
    %v3015 = vadd.f32 %v3013, %v3014
    %v3016 = vsel %vm1210, %v2933, 0.0
    %v3017 = vsel %vm1210, %v2935, 0.0
    %v3018 = vadd.f32 %v3016, %v3017
    %v3019 = vrot.slane %v3018, 4
    %v3020 = vadd.f32 %v3018, %v3019
    %v3021 = vrot.slane %v3020, 2
    %v3022 = vadd.f32 %v3020, %v3021
    %v3023 = vrot.slane %v3022, 1
    %v3024 = vadd.f32 %v3022, %v3023
    %v3025 = vsel %vm1210, %v2937, 0.0
    %v3026 = vsel %vm1210, %v2939, 0.0
    %v3027 = vadd.f32 %v3025, %v3026
    %v3028 = vrot.slane %v3027, 4
    %v3029 = vadd.f32 %v3027, %v3028
    %v3030 = vrot.slane %v3029, 2
    %v3031 = vadd.f32 %v3029, %v3030
    %v3032 = vrot.slane %v3031, 1
    %v3033 = vadd.f32 %v3031, %v3032
    %v3034 = vsel %vm1210, %v2941, 0.0
    %v3035 = vsel %vm1210, %v2943, 0.0
    %v3036 = vadd.f32 %v3034, %v3035
    %v3037 = vrot.slane %v3036, 4
    %v3038 = vadd.f32 %v3036, %v3037
    %v3039 = vrot.slane %v3038, 2
    %v3040 = vadd.f32 %v3038, %v3039
    %v3041 = vrot.slane %v3040, 1
    %v3042 = vadd.f32 %v3040, %v3041
    %v3043 = vsel %vm1210, %v2945, 0.0
    %v3044 = vsel %vm1210, %v2947, 0.0
    %v3045 = vadd.f32 %v3043, %v3044
    %v3046 = vrot.slane %v3045, 4
    %v3047 = vadd.f32 %v3045, %v3046
    %v3048 = vrot.slane %v3047, 2
    %v3049 = vadd.f32 %v3047, %v3048
    %v3050 = vrot.slane %v3049, 1
    %v3051 = vadd.f32 %v3049, %v3050
    %v3052 = vsel %vm1210, %v2949, 0.0
    %v3053 = vsel %vm1210, %v2951, 0.0
    %v3054 = vadd.f32 %v3052, %v3053
    %v3055 = vrot.slane %v3054, 4
    %v3056 = vadd.f32 %v3054, %v3055
    %v3057 = vrot.slane %v3056, 2
    %v3058 = vadd.f32 %v3056, %v3057
    %v3059 = vrot.slane %v3058, 1
    %v3060 = vadd.f32 %v3058, %v3059
    %v3061 = vsel %vm1210, %v2953, 0.0
    %v3062 = vsel %vm1210, %v2955, 0.0
    %v3063 = vadd.f32 %v3061, %v3062
    %v3064 = vrot.slane %v3063, 4
    %v3065 = vadd.f32 %v3063, %v3064
    %v3066 = vrot.slane %v3065, 2
    %v3067 = vadd.f32 %v3065, %v3066
    %v3068 = vrot.slane %v3067, 1
    %v3069 = vadd.f32 %v3067, %v3068
    %v3070 = vsel %vm1210, %v2957, 0.0
    %v3071 = vsel %vm1210, %v2959, 0.0
    %v3072 = vadd.f32 %v3070, %v3071
    %v3073 = vrot.slane %v3072, 4
    %v3074 = vadd.f32 %v3072, %v3073
    %v3075 = vrot.slane %v3074, 2
    %v3076 = vadd.f32 %v3074, %v3075
    %v3077 = vrot.slane %v3076, 1
    %v3078 = vadd.f32 %v3076, %v3077
    %v3079 = vsel %vm1210, %v2961, 0.0
    %v3080 = vsel %vm1210, %v2963, 0.0
    %v3081 = vadd.f32 %v3079, %v3080
    %v3082 = vrot.slane %v3081, 4
    %v3083 = vadd.f32 %v3081, %v3082
    %v3084 = vrot.slane %v3083, 2
    %v3085 = vadd.f32 %v3083, %v3084
    %v3086 = vrot.slane %v3085, 1
    %v3087 = vadd.f32 %v3085, %v3086
    %v3088 = vsel %vm1210, %v2965, 0.0
    %v3089 = vsel %vm1210, %v2967, 0.0
    %v3090 = vadd.f32 %v3088, %v3089
    %v3091 = vrot.slane %v3090, 4
    %v3092 = vadd.f32 %v3090, %v3091
    %v3093 = vrot.slane %v3092, 2
    %v3094 = vadd.f32 %v3092, %v3093
    %v3095 = vrot.slane %v3094, 1
    %v3096 = vadd.f32 %v3094, %v3095
    %v3097 = vsel %vm1210, %v2969, 0.0
    %v3098 = vsel %vm1210, %v2971, 0.0
    %v3099 = vadd.f32 %v3097, %v3098
    %v3100 = vrot.slane %v3099, 4
    %v3101 = vadd.f32 %v3099, %v3100
    %v3102 = vrot.slane %v3101, 2
    %v3103 = vadd.f32 %v3101, %v3102
    %v3104 = vrot.slane %v3103, 1
    %v3105 = vadd.f32 %v3103, %v3104
    %v3106 = vsel %vm1210, %v2973, 0.0
    %v3107 = vsel %vm1210, %v2975, 0.0
    %v3108 = vadd.f32 %v3106, %v3107
    %v3109 = vrot.slane %v3108, 4
    %v3110 = vadd.f32 %v3108, %v3109
    %v3111 = vrot.slane %v3110, 2
    %v3112 = vadd.f32 %v3110, %v3111
    %v3113 = vrot.slane %v3112, 1
    %v3114 = vadd.f32 %v3112, %v3113
    %v3115 = vsel %vm1210, %v2977, 0.0
    %v3116 = vsel %vm1210, %v2979, 0.0
    %v3117 = vadd.f32 %v3115, %v3116
    %v3118 = vrot.slane %v3117, 4
    %v3119 = vadd.f32 %v3117, %v3118
    %v3120 = vrot.slane %v3119, 2
    %v3121 = vadd.f32 %v3119, %v3120
    %v3122 = vrot.slane %v3121, 1
    %v3123 = vadd.f32 %v3121, %v3122
    %v3124 = vrcp.pop %v2988
    %v3125 = vrcp.pop %v2997
    %v3126 = vrcp.pop %v3006
    %v3127 = vrcp.pop %v3015
    %v3128 = vrcp.pop %v3024
    %v3129 = vrcp.pop %v3033
    %v3130 = vrcp.pop %v3042
    %v3131 = vrcp.pop %v3051
    %v3132 = vrcp.pop %v3060
    %v3133 = vrcp.pop %v3069
    %v3134 = vrcp.pop %v3078
    %v3135 = vrcp.pop %v3087
    %v3136 = vrcp.pop %v3096
    %v3137 = vrcp.pop %v3105
    %v3138 = vrcp.pop %v3114
    %v3139 = vrcp.pop %v3123
    %v3140 = vmul.f32 %v2917, %v3124
    %v3141 = vmul.f32 %v2919, %v3124
    %v3142 = vmul.f32 %v2921, %v3125
    %v3143 = vmul.f32 %v2923, %v3125
    %v3144 = vmul.f32 %v2925, %v3126
    %v3145 = vmul.f32 %v2927, %v3126
    %v3146 = vmul.f32 %v2929, %v3127
    %v3147 = vmul.f32 %v2931, %v3127
    %v3148 = vmul.f32 %v2933, %v3128
    %v3149 = vmul.f32 %v2935, %v3128
    %v3150 = vmul.f32 %v2937, %v3129
    %v3151 = vmul.f32 %v2939, %v3129
    %v3152 = vmul.f32 %v2941, %v3130
    %v3153 = vmul.f32 %v2943, %v3130
    %v3154 = vmul.f32 %v2945, %v3131
    %v3155 = vmul.f32 %v2947, %v3131
    %v3156 = vmul.f32 %v2949, %v3132
    %v3157 = vmul.f32 %v2951, %v3132
    %v3158 = vmul.f32 %v2953, %v3133
    %v3159 = vmul.f32 %v2955, %v3133
    %v3160 = vmul.f32 %v2957, %v3134
    %v3161 = vmul.f32 %v2959, %v3134
    %v3162 = vmul.f32 %v2961, %v3135
    %v3163 = vmul.f32 %v2963, %v3135
    %v3164 = vmul.f32 %v2965, %v3136
    %v3165 = vmul.f32 %v2967, %v3136
    %v3166 = vmul.f32 %v2969, %v3137
    %v3167 = vmul.f32 %v2971, %v3137
    %v3168 = vmul.f32 %v2973, %v3138
    %v3169 = vmul.f32 %v2975, %v3138
    %v3170 = vmul.f32 %v2977, %v3139
    %v3171 = vmul.f32 %v2979, %v3139
    %v3173 = vsel %vm1210, %v3140, 0
    %v3176 = vsel %vm1210, %v3141, 0
    %v3179 = vsel %vm1210, %v3142, 0
    %v3182 = vsel %vm1210, %v3143, 0
    %v3185 = vsel %vm1210, %v3144, 0
    %v3188 = vsel %vm1210, %v3145, 0
    %v3191 = vsel %vm1210, %v3146, 0
    %v3194 = vsel %vm1210, %v3147, 0
    %v3197 = vsel %vm1210, %v3148, 0
    %v3200 = vsel %vm1210, %v3149, 0
    %v3203 = vsel %vm1210, %v3150, 0
    %v3206 = vsel %vm1210, %v3151, 0
    %v3209 = vsel %vm1210, %v3152, 0
    %v3212 = vsel %vm1210, %v3153, 0
    %v3215 = vsel %vm1210, %v3154, 0
    %v3218 = vsel %vm1210, %v3155, 0
    %v3221 = vsel %vm1210, %v3156, 0
    %v3224 = vsel %vm1210, %v3157, 0
    %v3227 = vsel %vm1210, %v3158, 0
    %v3230 = vsel %vm1210, %v3159, 0
    %v3233 = vsel %vm1210, %v3160, 0
    %v3236 = vsel %vm1210, %v3161, 0
    %v3239 = vsel %vm1210, %v3162, 0
    %v3242 = vsel %vm1210, %v3163, 0
    %v3245 = vsel %vm1210, %v3164, 0
    %v3248 = vsel %vm1210, %v3165, 0
    %v3251 = vsel %vm1210, %v3166, 0
    %v3254 = vsel %vm1210, %v3167, 0
    %v3257 = vsel %vm1210, %v3168, 0
    %v3260 = vsel %vm1210, %v3169, 0
    %v3263 = vsel %vm1210, %v3170, 0
    %v3266 = vsel %vm1210, %v3171, 0
    %3268 = vmatpush.msra.mxu0 0.0
    %3269 = vmatpush.msra.mxu0 0.0
    %3270 = vmatpush.msra.mxu0 0.0
    %3271 = vmatpush.msra.mxu0 0.0
    %3272 = vmatpush.msra.mxu0 0.0
    %3273 = vmatpush.msra.mxu0 0.0
    %3274 = vmatpush.msra.mxu0 0.0
    %3275 = vmatpush.msra.mxu0 0.0
    %3276 = vmatpush.msra.mxu0 0.0
    %3277 = vmatpush.msra.mxu0 0.0
    %3278 = vmatpush.msra.mxu0 0.0
    %3279 = vmatpush.msra.mxu0 0.0
    %3280 = vmatpush.msra.mxu0 0.0
    %3281 = vmatpush.msra.mxu0 0.0
    %3282 = vmatpush.msra.mxu0 0.0
    %3283 = vmatpush.msra.mxu0 %v1741
    %3284 = vmatmul.f32.gmra.mxu0 %v3173
    %v3285 = vpop.f32.mrf.mxu0
    %v3286 = vadd.f32 0.0, %v3285
    %3287 = vmatmul.f32.gmra.mxu0 %v3176
    %v3288 = vpop.f32.mrf.mxu0
    %v3289 = vadd.f32 0.0, %v3288
    %3290 = vmatmul.f32.gmra.mxu0 %v3179
    %v3291 = vpop.f32.mrf.mxu0
    %v3292 = vadd.f32 0.0, %v3291
    %3293 = vmatmul.f32.gmra.mxu0 %v3182
    %v3294 = vpop.f32.mrf.mxu0
    %v3295 = vadd.f32 0.0, %v3294
    %3296 = vmatmul.f32.gmra.mxu0 %v3185
    %v3297 = vpop.f32.mrf.mxu0
    %v3298 = vadd.f32 0.0, %v3297
    %3299 = vmatmul.f32.gmra.mxu0 %v3188
    %v3300 = vpop.f32.mrf.mxu0
    %v3301 = vadd.f32 0.0, %v3300
    %3302 = vmatmul.f32.gmra.mxu0 %v3191
    %v3303 = vpop.f32.mrf.mxu0
    %v3304 = vadd.f32 0.0, %v3303
    %3305 = vmatmul.f32.gmra.mxu0 %v3194
    %v3306 = vpop.f32.mrf.mxu0
    %v3307 = vadd.f32 0.0, %v3306
    %3308 = vmatmul.f32.gmra.mxu0 %v3197
    %v3309 = vpop.f32.mrf.mxu0
    %v3310 = vadd.f32 0.0, %v3309
    %3311 = vmatmul.f32.gmra.mxu0 %v3200
    %v3312 = vpop.f32.mrf.mxu0
    %v3313 = vadd.f32 0.0, %v3312
    %3314 = vmatmul.f32.gmra.mxu0 %v3203
    %v3315 = vpop.f32.mrf.mxu0
    %v3316 = vadd.f32 0.0, %v3315
    %3317 = vmatmul.f32.gmra.mxu0 %v3206
    %v3318 = vpop.f32.mrf.mxu0
    %v3319 = vadd.f32 0.0, %v3318
    %3320 = vmatmul.f32.gmra.mxu0 %v3209
    %v3321 = vpop.f32.mrf.mxu0
    %v3322 = vadd.f32 0.0, %v3321
    %3323 = vmatmul.f32.gmra.mxu0 %v3212
    %v3324 = vpop.f32.mrf.mxu0
    %v3325 = vadd.f32 0.0, %v3324
    %3326 = vmatmul.f32.gmra.mxu0 %v3215
    %v3327 = vpop.f32.mrf.mxu0
    %v3328 = vadd.f32 0.0, %v3327
    %3329 = vmatmul.f32.gmra.mxu0 %v3218
    %v3330 = vpop.f32.mrf.mxu0
    %v3331 = vadd.f32 0.0, %v3330
    %3332 = vmatmul.f32.gmra.mxu0 %v3221
    %v3333 = vpop.f32.mrf.mxu0
    %v3334 = vadd.f32 0.0, %v3333
    %3335 = vmatmul.f32.gmra.mxu0 %v3224
    %v3336 = vpop.f32.mrf.mxu0
    %v3337 = vadd.f32 0.0, %v3336
    %3338 = vmatmul.f32.gmra.mxu0 %v3227
    %v3339 = vpop.f32.mrf.mxu0
    %v3340 = vadd.f32 0.0, %v3339
    %3341 = vmatmul.f32.gmra.mxu0 %v3230
    %v3342 = vpop.f32.mrf.mxu0
    %v3343 = vadd.f32 0.0, %v3342
    %3344 = vmatmul.f32.gmra.mxu0 %v3233
    %v3345 = vpop.f32.mrf.mxu0
    %v3346 = vadd.f32 0.0, %v3345
    %3347 = vmatmul.f32.gmra.mxu0 %v3236
    %v3348 = vpop.f32.mrf.mxu0
    %v3349 = vadd.f32 0.0, %v3348
    %3350 = vmatmul.f32.gmra.mxu0 %v3239
    %v3351 = vpop.f32.mrf.mxu0
    %v3352 = vadd.f32 0.0, %v3351
    %3353 = vmatmul.f32.gmra.mxu0 %v3242
    %v3354 = vpop.f32.mrf.mxu0
    %v3355 = vadd.f32 0.0, %v3354
    %3356 = vmatmul.f32.gmra.mxu0 %v3245
    %v3357 = vpop.f32.mrf.mxu0
    %v3358 = vadd.f32 0.0, %v3357
    %3359 = vmatmul.f32.gmra.mxu0 %v3248
    %v3360 = vpop.f32.mrf.mxu0
    %v3361 = vadd.f32 0.0, %v3360
    %3362 = vmatmul.f32.gmra.mxu0 %v3251
    %v3363 = vpop.f32.mrf.mxu0
    %v3364 = vadd.f32 0.0, %v3363
    %3365 = vmatmul.f32.gmra.mxu0 %v3254
    %v3366 = vpop.f32.mrf.mxu0
    %v3367 = vadd.f32 0.0, %v3366
    %3368 = vmatmul.f32.gmra.mxu0 %v3257
    %v3369 = vpop.f32.mrf.mxu0
    %v3370 = vadd.f32 0.0, %v3369
    %3371 = vmatmul.f32.gmra.mxu0 %v3260
    %v3372 = vpop.f32.mrf.mxu0
    %v3373 = vadd.f32 0.0, %v3372
    %3374 = vmatmul.f32.gmra.mxu0 %v3263
    %v3375 = vpop.f32.mrf.mxu0
    %v3376 = vadd.f32 0.0, %v3375
    %3377 = vmatmul.f32.gmra.mxu0 %v3266
    %v3378 = vpop.f32.mrf.mxu0
    %v3379 = vadd.f32 0.0, %v3378
    %3380 = vdwg.mxu0
    %v3381 = vmul.f32 %v3286, %v2279
    %v3382 = vmul.f32 %v3289, %v2282
    %v3383 = vmul.f32 %v3292, %v2279
    %v3384 = vmul.f32 %v3295, %v2282
    %v3385 = vmul.f32 %v3298, %v2279
    %v3386 = vmul.f32 %v3301, %v2282
    %v3387 = vmul.f32 %v3304, %v2279
    %v3388 = vmul.f32 %v3307, %v2282
    %v3389 = vmul.f32 %v3310, %v2279
    %v3390 = vmul.f32 %v3313, %v2282
    %v3391 = vmul.f32 %v3316, %v2279
    %v3392 = vmul.f32 %v3319, %v2282
    %v3393 = vmul.f32 %v3322, %v2279
    %v3394 = vmul.f32 %v3325, %v2282
    %v3395 = vmul.f32 %v3328, %v2279
    %v3396 = vmul.f32 %v3331, %v2282
    %v3397 = vmul.f32 %v3334, %v2279
    %v3398 = vmul.f32 %v3337, %v2282
    %v3399 = vmul.f32 %v3340, %v2279
    %v3400 = vmul.f32 %v3343, %v2282
    %v3401 = vmul.f32 %v3346, %v2279
    %v3402 = vmul.f32 %v3349, %v2282
    %v3403 = vmul.f32 %v3352, %v2279
    %v3404 = vmul.f32 %v3355, %v2282
    %v3405 = vmul.f32 %v3358, %v2279
    %v3406 = vmul.f32 %v3361, %v2282
    %v3407 = vmul.f32 %v3364, %v2279
    %v3408 = vmul.f32 %v3367, %v2282
    %v3409 = vmul.f32 %v3370, %v2279
    %v3410 = vmul.f32 %v3373, %v2282
    %v3411 = vmul.f32 %v3376, %v2279
    %v3412 = vmul.f32 %v3379, %v2282
    %v3413 = vsel %vm880, %v3381, 0.0
    %v3414 = vsel %vm880, %v3382, 0.0
    %v3415 = vadd.f32 %v3413, %v3414
    %v3416 = vrot.slane %v3415, 4
    %v3417 = vadd.f32 %v3415, %v3416
    %v3418 = vrot.slane %v3417, 2
    %v3419 = vadd.f32 %v3417, %v3418
    %v3420 = vrot.slane %v3419, 1
    %v3421 = vadd.f32 %v3419, %v3420
    %v3422 = vsel %vm880, %v3383, 0.0
    %v3423 = vsel %vm880, %v3384, 0.0
    %v3424 = vadd.f32 %v3422, %v3423
    %v3425 = vrot.slane %v3424, 4
    %v3426 = vadd.f32 %v3424, %v3425
    %v3427 = vrot.slane %v3426, 2
    %v3428 = vadd.f32 %v3426, %v3427
    %v3429 = vrot.slane %v3428, 1
    %v3430 = vadd.f32 %v3428, %v3429
    %v3431 = vsel %vm880, %v3385, 0.0
    %v3432 = vsel %vm880, %v3386, 0.0
    %v3433 = vadd.f32 %v3431, %v3432
    %v3434 = vrot.slane %v3433, 4
    %v3435 = vadd.f32 %v3433, %v3434
    %v3436 = vrot.slane %v3435, 2
    %v3437 = vadd.f32 %v3435, %v3436
    %v3438 = vrot.slane %v3437, 1
    %v3439 = vadd.f32 %v3437, %v3438
    %v3440 = vsel %vm880, %v3387, 0.0
    %v3441 = vsel %vm880, %v3388, 0.0
    %v3442 = vadd.f32 %v3440, %v3441
    %v3443 = vrot.slane %v3442, 4
    %v3444 = vadd.f32 %v3442, %v3443
    %v3445 = vrot.slane %v3444, 2
    %v3446 = vadd.f32 %v3444, %v3445
    %v3447 = vrot.slane %v3446, 1
    %v3448 = vadd.f32 %v3446, %v3447
    %v3449 = vsel %vm880, %v3389, 0.0
    %v3450 = vsel %vm880, %v3390, 0.0
    %v3451 = vadd.f32 %v3449, %v3450
    %v3452 = vrot.slane %v3451, 4
    %v3453 = vadd.f32 %v3451, %v3452
    %v3454 = vrot.slane %v3453, 2
    %v3455 = vadd.f32 %v3453, %v3454
    %v3456 = vrot.slane %v3455, 1
    %v3457 = vadd.f32 %v3455, %v3456
    %v3458 = vsel %vm880, %v3391, 0.0
    %v3459 = vsel %vm880, %v3392, 0.0
    %v3460 = vadd.f32 %v3458, %v3459
    %v3461 = vrot.slane %v3460, 4
    %v3462 = vadd.f32 %v3460, %v3461
    %v3463 = vrot.slane %v3462, 2
    %v3464 = vadd.f32 %v3462, %v3463
    %v3465 = vrot.slane %v3464, 1
    %v3466 = vadd.f32 %v3464, %v3465
    %v3467 = vsel %vm880, %v3393, 0.0
    %v3468 = vsel %vm880, %v3394, 0.0
    %v3469 = vadd.f32 %v3467, %v3468
    %v3470 = vrot.slane %v3469, 4
    %v3471 = vadd.f32 %v3469, %v3470
    %v3472 = vrot.slane %v3471, 2
    %v3473 = vadd.f32 %v3471, %v3472
    %v3474 = vrot.slane %v3473, 1
    %v3475 = vadd.f32 %v3473, %v3474
    %v3476 = vsel %vm880, %v3395, 0.0
    %v3477 = vsel %vm880, %v3396, 0.0
    %v3478 = vadd.f32 %v3476, %v3477
    %v3479 = vrot.slane %v3478, 4
    %v3480 = vadd.f32 %v3478, %v3479
    %v3481 = vrot.slane %v3480, 2
    %v3482 = vadd.f32 %v3480, %v3481
    %v3483 = vrot.slane %v3482, 1
    %v3484 = vadd.f32 %v3482, %v3483
    %v3485 = vsel %vm880, %v3397, 0.0
    %v3486 = vsel %vm880, %v3398, 0.0
    %v3487 = vadd.f32 %v3485, %v3486
    %v3488 = vrot.slane %v3487, 4
    %v3489 = vadd.f32 %v3487, %v3488
    %v3490 = vrot.slane %v3489, 2
    %v3491 = vadd.f32 %v3489, %v3490
    %v3492 = vrot.slane %v3491, 1
    %v3493 = vadd.f32 %v3491, %v3492
    %v3494 = vsel %vm880, %v3399, 0.0
    %v3495 = vsel %vm880, %v3400, 0.0
    %v3496 = vadd.f32 %v3494, %v3495
    %v3497 = vrot.slane %v3496, 4
    %v3498 = vadd.f32 %v3496, %v3497
    %v3499 = vrot.slane %v3498, 2
    %v3500 = vadd.f32 %v3498, %v3499
    %v3501 = vrot.slane %v3500, 1
    %v3502 = vadd.f32 %v3500, %v3501
    %v3503 = vsel %vm880, %v3401, 0.0
    %v3504 = vsel %vm880, %v3402, 0.0
    %v3505 = vadd.f32 %v3503, %v3504
    %v3506 = vrot.slane %v3505, 4
    %v3507 = vadd.f32 %v3505, %v3506
    %v3508 = vrot.slane %v3507, 2
    %v3509 = vadd.f32 %v3507, %v3508
    %v3510 = vrot.slane %v3509, 1
    %v3511 = vadd.f32 %v3509, %v3510
    %v3512 = vsel %vm880, %v3403, 0.0
    %v3513 = vsel %vm880, %v3404, 0.0
    %v3514 = vadd.f32 %v3512, %v3513
    %v3515 = vrot.slane %v3514, 4
    %v3516 = vadd.f32 %v3514, %v3515
    %v3517 = vrot.slane %v3516, 2
    %v3518 = vadd.f32 %v3516, %v3517
    %v3519 = vrot.slane %v3518, 1
    %v3520 = vadd.f32 %v3518, %v3519
    %v3521 = vsel %vm880, %v3405, 0.0
    %v3522 = vsel %vm880, %v3406, 0.0
    %v3523 = vadd.f32 %v3521, %v3522
    %v3524 = vrot.slane %v3523, 4
    %v3525 = vadd.f32 %v3523, %v3524
    %v3526 = vrot.slane %v3525, 2
    %v3527 = vadd.f32 %v3525, %v3526
    %v3528 = vrot.slane %v3527, 1
    %v3529 = vadd.f32 %v3527, %v3528
    %v3530 = vsel %vm880, %v3407, 0.0
    %v3531 = vsel %vm880, %v3408, 0.0
    %v3532 = vadd.f32 %v3530, %v3531
    %v3533 = vrot.slane %v3532, 4
    %v3534 = vadd.f32 %v3532, %v3533
    %v3535 = vrot.slane %v3534, 2
    %v3536 = vadd.f32 %v3534, %v3535
    %v3537 = vrot.slane %v3536, 1
    %v3538 = vadd.f32 %v3536, %v3537
    %v3539 = vsel %vm880, %v3409, 0.0
    %v3540 = vsel %vm880, %v3410, 0.0
    %v3541 = vadd.f32 %v3539, %v3540
    %v3542 = vrot.slane %v3541, 4
    %v3543 = vadd.f32 %v3541, %v3542
    %v3544 = vrot.slane %v3543, 2
    %v3545 = vadd.f32 %v3543, %v3544
    %v3546 = vrot.slane %v3545, 1
    %v3547 = vadd.f32 %v3545, %v3546
    %v3548 = vsel %vm880, %v3411, 0.0
    %v3549 = vsel %vm880, %v3412, 0.0
    %v3550 = vadd.f32 %v3548, %v3549
    %v3551 = vrot.slane %v3550, 4
    %v3552 = vadd.f32 %v3550, %v3551
    %v3553 = vrot.slane %v3552, 2
    %v3554 = vadd.f32 %v3552, %v3553
    %v3555 = vrot.slane %v3554, 1
    %v3556 = vadd.f32 %v3554, %v3555
    %v3558 = vperm.slane %v2200, 0
    %v3560 = vadd.f32 %v3421, %v3558
    %v3561 = vadd.f32 %v3430, %v3558
    %v3562 = vadd.f32 %v3439, %v3558
    %v3563 = vadd.f32 %v3448, %v3558
    %v3564 = vadd.f32 %v3457, %v3558
    %v3565 = vadd.f32 %v3466, %v3558
    %v3566 = vadd.f32 %v3475, %v3558
    %v3567 = vadd.f32 %v3484, %v3558
    %v3568 = vadd.f32 %v3493, %v3558
    %v3569 = vadd.f32 %v3502, %v3558
    %v3570 = vadd.f32 %v3511, %v3558
    %v3571 = vadd.f32 %v3520, %v3558
    %v3572 = vadd.f32 %v3529, %v3558
    %v3573 = vadd.f32 %v3538, %v3558
    %v3574 = vadd.f32 %v3547, %v3558
    %v3575 = vadd.f32 %v3556, %v3558
    %v3577 = vperm.slane %v2201, 0
    %v3579 = vmul.f32 %v3560, %v3577
    %v3580 = vmul.f32 %v3561, %v3577
    %v3581 = vmul.f32 %v3562, %v3577
    %v3582 = vmul.f32 %v3563, %v3577
    %v3583 = vmul.f32 %v3564, %v3577
    %v3584 = vmul.f32 %v3565, %v3577
    %v3585 = vmul.f32 %v3566, %v3577
    %v3586 = vmul.f32 %v3567, %v3577
    %v3587 = vmul.f32 %v3568, %v3577
    %v3588 = vmul.f32 %v3569, %v3577
    %v3589 = vmul.f32 %v3570, %v3577
    %v3590 = vmul.f32 %v3571, %v3577
    %v3591 = vmul.f32 %v3572, %v3577
    %v3592 = vmul.f32 %v3573, %v3577
    %v3593 = vmul.f32 %v3574, %v3577
    %v3594 = vmul.f32 %v3575, %v3577
    %v3596 = vperm.slane %v2202, 0
    %v3598 = vadd.f32 %v3579, %v3596
    %v3599 = vadd.f32 %v3580, %v3596
    %v3600 = vadd.f32 %v3581, %v3596
    %v3601 = vadd.f32 %v3582, %v3596
    %v3602 = vadd.f32 %v3583, %v3596
    %v3603 = vadd.f32 %v3584, %v3596
    %v3604 = vadd.f32 %v3585, %v3596
    %v3605 = vadd.f32 %v3586, %v3596
    %v3606 = vadd.f32 %v3587, %v3596
    %v3607 = vadd.f32 %v3588, %v3596
    %v3608 = vadd.f32 %v3589, %v3596
    %v3609 = vadd.f32 %v3590, %v3596
    %v3610 = vadd.f32 %v3591, %v3596
    %v3611 = vadd.f32 %v3592, %v3596
    %v3612 = vadd.f32 %v3593, %v3596
    %v3613 = vadd.f32 %v3594, %v3596
    %vm3614 = vcmp.gt.f32.partialorder %v3598, 0.0
    %vm3615 = vcmp.gt.f32.partialorder %v3599, 0.0
    %vm3616 = vcmp.gt.f32.partialorder %v3600, 0.0
    %vm3617 = vcmp.gt.f32.partialorder %v3601, 0.0
    %vm3618 = vcmp.gt.f32.partialorder %v3602, 0.0
    %vm3619 = vcmp.gt.f32.partialorder %v3603, 0.0
    %vm3620 = vcmp.gt.f32.partialorder %v3604, 0.0
    %vm3621 = vcmp.gt.f32.partialorder %v3605, 0.0
    %vm3622 = vcmp.gt.f32.partialorder %v3606, 0.0
    %vm3623 = vcmp.gt.f32.partialorder %v3607, 0.0
    %vm3624 = vcmp.gt.f32.partialorder %v3608, 0.0
    %vm3625 = vcmp.gt.f32.partialorder %v3609, 0.0
    %vm3626 = vcmp.gt.f32.partialorder %v3610, 0.0
    %vm3627 = vcmp.gt.f32.partialorder %v3611, 0.0
    %vm3628 = vcmp.gt.f32.partialorder %v3612, 0.0
    %vm3629 = vcmp.gt.f32.partialorder %v3613, 0.0
    %v3630 = vmin.f32 %v3598, 0.0
    %v3631 = vmin.f32 %v3599, 0.0
    %v3632 = vmin.f32 %v3600, 0.0
    %v3633 = vmin.f32 %v3601, 0.0
    %v3634 = vmin.f32 %v3602, 0.0
    %v3635 = vmin.f32 %v3603, 0.0
    %v3636 = vmin.f32 %v3604, 0.0
    %v3637 = vmin.f32 %v3605, 0.0
    %v3638 = vmin.f32 %v3606, 0.0
    %v3639 = vmin.f32 %v3607, 0.0
    %v3640 = vmin.f32 %v3608, 0.0
    %v3641 = vmin.f32 %v3609, 0.0
    %v3642 = vmin.f32 %v3610, 0.0
    %v3643 = vmin.f32 %v3611, 0.0
    %v3644 = vmin.f32 %v3612, 0.0
    %v3645 = vmin.f32 %v3613, 0.0
    %v3646 = vmul.f32 %v3630, 1.442695
    %v3647 = vpow.pop %v3646
    %v3648 = vmul.f32 %v3631, 1.442695
    %v3649 = vpow.pop %v3648
    %v3650 = vmul.f32 %v3632, 1.442695
    %v3651 = vpow.pop %v3650
    %v3652 = vmul.f32 %v3633, 1.442695
    %v3653 = vpow.pop %v3652
    %v3654 = vmul.f32 %v3634, 1.442695
    %v3655 = vpow.pop %v3654
    %v3656 = vmul.f32 %v3635, 1.442695
    %v3657 = vpow.pop %v3656
    %v3658 = vmul.f32 %v3636, 1.442695
    %v3659 = vpow.pop %v3658
    %v3660 = vmul.f32 %v3637, 1.442695
    %v3661 = vpow.pop %v3660
    %v3662 = vmul.f32 %v3638, 1.442695
    %v3663 = vpow.pop %v3662
    %v3664 = vmul.f32 %v3639, 1.442695
    %v3665 = vpow.pop %v3664
    %v3666 = vmul.f32 %v3640, 1.442695
    %v3667 = vpow.pop %v3666
    %v3668 = vmul.f32 %v3641, 1.442695
    %v3669 = vpow.pop %v3668
    %v3670 = vmul.f32 %v3642, 1.442695
    %v3671 = vpow.pop %v3670
    %v3672 = vmul.f32 %v3643, 1.442695
    %v3673 = vpow.pop %v3672
    %v3674 = vmul.f32 %v3644, 1.442695
    %v3675 = vpow.pop %v3674
    %v3676 = vmul.f32 %v3645, 1.442695
    %v3677 = vpow.pop %v3676
    %v3678 = vsub.f32 %v3647, 1.0
    %v3679 = vsub.f32 %v3649, 1.0
    %v3680 = vsub.f32 %v3651, 1.0
    %v3681 = vsub.f32 %v3653, 1.0
    %v3682 = vsub.f32 %v3655, 1.0
    %v3683 = vsub.f32 %v3657, 1.0
    %v3684 = vsub.f32 %v3659, 1.0
    %v3685 = vsub.f32 %v3661, 1.0
    %v3686 = vsub.f32 %v3663, 1.0
    %v3687 = vsub.f32 %v3665, 1.0
    %v3688 = vsub.f32 %v3667, 1.0
    %v3689 = vsub.f32 %v3669, 1.0
    %v3690 = vsub.f32 %v3671, 1.0
    %v3691 = vsub.f32 %v3673, 1.0
    %v3692 = vsub.f32 %v3675, 1.0
    %v3693 = vsub.f32 %v3677, 1.0
    %v3694 = vsel %vm3614, %v3598, %v3678
    %v3695 = vsel %vm3615, %v3599, %v3679
    %v3696 = vsel %vm3616, %v3600, %v3680
    %v3697 = vsel %vm3617, %v3601, %v3681
    %v3698 = vsel %vm3618, %v3602, %v3682
    %v3699 = vsel %vm3619, %v3603, %v3683
    %v3700 = vsel %vm3620, %v3604, %v3684
    %v3701 = vsel %vm3621, %v3605, %v3685
    %v3702 = vsel %vm3622, %v3606, %v3686
    %v3703 = vsel %vm3623, %v3607, %v3687
    %v3704 = vsel %vm3624, %v3608, %v3688
    %v3705 = vsel %vm3625, %v3609, %v3689
    %v3706 = vsel %vm3626, %v3610, %v3690
    %v3707 = vsel %vm3627, %v3611, %v3691
    %v3708 = vsel %vm3628, %v3612, %v3692
    %v3709 = vsel %vm3629, %v3613, %v3693
    %v3710 = vld [vmem:[%s51] sm:$0xff]
    %v3711 = vld [vmem:[%s51 + $0x8] sm:$0xff]
    %v3712 = vld [vmem:[%s51 + $0x10] sm:$0xff]
    %v3713 = vld [vmem:[%s51 + $0x18] sm:$0xff]
    %v3714 = vld [vmem:[%s53] sm:$0x1]
    %v3715 = vld [vmem:[%s55] sm:$0xff]
    %v3716 = vld [vmem:[%s55 + $0x8] sm:$0xff]
    %v3717 = vld [vmem:[%s55 + $0x10] sm:$0xff]
    %v3718 = vld [vmem:[%s55 + $0x18] sm:$0xff]
    %v3719 = vld [vmem:[%s57] sm:$0x1]
    %v3720 = vld [vmem:[%s59] sm:$0x1]
    %v3721 = vld [vmem:[%s61] sm:$0xff]
    %v3722 = vld [vmem:[%s61 + $0x8] sm:$0xff]
    %v3723 = vld [vmem:[%s61 + $0x10] sm:$0xff]
    %v3724 = vld [vmem:[%s61 + $0x18] sm:$0xff]
    %v3725 = vld [vmem:[%s63] sm:$0x1]
    %v3726 = vld [vmem:[%s65] sm:$0x1]
    %v3727 = vld [vmem:[%s67] sm:$0x1]
    %v3729 = vperm.slane %v3714, 0
    %v3747 = vrot.slane %v3695, 7
    %v3748 = vsel %vm2223, %v3747, %v3694
    %v3749 = vrot.slane %v3696, 6
    %v3750 = vsel %vm2226, %v3749, %v3748
    %v3751 = vrot.slane %v3697, 5
    %v3752 = vsel %vm2229, %v3751, %v3750
    %v3753 = vrot.slane %v3698, 4
    %v3754 = vsel %vm2232, %v3753, %v3752
    %v3755 = vrot.slane %v3699, 3
    %v3756 = vsel %vm2235, %v3755, %v3754
    %v3757 = vrot.slane %v3700, 2
    %v3758 = vsel %vm2238, %v3757, %v3756
    %v3759 = vrot.slane %v3701, 1
    %v3760 = vsel %vm2241, %v3759, %v3758
    %v3761 = vrot.slane %v3703, 7
    %v3762 = vsel %vm2223, %v3761, %v3702
    %v3763 = vrot.slane %v3704, 6
    %v3764 = vsel %vm2226, %v3763, %v3762
    %v3765 = vrot.slane %v3705, 5
    %v3766 = vsel %vm2229, %v3765, %v3764
    %v3767 = vrot.slane %v3706, 4
    %v3768 = vsel %vm2232, %v3767, %v3766
    %v3769 = vrot.slane %v3707, 3
    %v3770 = vsel %vm2235, %v3769, %v3768
    %v3771 = vrot.slane %v3708, 2
    %v3772 = vsel %vm2238, %v3771, %v3770
    %v3773 = vrot.slane %v3709, 1
    %v3774 = vsel %vm2241, %v3773, %v3772
    %v3775 = vsel %vm880, %v3760, 0
    %v3777 = vsel %vm880, %v3774, 0
    %3779 = vmatpush.msra.mxu0 0.0
    %3780 = vmatpush.msra.mxu0 0.0
    %3781 = vmatpush.msra.mxu0 0.0
    %3782 = vmatpush.msra.mxu0 0.0
    %3783 = vmatpush.msra.mxu0 0.0
    %3784 = vmatpush.msra.mxu0 0.0
    %3785 = vmatpush.msra.mxu0 0.0
    %3786 = vmatpush.msra.mxu0 0.0
    %3787 = vmatpush.msra.mxu0 0.0
    %3788 = vmatpush.msra.mxu0 0.0
    %3789 = vmatpush.msra.mxu0 0.0
    %3790 = vmatpush.msra.mxu0 0.0
    %3791 = vmatpush.msra.mxu0 %v3713
    %3792 = vmatpush.msra.mxu0 %v3712
    %3793 = vmatpush.msra.mxu0 %v3711
    %3794 = vmatpush.msra.mxu0 %v3710
    %3795 = vmatmul.f32.gmra.mxu0 %v3775
    %v3796 = vpop.f32.mrf.mxu0
    %v3797 = vadd.f32 %v3729, %v3796
    %3798 = vmatmul.f32.gmra.mxu0 %v3777
    %v3799 = vpop.f32.mrf.mxu0
    %v3800 = vadd.f32 %v3729, %v3799
    %3801 = vdwg.mxu0
    %v3803 = vperm.slane %v3719, 0
    %3805 = vmatpush.msra.mxu0 0.0
    %3806 = vmatpush.msra.mxu0 0.0
    %3807 = vmatpush.msra.mxu0 0.0
    %3808 = vmatpush.msra.mxu0 0.0
    %3809 = vmatpush.msra.mxu0 0.0
    %3810 = vmatpush.msra.mxu0 0.0
    %3811 = vmatpush.msra.mxu0 0.0
    %3812 = vmatpush.msra.mxu0 0.0
    %3813 = vmatpush.msra.mxu0 0.0
    %3814 = vmatpush.msra.mxu0 0.0
    %3815 = vmatpush.msra.mxu0 0.0
    %3816 = vmatpush.msra.mxu0 0.0
    %3817 = vmatpush.msra.mxu0 %v3718
    %3818 = vmatpush.msra.mxu0 %v3717
    %3819 = vmatpush.msra.mxu0 %v3716
    %3820 = vmatpush.msra.mxu0 %v3715
    %3821 = vmatmul.f32.gmra.mxu0 %v3775
    %v3822 = vpop.f32.mrf.mxu0
    %v3823 = vadd.f32 %v3803, %v3822
    %3824 = vmatmul.f32.gmra.mxu0 %v3777
    %v3825 = vpop.f32.mrf.mxu0
    %v3826 = vadd.f32 %v3803, %v3825
    %3827 = vdwg.mxu0
    %v3830 = vrot.slane %v3823, 1
    %v3831 = vrot.slane %v3823, 2
    %v3832 = vrot.slane %v3823, 3
    %v3833 = vrot.slane %v3823, 4
    %v3834 = vrot.slane %v3823, 5
    %v3835 = vrot.slane %v3823, 6
    %v3836 = vrot.slane %v3823, 7
    %v3837 = vrot.slane %v3826, 1
    %v3838 = vrot.slane %v3826, 2
    %v3839 = vrot.slane %v3826, 3
    %v3840 = vrot.slane %v3826, 4
    %v3841 = vrot.slane %v3826, 5
    %v3842 = vrot.slane %v3826, 6
    %v3843 = vrot.slane %v3826, 7
    %v3844 = vperm.slane %v3823, 0
    %v3845 = vperm.slane %v3830, 0
    %v3846 = vperm.slane %v3831, 0
    %v3847 = vperm.slane %v3832, 0
    %v3848 = vperm.slane %v3833, 0
    %v3849 = vperm.slane %v3834, 0
    %v3850 = vperm.slane %v3835, 0
    %v3851 = vperm.slane %v3836, 0
    %v3852 = vperm.slane %v3826, 0
    %v3853 = vperm.slane %v3837, 0
    %v3854 = vperm.slane %v3838, 0
    %v3855 = vperm.slane %v3839, 0
    %v3856 = vperm.slane %v3840, 0
    %v3857 = vperm.slane %v3841, 0
    %v3858 = vperm.slane %v3842, 0
    %v3859 = vperm.slane %v3843, 0
    %v3876 = vadd.f32 %v3844, %v3797
    %v3877 = vadd.f32 %v3844, %v3800
    %v3878 = vadd.f32 %v3845, %v3797
    %v3879 = vadd.f32 %v3845, %v3800
    %v3880 = vadd.f32 %v3846, %v3797
    %v3881 = vadd.f32 %v3846, %v3800
    %v3882 = vadd.f32 %v3847, %v3797
    %v3883 = vadd.f32 %v3847, %v3800
    %v3884 = vadd.f32 %v3848, %v3797
    %v3885 = vadd.f32 %v3848, %v3800
    %v3886 = vadd.f32 %v3849, %v3797
    %v3887 = vadd.f32 %v3849, %v3800
    %v3888 = vadd.f32 %v3850, %v3797
    %v3889 = vadd.f32 %v3850, %v3800
    %v3890 = vadd.f32 %v3851, %v3797
    %v3891 = vadd.f32 %v3851, %v3800
    %v3892 = vadd.f32 %v3852, %v3797
    %v3893 = vadd.f32 %v3852, %v3800
    %v3894 = vadd.f32 %v3853, %v3797
    %v3895 = vadd.f32 %v3853, %v3800
    %v3896 = vadd.f32 %v3854, %v3797
    %v3897 = vadd.f32 %v3854, %v3800
    %v3898 = vadd.f32 %v3855, %v3797
    %v3899 = vadd.f32 %v3855, %v3800
    %v3900 = vadd.f32 %v3856, %v3797
    %v3901 = vadd.f32 %v3856, %v3800
    %v3902 = vadd.f32 %v3857, %v3797
    %v3903 = vadd.f32 %v3857, %v3800
    %v3904 = vadd.f32 %v3858, %v3797
    %v3905 = vadd.f32 %v3858, %v3800
    %v3906 = vadd.f32 %v3859, %v3797
    %v3907 = vadd.f32 %v3859, %v3800
    %v3909 = vperm.slane %v3720, 0
    %v3911 = vmul.f32 %v542, %v3909
    %v3912 = vmul.f32 %v547, %v3909
    %v3913 = vmul.f32 %v552, %v3909
    %v3914 = vmul.f32 %v557, %v3909
    %v3915 = vmul.f32 %v562, %v3909
    %v3916 = vmul.f32 %v567, %v3909
    %v3917 = vmul.f32 %v572, %v3909
    %v3918 = vmul.f32 %v577, %v3909
    %v3919 = vmul.f32 %v582, %v3909
    %v3920 = vmul.f32 %v587, %v3909
    %v3921 = vmul.f32 %v592, %v3909
    %v3922 = vmul.f32 %v597, %v3909
    %v3923 = vmul.f32 %v602, %v3909
    %v3924 = vmul.f32 %v607, %v3909
    %v3925 = vmul.f32 %v612, %v3909
    %v3926 = vmul.f32 %v617, %v3909
    %v3927 = vmul.f32 %v622, %v3909
    %v3928 = vmul.f32 %v627, %v3909
    %v3929 = vmul.f32 %v632, %v3909
    %v3930 = vmul.f32 %v637, %v3909
    %v3931 = vmul.f32 %v642, %v3909
    %v3932 = vmul.f32 %v647, %v3909
    %v3933 = vmul.f32 %v652, %v3909
    %v3934 = vmul.f32 %v657, %v3909
    %v3935 = vmul.f32 %v662, %v3909
    %v3936 = vmul.f32 %v667, %v3909
    %v3937 = vmul.f32 %v672, %v3909
    %v3938 = vmul.f32 %v677, %v3909
    %v3939 = vmul.f32 %v682, %v3909
    %v3940 = vmul.f32 %v687, %v3909
    %v3941 = vmul.f32 %v692, %v3909
    %v3942 = vmul.f32 %v697, %v3909
    %v3943 = vadd.f32 %v3876, %v3911
    %v3944 = vadd.f32 %v3877, %v3912
    %v3945 = vadd.f32 %v3878, %v3913
    %v3946 = vadd.f32 %v3879, %v3914
    %v3947 = vadd.f32 %v3880, %v3915
    %v3948 = vadd.f32 %v3881, %v3916
    %v3949 = vadd.f32 %v3882, %v3917
    %v3950 = vadd.f32 %v3883, %v3918
    %v3951 = vadd.f32 %v3884, %v3919
    %v3952 = vadd.f32 %v3885, %v3920
    %v3953 = vadd.f32 %v3886, %v3921
    %v3954 = vadd.f32 %v3887, %v3922
    %v3955 = vadd.f32 %v3888, %v3923
    %v3956 = vadd.f32 %v3889, %v3924
    %v3957 = vadd.f32 %v3890, %v3925
    %v3958 = vadd.f32 %v3891, %v3926
    %v3959 = vadd.f32 %v3892, %v3927
    %v3960 = vadd.f32 %v3893, %v3928
    %v3961 = vadd.f32 %v3894, %v3929
    %v3962 = vadd.f32 %v3895, %v3930
    %v3963 = vadd.f32 %v3896, %v3931
    %v3964 = vadd.f32 %v3897, %v3932
    %v3965 = vadd.f32 %v3898, %v3933
    %v3966 = vadd.f32 %v3899, %v3934
    %v3967 = vadd.f32 %v3900, %v3935
    %v3968 = vadd.f32 %v3901, %v3936
    %v3969 = vadd.f32 %v3902, %v3937
    %v3970 = vadd.f32 %v3903, %v3938
    %v3971 = vadd.f32 %v3904, %v3939
    %v3972 = vadd.f32 %v3905, %v3940
    %v3973 = vadd.f32 %v3906, %v3941
    %v3974 = vadd.f32 %v3907, %v3942
    %vm3975 = vcmp.gt.f32.partialorder %v3943, 0.0
    %vm3976 = vcmp.gt.f32.partialorder %v3944, 0.0
    %vm3977 = vcmp.gt.f32.partialorder %v3945, 0.0
    %vm3978 = vcmp.gt.f32.partialorder %v3946, 0.0
    %vm3979 = vcmp.gt.f32.partialorder %v3947, 0.0
    %vm3980 = vcmp.gt.f32.partialorder %v3948, 0.0
    %vm3981 = vcmp.gt.f32.partialorder %v3949, 0.0
    %vm3982 = vcmp.gt.f32.partialorder %v3950, 0.0
    %vm3983 = vcmp.gt.f32.partialorder %v3951, 0.0
    %vm3984 = vcmp.gt.f32.partialorder %v3952, 0.0
    %vm3985 = vcmp.gt.f32.partialorder %v3953, 0.0
    %vm3986 = vcmp.gt.f32.partialorder %v3954, 0.0
    %vm3987 = vcmp.gt.f32.partialorder %v3955, 0.0
    %vm3988 = vcmp.gt.f32.partialorder %v3956, 0.0
    %vm3989 = vcmp.gt.f32.partialorder %v3957, 0.0
    %vm3990 = vcmp.gt.f32.partialorder %v3958, 0.0
    %vm3991 = vcmp.gt.f32.partialorder %v3959, 0.0
    %vm3992 = vcmp.gt.f32.partialorder %v3960, 0.0
    %vm3993 = vcmp.gt.f32.partialorder %v3961, 0.0
    %vm3994 = vcmp.gt.f32.partialorder %v3962, 0.0
    %vm3995 = vcmp.gt.f32.partialorder %v3963, 0.0
    %vm3996 = vcmp.gt.f32.partialorder %v3964, 0.0
    %vm3997 = vcmp.gt.f32.partialorder %v3965, 0.0
    %vm3998 = vcmp.gt.f32.partialorder %v3966, 0.0
    %vm3999 = vcmp.gt.f32.partialorder %v3967, 0.0
    %vm4000 = vcmp.gt.f32.partialorder %v3968, 0.0
    %vm4001 = vcmp.gt.f32.partialorder %v3969, 0.0
    %vm4002 = vcmp.gt.f32.partialorder %v3970, 0.0
    %vm4003 = vcmp.gt.f32.partialorder %v3971, 0.0
    %vm4004 = vcmp.gt.f32.partialorder %v3972, 0.0
    %vm4005 = vcmp.gt.f32.partialorder %v3973, 0.0
    %vm4006 = vcmp.gt.f32.partialorder %v3974, 0.0
    %v4007 = vmul.f32 %v3943, 0.2
    %v4008 = vmul.f32 %v3944, 0.2
    %v4009 = vmul.f32 %v3945, 0.2
    %v4010 = vmul.f32 %v3946, 0.2
    %v4011 = vmul.f32 %v3947, 0.2
    %v4012 = vmul.f32 %v3948, 0.2
    %v4013 = vmul.f32 %v3949, 0.2
    %v4014 = vmul.f32 %v3950, 0.2
    %v4015 = vmul.f32 %v3951, 0.2
    %v4016 = vmul.f32 %v3952, 0.2
    %v4017 = vmul.f32 %v3953, 0.2
    %v4018 = vmul.f32 %v3954, 0.2
    %v4019 = vmul.f32 %v3955, 0.2
    %v4020 = vmul.f32 %v3956, 0.2
    %v4021 = vmul.f32 %v3957, 0.2
    %v4022 = vmul.f32 %v3958, 0.2
    %v4023 = vmul.f32 %v3959, 0.2
    %v4024 = vmul.f32 %v3960, 0.2
    %v4025 = vmul.f32 %v3961, 0.2
    %v4026 = vmul.f32 %v3962, 0.2
    %v4027 = vmul.f32 %v3963, 0.2
    %v4028 = vmul.f32 %v3964, 0.2
    %v4029 = vmul.f32 %v3965, 0.2
    %v4030 = vmul.f32 %v3966, 0.2
    %v4031 = vmul.f32 %v3967, 0.2
    %v4032 = vmul.f32 %v3968, 0.2
    %v4033 = vmul.f32 %v3969, 0.2
    %v4034 = vmul.f32 %v3970, 0.2
    %v4035 = vmul.f32 %v3971, 0.2
    %v4036 = vmul.f32 %v3972, 0.2
    %v4037 = vmul.f32 %v3973, 0.2
    %v4038 = vmul.f32 %v3974, 0.2
    %v4039 = vsel %vm3975, %v3943, %v4007
    %v4040 = vsel %vm3976, %v3944, %v4008
    %v4041 = vsel %vm3977, %v3945, %v4009
    %v4042 = vsel %vm3978, %v3946, %v4010
    %v4043 = vsel %vm3979, %v3947, %v4011
    %v4044 = vsel %vm3980, %v3948, %v4012
    %v4045 = vsel %vm3981, %v3949, %v4013
    %v4046 = vsel %vm3982, %v3950, %v4014
    %v4047 = vsel %vm3983, %v3951, %v4015
    %v4048 = vsel %vm3984, %v3952, %v4016
    %v4049 = vsel %vm3985, %v3953, %v4017
    %v4050 = vsel %vm3986, %v3954, %v4018
    %v4051 = vsel %vm3987, %v3955, %v4019
    %v4052 = vsel %vm3988, %v3956, %v4020
    %v4053 = vsel %vm3989, %v3957, %v4021
    %v4054 = vsel %vm3990, %v3958, %v4022
    %v4055 = vsel %vm3991, %v3959, %v4023
    %v4056 = vsel %vm3992, %v3960, %v4024
    %v4057 = vsel %vm3993, %v3961, %v4025
    %v4058 = vsel %vm3994, %v3962, %v4026
    %v4059 = vsel %vm3995, %v3963, %v4027
    %v4060 = vsel %vm3996, %v3964, %v4028
    %v4061 = vsel %vm3997, %v3965, %v4029
    %v4062 = vsel %vm3998, %v3966, %v4030
    %v4063 = vsel %vm3999, %v3967, %v4031
    %v4064 = vsel %vm4000, %v3968, %v4032
    %v4065 = vsel %vm4001, %v3969, %v4033
    %v4066 = vsel %vm4002, %v3970, %v4034
    %v4067 = vsel %vm4003, %v3971, %v4035
    %v4068 = vsel %vm4004, %v3972, %v4036
    %v4069 = vsel %vm4005, %v3973, %v4037
    %v4070 = vsel %vm4006, %v3974, %v4038
    %v4071 = vpack.c.bf16 %v4040, %v4039
    %v4072 = vpack.c.bf16 %v4042, %v4041
    %v4073 = vpack.c.bf16 %v4044, %v4043
    %v4074 = vpack.c.bf16 %v4046, %v4045
    %v4075 = vpack.c.bf16 %v4048, %v4047
    %v4076 = vpack.c.bf16 %v4050, %v4049
    %v4077 = vpack.c.bf16 %v4052, %v4051
    %v4078 = vpack.c.bf16 %v4054, %v4053
    %v4079 = vpack.c.bf16 %v4056, %v4055
    %v4080 = vpack.c.bf16 %v4058, %v4057
    %v4081 = vpack.c.bf16 %v4060, %v4059
    %v4082 = vpack.c.bf16 %v4062, %v4061
    %v4083 = vpack.c.bf16 %v4064, %v4063
    %v4084 = vpack.c.bf16 %v4066, %v4065
    %v4085 = vpack.c.bf16 %v4068, %v4067
    %v4086 = vpack.c.bf16 %v4070, %v4069
    %v4087 = vpack.c.bf16 %v3722, %v3721
    %v4088 = vpack.c.bf16 %v3724, %v3723
    %v4090 = vsel %vm880, %v4071, 0
    %v4093 = vsel %vm880, %v4072, 0
    %v4096 = vsel %vm880, %v4073, 0
    %v4099 = vsel %vm880, %v4074, 0
    %v4102 = vsel %vm880, %v4075, 0
    %v4105 = vsel %vm880, %v4076, 0
    %v4108 = vsel %vm880, %v4077, 0
    %v4111 = vsel %vm880, %v4078, 0
    %v4114 = vsel %vm880, %v4079, 0
    %v4117 = vsel %vm880, %v4080, 0
    %v4120 = vsel %vm880, %v4081, 0
    %v4123 = vsel %vm880, %v4082, 0
    %v4126 = vsel %vm880, %v4083, 0
    %v4129 = vsel %vm880, %v4084, 0
    %v4132 = vsel %vm880, %v4085, 0
    %v4135 = vsel %vm880, %v4086, 0
    %4137 = vmatpush.bf16.msra.mxu0 0
    %4138 = vmatpush.bf16.msra.mxu0 0
    %4139 = vmatpush.bf16.msra.mxu0 0
    %4140 = vmatpush.bf16.msra.mxu0 0
    %4141 = vmatpush.bf16.msra.mxu0 0
    %4142 = vmatpush.bf16.msra.mxu0 0
    %4143 = vmatpush.bf16.msra.mxu0 %v4088
    %4144 = vmatpush.bf16.msra.mxu0 %v4087
    %4145 = vmatmul.bf16.gmra.mxu0 %v4090
    %v4146 = vpop.f32.mrf.mxu0
    %v4147 = vadd.f32 0.0, %v4146
    %v4148 = vpop.f32.mrf.mxu0
    %v4149 = vadd.f32 0.0, %v4148
    %4150 = vmatmul.bf16.gmra.mxu0 %v4093
    %v4151 = vpop.f32.mrf.mxu0
    %v4152 = vadd.f32 0.0, %v4151
    %v4153 = vpop.f32.mrf.mxu0
    %v4154 = vadd.f32 0.0, %v4153
    %4155 = vmatmul.bf16.gmra.mxu0 %v4096
    %v4156 = vpop.f32.mrf.mxu0
    %v4157 = vadd.f32 0.0, %v4156
    %v4158 = vpop.f32.mrf.mxu0
    %v4159 = vadd.f32 0.0, %v4158
    %4160 = vmatmul.bf16.gmra.mxu0 %v4099
    %v4161 = vpop.f32.mrf.mxu0
    %v4162 = vadd.f32 0.0, %v4161
    %v4163 = vpop.f32.mrf.mxu0
    %v4164 = vadd.f32 0.0, %v4163
    %4165 = vmatmul.bf16.gmra.mxu0 %v4102
    %v4166 = vpop.f32.mrf.mxu0
    %v4167 = vadd.f32 0.0, %v4166
    %v4168 = vpop.f32.mrf.mxu0
    %v4169 = vadd.f32 0.0, %v4168
    %4170 = vmatmul.bf16.gmra.mxu0 %v4105
    %v4171 = vpop.f32.mrf.mxu0
    %v4172 = vadd.f32 0.0, %v4171
    %v4173 = vpop.f32.mrf.mxu0
    %v4174 = vadd.f32 0.0, %v4173
    %4175 = vmatmul.bf16.gmra.mxu0 %v4108
    %v4176 = vpop.f32.mrf.mxu0
    %v4177 = vadd.f32 0.0, %v4176
    %v4178 = vpop.f32.mrf.mxu0
    %v4179 = vadd.f32 0.0, %v4178
    %4180 = vmatmul.bf16.gmra.mxu0 %v4111
    %v4181 = vpop.f32.mrf.mxu0
    %v4182 = vadd.f32 0.0, %v4181
    %v4183 = vpop.f32.mrf.mxu0
    %v4184 = vadd.f32 0.0, %v4183
    %4185 = vmatmul.bf16.gmra.mxu0 %v4114
    %v4186 = vpop.f32.mrf.mxu0
    %v4187 = vadd.f32 0.0, %v4186
    %v4188 = vpop.f32.mrf.mxu0
    %v4189 = vadd.f32 0.0, %v4188
    %4190 = vmatmul.bf16.gmra.mxu0 %v4117
    %v4191 = vpop.f32.mrf.mxu0
    %v4192 = vadd.f32 0.0, %v4191
    %v4193 = vpop.f32.mrf.mxu0
    %v4194 = vadd.f32 0.0, %v4193
    %4195 = vmatmul.bf16.gmra.mxu0 %v4120
    %v4196 = vpop.f32.mrf.mxu0
    %v4197 = vadd.f32 0.0, %v4196
    %v4198 = vpop.f32.mrf.mxu0
    %v4199 = vadd.f32 0.0, %v4198
    %4200 = vmatmul.bf16.gmra.mxu0 %v4123
    %v4201 = vpop.f32.mrf.mxu0
    %v4202 = vadd.f32 0.0, %v4201
    %v4203 = vpop.f32.mrf.mxu0
    %v4204 = vadd.f32 0.0, %v4203
    %4205 = vmatmul.bf16.gmra.mxu0 %v4126
    %v4206 = vpop.f32.mrf.mxu0
    %v4207 = vadd.f32 0.0, %v4206
    %v4208 = vpop.f32.mrf.mxu0
    %v4209 = vadd.f32 0.0, %v4208
    %4210 = vmatmul.bf16.gmra.mxu0 %v4129
    %v4211 = vpop.f32.mrf.mxu0
    %v4212 = vadd.f32 0.0, %v4211
    %v4213 = vpop.f32.mrf.mxu0
    %v4214 = vadd.f32 0.0, %v4213
    %4215 = vmatmul.bf16.gmra.mxu0 %v4132
    %v4216 = vpop.f32.mrf.mxu0
    %v4217 = vadd.f32 0.0, %v4216
    %v4218 = vpop.f32.mrf.mxu0
    %v4219 = vadd.f32 0.0, %v4218
    %4220 = vmatmul.bf16.gmra.mxu0 %v4135
    %v4221 = vpop.f32.mrf.mxu0
    %v4222 = vadd.f32 0.0, %v4221
    %v4223 = vpop.f32.mrf.mxu0
    %v4224 = vadd.f32 0.0, %v4223
    %4225 = vdwg.mxu0
    %v4226 = vadd.f32 %v4147, %v1021
    %v4227 = vadd.f32 %v4149, %v1026
    %v4228 = vadd.f32 %v4152, %v1031
    %v4229 = vadd.f32 %v4154, %v1036
    %v4230 = vadd.f32 %v4157, %v1041
    %v4231 = vadd.f32 %v4159, %v1046
    %v4232 = vadd.f32 %v4162, %v1051
    %v4233 = vadd.f32 %v4164, %v1056
    %v4234 = vadd.f32 %v4167, %v1061
    %v4235 = vadd.f32 %v4169, %v1066
    %v4236 = vadd.f32 %v4172, %v1071
    %v4237 = vadd.f32 %v4174, %v1076
    %v4238 = vadd.f32 %v4177, %v1081
    %v4239 = vadd.f32 %v4179, %v1086
    %v4240 = vadd.f32 %v4182, %v1091
    %v4241 = vadd.f32 %v4184, %v1096
    %v4242 = vadd.f32 %v4187, %v1101
    %v4243 = vadd.f32 %v4189, %v1106
    %v4244 = vadd.f32 %v4192, %v1111
    %v4245 = vadd.f32 %v4194, %v1116
    %v4246 = vadd.f32 %v4197, %v1121
    %v4247 = vadd.f32 %v4199, %v1126
    %v4248 = vadd.f32 %v4202, %v1131
    %v4249 = vadd.f32 %v4204, %v1136
    %v4250 = vadd.f32 %v4207, %v1141
    %v4251 = vadd.f32 %v4209, %v1146
    %v4252 = vadd.f32 %v4212, %v1151
    %v4253 = vadd.f32 %v4214, %v1156
    %v4254 = vadd.f32 %v4217, %v1161
    %v4255 = vadd.f32 %v4219, %v1166
    %v4256 = vadd.f32 %v4222, %v1171
    %v4257 = vadd.f32 %v4224, %v1176
    %v4258 = vsel %vm1210, %v4226, -inf
    %v4259 = vsel %vm1210, %v4227, -inf
    %v4260 = vmax.f32 %v4258, %v4259
    %v4261 = vrot.slane %v4260, 4
    %v4262 = vmax.f32 %v4260, %v4261
    %v4263 = vrot.slane %v4262, 2
    %v4264 = vmax.f32 %v4262, %v4263
    %v4265 = vrot.slane %v4264, 1
    %v4266 = vmax.f32 %v4264, %v4265
    %v4267 = vsel %vm1210, %v4228, -inf
    %v4268 = vsel %vm1210, %v4229, -inf
    %v4269 = vmax.f32 %v4267, %v4268
    %v4270 = vrot.slane %v4269, 4
    %v4271 = vmax.f32 %v4269, %v4270
    %v4272 = vrot.slane %v4271, 2
    %v4273 = vmax.f32 %v4271, %v4272
    %v4274 = vrot.slane %v4273, 1
    %v4275 = vmax.f32 %v4273, %v4274
    %v4276 = vsel %vm1210, %v4230, -inf
    %v4277 = vsel %vm1210, %v4231, -inf
    %v4278 = vmax.f32 %v4276, %v4277
    %v4279 = vrot.slane %v4278, 4
    %v4280 = vmax.f32 %v4278, %v4279
    %v4281 = vrot.slane %v4280, 2
    %v4282 = vmax.f32 %v4280, %v4281
    %v4283 = vrot.slane %v4282, 1
    %v4284 = vmax.f32 %v4282, %v4283
    %v4285 = vsel %vm1210, %v4232, -inf
    %v4286 = vsel %vm1210, %v4233, -inf
    %v4287 = vmax.f32 %v4285, %v4286
    %v4288 = vrot.slane %v4287, 4
    %v4289 = vmax.f32 %v4287, %v4288
    %v4290 = vrot.slane %v4289, 2
    %v4291 = vmax.f32 %v4289, %v4290
    %v4292 = vrot.slane %v4291, 1
    %v4293 = vmax.f32 %v4291, %v4292
    %v4294 = vsel %vm1210, %v4234, -inf
    %v4295 = vsel %vm1210, %v4235, -inf
    %v4296 = vmax.f32 %v4294, %v4295
    %v4297 = vrot.slane %v4296, 4
    %v4298 = vmax.f32 %v4296, %v4297
    %v4299 = vrot.slane %v4298, 2
    %v4300 = vmax.f32 %v4298, %v4299
    %v4301 = vrot.slane %v4300, 1
    %v4302 = vmax.f32 %v4300, %v4301
    %v4303 = vsel %vm1210, %v4236, -inf
    %v4304 = vsel %vm1210, %v4237, -inf
    %v4305 = vmax.f32 %v4303, %v4304
    %v4306 = vrot.slane %v4305, 4
    %v4307 = vmax.f32 %v4305, %v4306
    %v4308 = vrot.slane %v4307, 2
    %v4309 = vmax.f32 %v4307, %v4308
    %v4310 = vrot.slane %v4309, 1
    %v4311 = vmax.f32 %v4309, %v4310
    %v4312 = vsel %vm1210, %v4238, -inf
    %v4313 = vsel %vm1210, %v4239, -inf
    %v4314 = vmax.f32 %v4312, %v4313
    %v4315 = vrot.slane %v4314, 4
    %v4316 = vmax.f32 %v4314, %v4315
    %v4317 = vrot.slane %v4316, 2
    %v4318 = vmax.f32 %v4316, %v4317
    %v4319 = vrot.slane %v4318, 1
    %v4320 = vmax.f32 %v4318, %v4319
    %v4321 = vsel %vm1210, %v4240, -inf
    %v4322 = vsel %vm1210, %v4241, -inf
    %v4323 = vmax.f32 %v4321, %v4322
    %v4324 = vrot.slane %v4323, 4
    %v4325 = vmax.f32 %v4323, %v4324
    %v4326 = vrot.slane %v4325, 2
    %v4327 = vmax.f32 %v4325, %v4326
    %v4328 = vrot.slane %v4327, 1
    %v4329 = vmax.f32 %v4327, %v4328
    %v4330 = vsel %vm1210, %v4242, -inf
    %v4331 = vsel %vm1210, %v4243, -inf
    %v4332 = vmax.f32 %v4330, %v4331
    %v4333 = vrot.slane %v4332, 4
    %v4334 = vmax.f32 %v4332, %v4333
    %v4335 = vrot.slane %v4334, 2
    %v4336 = vmax.f32 %v4334, %v4335
    %v4337 = vrot.slane %v4336, 1
    %v4338 = vmax.f32 %v4336, %v4337
    %v4339 = vsel %vm1210, %v4244, -inf
    %v4340 = vsel %vm1210, %v4245, -inf
    %v4341 = vmax.f32 %v4339, %v4340
    %v4342 = vrot.slane %v4341, 4
    %v4343 = vmax.f32 %v4341, %v4342
    %v4344 = vrot.slane %v4343, 2
    %v4345 = vmax.f32 %v4343, %v4344
    %v4346 = vrot.slane %v4345, 1
    %v4347 = vmax.f32 %v4345, %v4346
    %v4348 = vsel %vm1210, %v4246, -inf
    %v4349 = vsel %vm1210, %v4247, -inf
    %v4350 = vmax.f32 %v4348, %v4349
    %v4351 = vrot.slane %v4350, 4
    %v4352 = vmax.f32 %v4350, %v4351
    %v4353 = vrot.slane %v4352, 2
    %v4354 = vmax.f32 %v4352, %v4353
    %v4355 = vrot.slane %v4354, 1
    %v4356 = vmax.f32 %v4354, %v4355
    %v4357 = vsel %vm1210, %v4248, -inf
    %v4358 = vsel %vm1210, %v4249, -inf
    %v4359 = vmax.f32 %v4357, %v4358
    %v4360 = vrot.slane %v4359, 4
    %v4361 = vmax.f32 %v4359, %v4360
    %v4362 = vrot.slane %v4361, 2
    %v4363 = vmax.f32 %v4361, %v4362
    %v4364 = vrot.slane %v4363, 1
    %v4365 = vmax.f32 %v4363, %v4364
    %v4366 = vsel %vm1210, %v4250, -inf
    %v4367 = vsel %vm1210, %v4251, -inf
    %v4368 = vmax.f32 %v4366, %v4367
    %v4369 = vrot.slane %v4368, 4
    %v4370 = vmax.f32 %v4368, %v4369
    %v4371 = vrot.slane %v4370, 2
    %v4372 = vmax.f32 %v4370, %v4371
    %v4373 = vrot.slane %v4372, 1
    %v4374 = vmax.f32 %v4372, %v4373
    %v4375 = vsel %vm1210, %v4252, -inf
    %v4376 = vsel %vm1210, %v4253, -inf
    %v4377 = vmax.f32 %v4375, %v4376
    %v4378 = vrot.slane %v4377, 4
    %v4379 = vmax.f32 %v4377, %v4378
    %v4380 = vrot.slane %v4379, 2
    %v4381 = vmax.f32 %v4379, %v4380
    %v4382 = vrot.slane %v4381, 1
    %v4383 = vmax.f32 %v4381, %v4382
    %v4384 = vsel %vm1210, %v4254, -inf
    %v4385 = vsel %vm1210, %v4255, -inf
    %v4386 = vmax.f32 %v4384, %v4385
    %v4387 = vrot.slane %v4386, 4
    %v4388 = vmax.f32 %v4386, %v4387
    %v4389 = vrot.slane %v4388, 2
    %v4390 = vmax.f32 %v4388, %v4389
    %v4391 = vrot.slane %v4390, 1
    %v4392 = vmax.f32 %v4390, %v4391
    %v4393 = vsel %vm1210, %v4256, -inf
    %v4394 = vsel %vm1210, %v4257, -inf
    %v4395 = vmax.f32 %v4393, %v4394
    %v4396 = vrot.slane %v4395, 4
    %v4397 = vmax.f32 %v4395, %v4396
    %v4398 = vrot.slane %v4397, 2
    %v4399 = vmax.f32 %v4397, %v4398
    %v4400 = vrot.slane %v4399, 1
    %v4401 = vmax.f32 %v4399, %v4400
    %v4402 = vsub.f32 %v4226, %v4266
    %v4403 = vsub.f32 %v4227, %v4266
    %v4404 = vsub.f32 %v4228, %v4275
    %v4405 = vsub.f32 %v4229, %v4275
    %v4406 = vsub.f32 %v4230, %v4284
    %v4407 = vsub.f32 %v4231, %v4284
    %v4408 = vsub.f32 %v4232, %v4293
    %v4409 = vsub.f32 %v4233, %v4293
    %v4410 = vsub.f32 %v4234, %v4302
    %v4411 = vsub.f32 %v4235, %v4302
    %v4412 = vsub.f32 %v4236, %v4311
    %v4413 = vsub.f32 %v4237, %v4311
    %v4414 = vsub.f32 %v4238, %v4320
    %v4415 = vsub.f32 %v4239, %v4320
    %v4416 = vsub.f32 %v4240, %v4329
    %v4417 = vsub.f32 %v4241, %v4329
    %v4418 = vsub.f32 %v4242, %v4338
    %v4419 = vsub.f32 %v4243, %v4338
    %v4420 = vsub.f32 %v4244, %v4347
    %v4421 = vsub.f32 %v4245, %v4347
    %v4422 = vsub.f32 %v4246, %v4356
    %v4423 = vsub.f32 %v4247, %v4356
    %v4424 = vsub.f32 %v4248, %v4365
    %v4425 = vsub.f32 %v4249, %v4365
    %v4426 = vsub.f32 %v4250, %v4374
    %v4427 = vsub.f32 %v4251, %v4374
    %v4428 = vsub.f32 %v4252, %v4383
    %v4429 = vsub.f32 %v4253, %v4383
    %v4430 = vsub.f32 %v4254, %v4392
    %v4431 = vsub.f32 %v4255, %v4392
    %v4432 = vsub.f32 %v4256, %v4401
    %v4433 = vsub.f32 %v4257, %v4401
    %v4434 = vmul.f32 %v4402, 1.442695
    %v4435 = vpow.pop %v4434
    %v4436 = vmul.f32 %v4403, 1.442695
    %v4437 = vpow.pop %v4436
    %v4438 = vmul.f32 %v4404, 1.442695
    %v4439 = vpow.pop %v4438
    %v4440 = vmul.f32 %v4405, 1.442695
    %v4441 = vpow.pop %v4440
    %v4442 = vmul.f32 %v4406, 1.442695
    %v4443 = vpow.pop %v4442
    %v4444 = vmul.f32 %v4407, 1.442695
    %v4445 = vpow.pop %v4444
    %v4446 = vmul.f32 %v4408, 1.442695
    %v4447 = vpow.pop %v4446
    %v4448 = vmul.f32 %v4409, 1.442695
    %v4449 = vpow.pop %v4448
    %v4450 = vmul.f32 %v4410, 1.442695
    %v4451 = vpow.pop %v4450
    %v4452 = vmul.f32 %v4411, 1.442695
    %v4453 = vpow.pop %v4452
    %v4454 = vmul.f32 %v4412, 1.442695
    %v4455 = vpow.pop %v4454
    %v4456 = vmul.f32 %v4413, 1.442695
    %v4457 = vpow.pop %v4456
    %v4458 = vmul.f32 %v4414, 1.442695
    %v4459 = vpow.pop %v4458
    %v4460 = vmul.f32 %v4415, 1.442695
    %v4461 = vpow.pop %v4460
    %v4462 = vmul.f32 %v4416, 1.442695
    %v4463 = vpow.pop %v4462
    %v4464 = vmul.f32 %v4417, 1.442695
    %v4465 = vpow.pop %v4464
    %v4466 = vmul.f32 %v4418, 1.442695
    %v4467 = vpow.pop %v4466
    %v4468 = vmul.f32 %v4419, 1.442695
    %v4469 = vpow.pop %v4468
    %v4470 = vmul.f32 %v4420, 1.442695
    %v4471 = vpow.pop %v4470
    %v4472 = vmul.f32 %v4421, 1.442695
    %v4473 = vpow.pop %v4472
    %v4474 = vmul.f32 %v4422, 1.442695
    %v4475 = vpow.pop %v4474
    %v4476 = vmul.f32 %v4423, 1.442695
    %v4477 = vpow.pop %v4476
    %v4478 = vmul.f32 %v4424, 1.442695
    %v4479 = vpow.pop %v4478
    %v4480 = vmul.f32 %v4425, 1.442695
    %v4481 = vpow.pop %v4480
    %v4482 = vmul.f32 %v4426, 1.442695
    %v4483 = vpow.pop %v4482
    %v4484 = vmul.f32 %v4427, 1.442695
    %v4485 = vpow.pop %v4484
    %v4486 = vmul.f32 %v4428, 1.442695
    %v4487 = vpow.pop %v4486
    %v4488 = vmul.f32 %v4429, 1.442695
    %v4489 = vpow.pop %v4488
    %v4490 = vmul.f32 %v4430, 1.442695
    %v4491 = vpow.pop %v4490
    %v4492 = vmul.f32 %v4431, 1.442695
    %v4493 = vpow.pop %v4492
    %v4494 = vmul.f32 %v4432, 1.442695
    %v4495 = vpow.pop %v4494
    %v4496 = vmul.f32 %v4433, 1.442695
    %v4497 = vpow.pop %v4496
    %v4498 = vsel %vm1210, %v4435, 0.0
    %v4499 = vsel %vm1210, %v4437, 0.0
    %v4500 = vadd.f32 %v4498, %v4499
    %v4501 = vrot.slane %v4500, 4
    %v4502 = vadd.f32 %v4500, %v4501
    %v4503 = vrot.slane %v4502, 2
    %v4504 = vadd.f32 %v4502, %v4503
    %v4505 = vrot.slane %v4504, 1
    %v4506 = vadd.f32 %v4504, %v4505
    %v4507 = vsel %vm1210, %v4439, 0.0
    %v4508 = vsel %vm1210, %v4441, 0.0
    %v4509 = vadd.f32 %v4507, %v4508
    %v4510 = vrot.slane %v4509, 4
    %v4511 = vadd.f32 %v4509, %v4510
    %v4512 = vrot.slane %v4511, 2
    %v4513 = vadd.f32 %v4511, %v4512
    %v4514 = vrot.slane %v4513, 1
    %v4515 = vadd.f32 %v4513, %v4514
    %v4516 = vsel %vm1210, %v4443, 0.0
    %v4517 = vsel %vm1210, %v4445, 0.0
    %v4518 = vadd.f32 %v4516, %v4517
    %v4519 = vrot.slane %v4518, 4
    %v4520 = vadd.f32 %v4518, %v4519
    %v4521 = vrot.slane %v4520, 2
    %v4522 = vadd.f32 %v4520, %v4521
    %v4523 = vrot.slane %v4522, 1
    %v4524 = vadd.f32 %v4522, %v4523
    %v4525 = vsel %vm1210, %v4447, 0.0
    %v4526 = vsel %vm1210, %v4449, 0.0
    %v4527 = vadd.f32 %v4525, %v4526
    %v4528 = vrot.slane %v4527, 4
    %v4529 = vadd.f32 %v4527, %v4528
    %v4530 = vrot.slane %v4529, 2
    %v4531 = vadd.f32 %v4529, %v4530
    %v4532 = vrot.slane %v4531, 1
    %v4533 = vadd.f32 %v4531, %v4532
    %v4534 = vsel %vm1210, %v4451, 0.0
    %v4535 = vsel %vm1210, %v4453, 0.0
    %v4536 = vadd.f32 %v4534, %v4535
    %v4537 = vrot.slane %v4536, 4
    %v4538 = vadd.f32 %v4536, %v4537
    %v4539 = vrot.slane %v4538, 2
    %v4540 = vadd.f32 %v4538, %v4539
    %v4541 = vrot.slane %v4540, 1
    %v4542 = vadd.f32 %v4540, %v4541
    %v4543 = vsel %vm1210, %v4455, 0.0
    %v4544 = vsel %vm1210, %v4457, 0.0
    %v4545 = vadd.f32 %v4543, %v4544
    %v4546 = vrot.slane %v4545, 4
    %v4547 = vadd.f32 %v4545, %v4546
    %v4548 = vrot.slane %v4547, 2
    %v4549 = vadd.f32 %v4547, %v4548
    %v4550 = vrot.slane %v4549, 1
    %v4551 = vadd.f32 %v4549, %v4550
    %v4552 = vsel %vm1210, %v4459, 0.0
    %v4553 = vsel %vm1210, %v4461, 0.0
    %v4554 = vadd.f32 %v4552, %v4553
    %v4555 = vrot.slane %v4554, 4
    %v4556 = vadd.f32 %v4554, %v4555
    %v4557 = vrot.slane %v4556, 2
    %v4558 = vadd.f32 %v4556, %v4557
    %v4559 = vrot.slane %v4558, 1
    %v4560 = vadd.f32 %v4558, %v4559
    %v4561 = vsel %vm1210, %v4463, 0.0
    %v4562 = vsel %vm1210, %v4465, 0.0
    %v4563 = vadd.f32 %v4561, %v4562
    %v4564 = vrot.slane %v4563, 4
    %v4565 = vadd.f32 %v4563, %v4564
    %v4566 = vrot.slane %v4565, 2
    %v4567 = vadd.f32 %v4565, %v4566
    %v4568 = vrot.slane %v4567, 1
    %v4569 = vadd.f32 %v4567, %v4568
    %v4570 = vsel %vm1210, %v4467, 0.0
    %v4571 = vsel %vm1210, %v4469, 0.0
    %v4572 = vadd.f32 %v4570, %v4571
    %v4573 = vrot.slane %v4572, 4
    %v4574 = vadd.f32 %v4572, %v4573
    %v4575 = vrot.slane %v4574, 2
    %v4576 = vadd.f32 %v4574, %v4575
    %v4577 = vrot.slane %v4576, 1
    %v4578 = vadd.f32 %v4576, %v4577
    %v4579 = vsel %vm1210, %v4471, 0.0
    %v4580 = vsel %vm1210, %v4473, 0.0
    %v4581 = vadd.f32 %v4579, %v4580
    %v4582 = vrot.slane %v4581, 4
    %v4583 = vadd.f32 %v4581, %v4582
    %v4584 = vrot.slane %v4583, 2
    %v4585 = vadd.f32 %v4583, %v4584
    %v4586 = vrot.slane %v4585, 1
    %v4587 = vadd.f32 %v4585, %v4586
    %v4588 = vsel %vm1210, %v4475, 0.0
    %v4589 = vsel %vm1210, %v4477, 0.0
    %v4590 = vadd.f32 %v4588, %v4589
    %v4591 = vrot.slane %v4590, 4
    %v4592 = vadd.f32 %v4590, %v4591
    %v4593 = vrot.slane %v4592, 2
    %v4594 = vadd.f32 %v4592, %v4593
    %v4595 = vrot.slane %v4594, 1
    %v4596 = vadd.f32 %v4594, %v4595
    %v4597 = vsel %vm1210, %v4479, 0.0
    %v4598 = vsel %vm1210, %v4481, 0.0
    %v4599 = vadd.f32 %v4597, %v4598
    %v4600 = vrot.slane %v4599, 4
    %v4601 = vadd.f32 %v4599, %v4600
    %v4602 = vrot.slane %v4601, 2
    %v4603 = vadd.f32 %v4601, %v4602
    %v4604 = vrot.slane %v4603, 1
    %v4605 = vadd.f32 %v4603, %v4604
    %v4606 = vsel %vm1210, %v4483, 0.0
    %v4607 = vsel %vm1210, %v4485, 0.0
    %v4608 = vadd.f32 %v4606, %v4607
    %v4609 = vrot.slane %v4608, 4
    %v4610 = vadd.f32 %v4608, %v4609
    %v4611 = vrot.slane %v4610, 2
    %v4612 = vadd.f32 %v4610, %v4611
    %v4613 = vrot.slane %v4612, 1
    %v4614 = vadd.f32 %v4612, %v4613
    %v4615 = vsel %vm1210, %v4487, 0.0
    %v4616 = vsel %vm1210, %v4489, 0.0
    %v4617 = vadd.f32 %v4615, %v4616
    %v4618 = vrot.slane %v4617, 4
    %v4619 = vadd.f32 %v4617, %v4618
    %v4620 = vrot.slane %v4619, 2
    %v4621 = vadd.f32 %v4619, %v4620
    %v4622 = vrot.slane %v4621, 1
    %v4623 = vadd.f32 %v4621, %v4622
    %v4624 = vsel %vm1210, %v4491, 0.0
    %v4625 = vsel %vm1210, %v4493, 0.0
    %v4626 = vadd.f32 %v4624, %v4625
    %v4627 = vrot.slane %v4626, 4
    %v4628 = vadd.f32 %v4626, %v4627
    %v4629 = vrot.slane %v4628, 2
    %v4630 = vadd.f32 %v4628, %v4629
    %v4631 = vrot.slane %v4630, 1
    %v4632 = vadd.f32 %v4630, %v4631
    %v4633 = vsel %vm1210, %v4495, 0.0
    %v4634 = vsel %vm1210, %v4497, 0.0
    %v4635 = vadd.f32 %v4633, %v4634
    %v4636 = vrot.slane %v4635, 4
    %v4637 = vadd.f32 %v4635, %v4636
    %v4638 = vrot.slane %v4637, 2
    %v4639 = vadd.f32 %v4637, %v4638
    %v4640 = vrot.slane %v4639, 1
    %v4641 = vadd.f32 %v4639, %v4640
    %v4642 = vrcp.pop %v4506
    %v4643 = vrcp.pop %v4515
    %v4644 = vrcp.pop %v4524
    %v4645 = vrcp.pop %v4533
    %v4646 = vrcp.pop %v4542
    %v4647 = vrcp.pop %v4551
    %v4648 = vrcp.pop %v4560
    %v4649 = vrcp.pop %v4569
    %v4650 = vrcp.pop %v4578
    %v4651 = vrcp.pop %v4587
    %v4652 = vrcp.pop %v4596
    %v4653 = vrcp.pop %v4605
    %v4654 = vrcp.pop %v4614
    %v4655 = vrcp.pop %v4623
    %v4656 = vrcp.pop %v4632
    %v4657 = vrcp.pop %v4641
    %v4658 = vmul.f32 %v4435, %v4642
    %v4659 = vmul.f32 %v4437, %v4642
    %v4660 = vmul.f32 %v4439, %v4643
    %v4661 = vmul.f32 %v4441, %v4643
    %v4662 = vmul.f32 %v4443, %v4644
    %v4663 = vmul.f32 %v4445, %v4644
    %v4664 = vmul.f32 %v4447, %v4645
    %v4665 = vmul.f32 %v4449, %v4645
    %v4666 = vmul.f32 %v4451, %v4646
    %v4667 = vmul.f32 %v4453, %v4646
    %v4668 = vmul.f32 %v4455, %v4647
    %v4669 = vmul.f32 %v4457, %v4647
    %v4670 = vmul.f32 %v4459, %v4648
    %v4671 = vmul.f32 %v4461, %v4648
    %v4672 = vmul.f32 %v4463, %v4649
    %v4673 = vmul.f32 %v4465, %v4649
    %v4674 = vmul.f32 %v4467, %v4650
    %v4675 = vmul.f32 %v4469, %v4650
    %v4676 = vmul.f32 %v4471, %v4651
    %v4677 = vmul.f32 %v4473, %v4651
    %v4678 = vmul.f32 %v4475, %v4652
    %v4679 = vmul.f32 %v4477, %v4652
    %v4680 = vmul.f32 %v4479, %v4653
    %v4681 = vmul.f32 %v4481, %v4653
    %v4682 = vmul.f32 %v4483, %v4654
    %v4683 = vmul.f32 %v4485, %v4654
    %v4684 = vmul.f32 %v4487, %v4655
    %v4685 = vmul.f32 %v4489, %v4655
    %v4686 = vmul.f32 %v4491, %v4656
    %v4687 = vmul.f32 %v4493, %v4656
    %v4688 = vmul.f32 %v4495, %v4657
    %v4689 = vmul.f32 %v4497, %v4657
    %v4691 = vsel %vm1210, %v4658, 0
    %v4694 = vsel %vm1210, %v4659, 0
    %v4697 = vsel %vm1210, %v4660, 0
    %v4700 = vsel %vm1210, %v4661, 0
    %v4703 = vsel %vm1210, %v4662, 0
    %v4706 = vsel %vm1210, %v4663, 0
    %v4709 = vsel %vm1210, %v4664, 0
    %v4712 = vsel %vm1210, %v4665, 0
    %v4715 = vsel %vm1210, %v4666, 0
    %v4718 = vsel %vm1210, %v4667, 0
    %v4721 = vsel %vm1210, %v4668, 0
    %v4724 = vsel %vm1210, %v4669, 0
    %v4727 = vsel %vm1210, %v4670, 0
    %v4730 = vsel %vm1210, %v4671, 0
    %v4733 = vsel %vm1210, %v4672, 0
    %v4736 = vsel %vm1210, %v4673, 0
    %v4739 = vsel %vm1210, %v4674, 0
    %v4742 = vsel %vm1210, %v4675, 0
    %v4745 = vsel %vm1210, %v4676, 0
    %v4748 = vsel %vm1210, %v4677, 0
    %v4751 = vsel %vm1210, %v4678, 0
    %v4754 = vsel %vm1210, %v4679, 0
    %v4757 = vsel %vm1210, %v4680, 0
    %v4760 = vsel %vm1210, %v4681, 0
    %v4763 = vsel %vm1210, %v4682, 0
    %v4766 = vsel %vm1210, %v4683, 0
    %v4769 = vsel %vm1210, %v4684, 0
    %v4772 = vsel %vm1210, %v4685, 0
    %v4775 = vsel %vm1210, %v4686, 0
    %v4778 = vsel %vm1210, %v4687, 0
    %v4781 = vsel %vm1210, %v4688, 0
    %v4784 = vsel %vm1210, %v4689, 0
    %4786 = vmatpush.msra.mxu0 0.0
    %4787 = vmatpush.msra.mxu0 0.0
    %4788 = vmatpush.msra.mxu0 0.0
    %4789 = vmatpush.msra.mxu0 0.0
    %4790 = vmatpush.msra.mxu0 0.0
    %4791 = vmatpush.msra.mxu0 0.0
    %4792 = vmatpush.msra.mxu0 0.0
    %4793 = vmatpush.msra.mxu0 0.0
    %4794 = vmatpush.msra.mxu0 0.0
    %4795 = vmatpush.msra.mxu0 0.0
    %4796 = vmatpush.msra.mxu0 0.0
    %4797 = vmatpush.msra.mxu0 0.0
    %4798 = vmatpush.msra.mxu0 0.0
    %4799 = vmatpush.msra.mxu0 0.0
    %4800 = vmatpush.msra.mxu0 0.0
    %4801 = vmatpush.msra.mxu0 %v1741
    %4802 = vmatmul.f32.gmra.mxu0 %v4691
    %v4803 = vpop.f32.mrf.mxu0
    %v4804 = vadd.f32 0.0, %v4803
    %4805 = vmatmul.f32.gmra.mxu0 %v4694
    %v4806 = vpop.f32.mrf.mxu0
    %v4807 = vadd.f32 0.0, %v4806
    %4808 = vmatmul.f32.gmra.mxu0 %v4697
    %v4809 = vpop.f32.mrf.mxu0
    %v4810 = vadd.f32 0.0, %v4809
    %4811 = vmatmul.f32.gmra.mxu0 %v4700
    %v4812 = vpop.f32.mrf.mxu0
    %v4813 = vadd.f32 0.0, %v4812
    %4814 = vmatmul.f32.gmra.mxu0 %v4703
    %v4815 = vpop.f32.mrf.mxu0
    %v4816 = vadd.f32 0.0, %v4815
    %4817 = vmatmul.f32.gmra.mxu0 %v4706
    %v4818 = vpop.f32.mrf.mxu0
    %v4819 = vadd.f32 0.0, %v4818
    %4820 = vmatmul.f32.gmra.mxu0 %v4709
    %v4821 = vpop.f32.mrf.mxu0
    %v4822 = vadd.f32 0.0, %v4821
    %4823 = vmatmul.f32.gmra.mxu0 %v4712
    %v4824 = vpop.f32.mrf.mxu0
    %v4825 = vadd.f32 0.0, %v4824
    %4826 = vmatmul.f32.gmra.mxu0 %v4715
    %v4827 = vpop.f32.mrf.mxu0
    %v4828 = vadd.f32 0.0, %v4827
    %4829 = vmatmul.f32.gmra.mxu0 %v4718
    %v4830 = vpop.f32.mrf.mxu0
    %v4831 = vadd.f32 0.0, %v4830
    %4832 = vmatmul.f32.gmra.mxu0 %v4721
    %v4833 = vpop.f32.mrf.mxu0
    %v4834 = vadd.f32 0.0, %v4833
    %4835 = vmatmul.f32.gmra.mxu0 %v4724
    %v4836 = vpop.f32.mrf.mxu0
    %v4837 = vadd.f32 0.0, %v4836
    %4838 = vmatmul.f32.gmra.mxu0 %v4727
    %v4839 = vpop.f32.mrf.mxu0
    %v4840 = vadd.f32 0.0, %v4839
    %4841 = vmatmul.f32.gmra.mxu0 %v4730
    %v4842 = vpop.f32.mrf.mxu0
    %v4843 = vadd.f32 0.0, %v4842
    %4844 = vmatmul.f32.gmra.mxu0 %v4733
    %v4845 = vpop.f32.mrf.mxu0
    %v4846 = vadd.f32 0.0, %v4845
    %4847 = vmatmul.f32.gmra.mxu0 %v4736
    %v4848 = vpop.f32.mrf.mxu0
    %v4849 = vadd.f32 0.0, %v4848
    %4850 = vmatmul.f32.gmra.mxu0 %v4739
    %v4851 = vpop.f32.mrf.mxu0
    %v4852 = vadd.f32 0.0, %v4851
    %4853 = vmatmul.f32.gmra.mxu0 %v4742
    %v4854 = vpop.f32.mrf.mxu0
    %v4855 = vadd.f32 0.0, %v4854
    %4856 = vmatmul.f32.gmra.mxu0 %v4745
    %v4857 = vpop.f32.mrf.mxu0
    %v4858 = vadd.f32 0.0, %v4857
    %4859 = vmatmul.f32.gmra.mxu0 %v4748
    %v4860 = vpop.f32.mrf.mxu0
    %v4861 = vadd.f32 0.0, %v4860
    %4862 = vmatmul.f32.gmra.mxu0 %v4751
    %v4863 = vpop.f32.mrf.mxu0
    %v4864 = vadd.f32 0.0, %v4863
    %4865 = vmatmul.f32.gmra.mxu0 %v4754
    %v4866 = vpop.f32.mrf.mxu0
    %v4867 = vadd.f32 0.0, %v4866
    %4868 = vmatmul.f32.gmra.mxu0 %v4757
    %v4869 = vpop.f32.mrf.mxu0
    %v4870 = vadd.f32 0.0, %v4869
    %4871 = vmatmul.f32.gmra.mxu0 %v4760
    %v4872 = vpop.f32.mrf.mxu0
    %v4873 = vadd.f32 0.0, %v4872
    %4874 = vmatmul.f32.gmra.mxu0 %v4763
    %v4875 = vpop.f32.mrf.mxu0
    %v4876 = vadd.f32 0.0, %v4875
    %4877 = vmatmul.f32.gmra.mxu0 %v4766
    %v4878 = vpop.f32.mrf.mxu0
    %v4879 = vadd.f32 0.0, %v4878
    %4880 = vmatmul.f32.gmra.mxu0 %v4769
    %v4881 = vpop.f32.mrf.mxu0
    %v4882 = vadd.f32 0.0, %v4881
    %4883 = vmatmul.f32.gmra.mxu0 %v4772
    %v4884 = vpop.f32.mrf.mxu0
    %v4885 = vadd.f32 0.0, %v4884
    %4886 = vmatmul.f32.gmra.mxu0 %v4775
    %v4887 = vpop.f32.mrf.mxu0
    %v4888 = vadd.f32 0.0, %v4887
    %4889 = vmatmul.f32.gmra.mxu0 %v4778
    %v4890 = vpop.f32.mrf.mxu0
    %v4891 = vadd.f32 0.0, %v4890
    %4892 = vmatmul.f32.gmra.mxu0 %v4781
    %v4893 = vpop.f32.mrf.mxu0
    %v4894 = vadd.f32 0.0, %v4893
    %4895 = vmatmul.f32.gmra.mxu0 %v4784
    %v4896 = vpop.f32.mrf.mxu0
    %v4897 = vadd.f32 0.0, %v4896
    %4898 = vdwg.mxu0
    %v4899 = vmul.f32 %v4804, %v3797
    %v4900 = vmul.f32 %v4807, %v3800
    %v4901 = vmul.f32 %v4810, %v3797
    %v4902 = vmul.f32 %v4813, %v3800
    %v4903 = vmul.f32 %v4816, %v3797
    %v4904 = vmul.f32 %v4819, %v3800
    %v4905 = vmul.f32 %v4822, %v3797
    %v4906 = vmul.f32 %v4825, %v3800
    %v4907 = vmul.f32 %v4828, %v3797
    %v4908 = vmul.f32 %v4831, %v3800
    %v4909 = vmul.f32 %v4834, %v3797
    %v4910 = vmul.f32 %v4837, %v3800
    %v4911 = vmul.f32 %v4840, %v3797
    %v4912 = vmul.f32 %v4843, %v3800
    %v4913 = vmul.f32 %v4846, %v3797
    %v4914 = vmul.f32 %v4849, %v3800
    %v4915 = vmul.f32 %v4852, %v3797
    %v4916 = vmul.f32 %v4855, %v3800
    %v4917 = vmul.f32 %v4858, %v3797
    %v4918 = vmul.f32 %v4861, %v3800
    %v4919 = vmul.f32 %v4864, %v3797
    %v4920 = vmul.f32 %v4867, %v3800
    %v4921 = vmul.f32 %v4870, %v3797
    %v4922 = vmul.f32 %v4873, %v3800
    %v4923 = vmul.f32 %v4876, %v3797
    %v4924 = vmul.f32 %v4879, %v3800
    %v4925 = vmul.f32 %v4882, %v3797
    %v4926 = vmul.f32 %v4885, %v3800
    %v4927 = vmul.f32 %v4888, %v3797
    %v4928 = vmul.f32 %v4891, %v3800
    %v4929 = vmul.f32 %v4894, %v3797
    %v4930 = vmul.f32 %v4897, %v3800
    %v4931 = vsel %vm880, %v4899, 0.0
    %v4932 = vsel %vm880, %v4900, 0.0
    %v4933 = vadd.f32 %v4931, %v4932
    %v4934 = vrot.slane %v4933, 4
    %v4935 = vadd.f32 %v4933, %v4934
    %v4936 = vrot.slane %v4935, 2
    %v4937 = vadd.f32 %v4935, %v4936
    %v4938 = vrot.slane %v4937, 1
    %v4939 = vadd.f32 %v4937, %v4938
    %v4940 = vsel %vm880, %v4901, 0.0
    %v4941 = vsel %vm880, %v4902, 0.0
    %v4942 = vadd.f32 %v4940, %v4941
    %v4943 = vrot.slane %v4942, 4
    %v4944 = vadd.f32 %v4942, %v4943
    %v4945 = vrot.slane %v4944, 2
    %v4946 = vadd.f32 %v4944, %v4945
    %v4947 = vrot.slane %v4946, 1
    %v4948 = vadd.f32 %v4946, %v4947
    %v4949 = vsel %vm880, %v4903, 0.0
    %v4950 = vsel %vm880, %v4904, 0.0
    %v4951 = vadd.f32 %v4949, %v4950
    %v4952 = vrot.slane %v4951, 4
    %v4953 = vadd.f32 %v4951, %v4952
    %v4954 = vrot.slane %v4953, 2
    %v4955 = vadd.f32 %v4953, %v4954
    %v4956 = vrot.slane %v4955, 1
    %v4957 = vadd.f32 %v4955, %v4956
    %v4958 = vsel %vm880, %v4905, 0.0
    %v4959 = vsel %vm880, %v4906, 0.0
    %v4960 = vadd.f32 %v4958, %v4959
    %v4961 = vrot.slane %v4960, 4
    %v4962 = vadd.f32 %v4960, %v4961
    %v4963 = vrot.slane %v4962, 2
    %v4964 = vadd.f32 %v4962, %v4963
    %v4965 = vrot.slane %v4964, 1
    %v4966 = vadd.f32 %v4964, %v4965
    %v4967 = vsel %vm880, %v4907, 0.0
    %v4968 = vsel %vm880, %v4908, 0.0
    %v4969 = vadd.f32 %v4967, %v4968
    %v4970 = vrot.slane %v4969, 4
    %v4971 = vadd.f32 %v4969, %v4970
    %v4972 = vrot.slane %v4971, 2
    %v4973 = vadd.f32 %v4971, %v4972
    %v4974 = vrot.slane %v4973, 1
    %v4975 = vadd.f32 %v4973, %v4974
    %v4976 = vsel %vm880, %v4909, 0.0
    %v4977 = vsel %vm880, %v4910, 0.0
    %v4978 = vadd.f32 %v4976, %v4977
    %v4979 = vrot.slane %v4978, 4
    %v4980 = vadd.f32 %v4978, %v4979
    %v4981 = vrot.slane %v4980, 2
    %v4982 = vadd.f32 %v4980, %v4981
    %v4983 = vrot.slane %v4982, 1
    %v4984 = vadd.f32 %v4982, %v4983
    %v4985 = vsel %vm880, %v4911, 0.0
    %v4986 = vsel %vm880, %v4912, 0.0
    %v4987 = vadd.f32 %v4985, %v4986
    %v4988 = vrot.slane %v4987, 4
    %v4989 = vadd.f32 %v4987, %v4988
    %v4990 = vrot.slane %v4989, 2
    %v4991 = vadd.f32 %v4989, %v4990
    %v4992 = vrot.slane %v4991, 1
    %v4993 = vadd.f32 %v4991, %v4992
    %v4994 = vsel %vm880, %v4913, 0.0
    %v4995 = vsel %vm880, %v4914, 0.0
    %v4996 = vadd.f32 %v4994, %v4995
    %v4997 = vrot.slane %v4996, 4
    %v4998 = vadd.f32 %v4996, %v4997
    %v4999 = vrot.slane %v4998, 2
    %v5000 = vadd.f32 %v4998, %v4999
    %v5001 = vrot.slane %v5000, 1
    %v5002 = vadd.f32 %v5000, %v5001
    %v5003 = vsel %vm880, %v4915, 0.0
    %v5004 = vsel %vm880, %v4916, 0.0
    %v5005 = vadd.f32 %v5003, %v5004
    %v5006 = vrot.slane %v5005, 4
    %v5007 = vadd.f32 %v5005, %v5006
    %v5008 = vrot.slane %v5007, 2
    %v5009 = vadd.f32 %v5007, %v5008
    %v5010 = vrot.slane %v5009, 1
    %v5011 = vadd.f32 %v5009, %v5010
    %v5012 = vsel %vm880, %v4917, 0.0
    %v5013 = vsel %vm880, %v4918, 0.0
    %v5014 = vadd.f32 %v5012, %v5013
    %v5015 = vrot.slane %v5014, 4
    %v5016 = vadd.f32 %v5014, %v5015
    %v5017 = vrot.slane %v5016, 2
    %v5018 = vadd.f32 %v5016, %v5017
    %v5019 = vrot.slane %v5018, 1
    %v5020 = vadd.f32 %v5018, %v5019
    %v5021 = vsel %vm880, %v4919, 0.0
    %v5022 = vsel %vm880, %v4920, 0.0
    %v5023 = vadd.f32 %v5021, %v5022
    %v5024 = vrot.slane %v5023, 4
    %v5025 = vadd.f32 %v5023, %v5024
    %v5026 = vrot.slane %v5025, 2
    %v5027 = vadd.f32 %v5025, %v5026
    %v5028 = vrot.slane %v5027, 1
    %v5029 = vadd.f32 %v5027, %v5028
    %v5030 = vsel %vm880, %v4921, 0.0
    %v5031 = vsel %vm880, %v4922, 0.0
    %v5032 = vadd.f32 %v5030, %v5031
    %v5033 = vrot.slane %v5032, 4
    %v5034 = vadd.f32 %v5032, %v5033
    %v5035 = vrot.slane %v5034, 2
    %v5036 = vadd.f32 %v5034, %v5035
    %v5037 = vrot.slane %v5036, 1
    %v5038 = vadd.f32 %v5036, %v5037
    %v5039 = vsel %vm880, %v4923, 0.0
    %v5040 = vsel %vm880, %v4924, 0.0
    %v5041 = vadd.f32 %v5039, %v5040
    %v5042 = vrot.slane %v5041, 4
    %v5043 = vadd.f32 %v5041, %v5042
    %v5044 = vrot.slane %v5043, 2
    %v5045 = vadd.f32 %v5043, %v5044
    %v5046 = vrot.slane %v5045, 1
    %v5047 = vadd.f32 %v5045, %v5046
    %v5048 = vsel %vm880, %v4925, 0.0
    %v5049 = vsel %vm880, %v4926, 0.0
    %v5050 = vadd.f32 %v5048, %v5049
    %v5051 = vrot.slane %v5050, 4
    %v5052 = vadd.f32 %v5050, %v5051
    %v5053 = vrot.slane %v5052, 2
    %v5054 = vadd.f32 %v5052, %v5053
    %v5055 = vrot.slane %v5054, 1
    %v5056 = vadd.f32 %v5054, %v5055
    %v5057 = vsel %vm880, %v4927, 0.0
    %v5058 = vsel %vm880, %v4928, 0.0
    %v5059 = vadd.f32 %v5057, %v5058
    %v5060 = vrot.slane %v5059, 4
    %v5061 = vadd.f32 %v5059, %v5060
    %v5062 = vrot.slane %v5061, 2
    %v5063 = vadd.f32 %v5061, %v5062
    %v5064 = vrot.slane %v5063, 1
    %v5065 = vadd.f32 %v5063, %v5064
    %v5066 = vsel %vm880, %v4929, 0.0
    %v5067 = vsel %vm880, %v4930, 0.0
    %v5068 = vadd.f32 %v5066, %v5067
    %v5069 = vrot.slane %v5068, 4
    %v5070 = vadd.f32 %v5068, %v5069
    %v5071 = vrot.slane %v5070, 2
    %v5072 = vadd.f32 %v5070, %v5071
    %v5073 = vrot.slane %v5072, 1
    %v5074 = vadd.f32 %v5072, %v5073
    %v5076 = vperm.slane %v3725, 0
    %v5078 = vadd.f32 %v4939, %v5076
    %v5079 = vadd.f32 %v4948, %v5076
    %v5080 = vadd.f32 %v4957, %v5076
    %v5081 = vadd.f32 %v4966, %v5076
    %v5082 = vadd.f32 %v4975, %v5076
    %v5083 = vadd.f32 %v4984, %v5076
    %v5084 = vadd.f32 %v4993, %v5076
    %v5085 = vadd.f32 %v5002, %v5076
    %v5086 = vadd.f32 %v5011, %v5076
    %v5087 = vadd.f32 %v5020, %v5076
    %v5088 = vadd.f32 %v5029, %v5076
    %v5089 = vadd.f32 %v5038, %v5076
    %v5090 = vadd.f32 %v5047, %v5076
    %v5091 = vadd.f32 %v5056, %v5076
    %v5092 = vadd.f32 %v5065, %v5076
    %v5093 = vadd.f32 %v5074, %v5076
    %v5095 = vperm.slane %v3726, 0
    %v5097 = vmul.f32 %v5078, %v5095
    %v5098 = vmul.f32 %v5079, %v5095
    %v5099 = vmul.f32 %v5080, %v5095
    %v5100 = vmul.f32 %v5081, %v5095
    %v5101 = vmul.f32 %v5082, %v5095
    %v5102 = vmul.f32 %v5083, %v5095
    %v5103 = vmul.f32 %v5084, %v5095
    %v5104 = vmul.f32 %v5085, %v5095
    %v5105 = vmul.f32 %v5086, %v5095
    %v5106 = vmul.f32 %v5087, %v5095
    %v5107 = vmul.f32 %v5088, %v5095
    %v5108 = vmul.f32 %v5089, %v5095
    %v5109 = vmul.f32 %v5090, %v5095
    %v5110 = vmul.f32 %v5091, %v5095
    %v5111 = vmul.f32 %v5092, %v5095
    %v5112 = vmul.f32 %v5093, %v5095
    %v5114 = vperm.slane %v3727, 0
    %v5116 = vadd.f32 %v5097, %v5114
    %v5117 = vadd.f32 %v5098, %v5114
    %v5118 = vadd.f32 %v5099, %v5114
    %v5119 = vadd.f32 %v5100, %v5114
    %v5120 = vadd.f32 %v5101, %v5114
    %v5121 = vadd.f32 %v5102, %v5114
    %v5122 = vadd.f32 %v5103, %v5114
    %v5123 = vadd.f32 %v5104, %v5114
    %v5124 = vadd.f32 %v5105, %v5114
    %v5125 = vadd.f32 %v5106, %v5114
    %v5126 = vadd.f32 %v5107, %v5114
    %v5127 = vadd.f32 %v5108, %v5114
    %v5128 = vadd.f32 %v5109, %v5114
    %v5129 = vadd.f32 %v5110, %v5114
    %v5130 = vadd.f32 %v5111, %v5114
    %v5131 = vadd.f32 %v5112, %v5114
    %vm5132 = vcmp.gt.f32.partialorder %v5116, 0.0
    %vm5133 = vcmp.gt.f32.partialorder %v5117, 0.0
    %vm5134 = vcmp.gt.f32.partialorder %v5118, 0.0
    %vm5135 = vcmp.gt.f32.partialorder %v5119, 0.0
    %vm5136 = vcmp.gt.f32.partialorder %v5120, 0.0
    %vm5137 = vcmp.gt.f32.partialorder %v5121, 0.0
    %vm5138 = vcmp.gt.f32.partialorder %v5122, 0.0
    %vm5139 = vcmp.gt.f32.partialorder %v5123, 0.0
    %vm5140 = vcmp.gt.f32.partialorder %v5124, 0.0
    %vm5141 = vcmp.gt.f32.partialorder %v5125, 0.0
    %vm5142 = vcmp.gt.f32.partialorder %v5126, 0.0
    %vm5143 = vcmp.gt.f32.partialorder %v5127, 0.0
    %vm5144 = vcmp.gt.f32.partialorder %v5128, 0.0
    %vm5145 = vcmp.gt.f32.partialorder %v5129, 0.0
    %vm5146 = vcmp.gt.f32.partialorder %v5130, 0.0
    %vm5147 = vcmp.gt.f32.partialorder %v5131, 0.0
    %v5148 = vmin.f32 %v5116, 0.0
    %v5149 = vmin.f32 %v5117, 0.0
    %v5150 = vmin.f32 %v5118, 0.0
    %v5151 = vmin.f32 %v5119, 0.0
    %v5152 = vmin.f32 %v5120, 0.0
    %v5153 = vmin.f32 %v5121, 0.0
    %v5154 = vmin.f32 %v5122, 0.0
    %v5155 = vmin.f32 %v5123, 0.0
    %v5156 = vmin.f32 %v5124, 0.0
    %v5157 = vmin.f32 %v5125, 0.0
    %v5158 = vmin.f32 %v5126, 0.0
    %v5159 = vmin.f32 %v5127, 0.0
    %v5160 = vmin.f32 %v5128, 0.0
    %v5161 = vmin.f32 %v5129, 0.0
    %v5162 = vmin.f32 %v5130, 0.0
    %v5163 = vmin.f32 %v5131, 0.0
    %v5164 = vmul.f32 %v5148, 1.442695
    %v5165 = vpow.pop %v5164
    %v5166 = vmul.f32 %v5149, 1.442695
    %v5167 = vpow.pop %v5166
    %v5168 = vmul.f32 %v5150, 1.442695
    %v5169 = vpow.pop %v5168
    %v5170 = vmul.f32 %v5151, 1.442695
    %v5171 = vpow.pop %v5170
    %v5172 = vmul.f32 %v5152, 1.442695
    %v5173 = vpow.pop %v5172
    %v5174 = vmul.f32 %v5153, 1.442695
    %v5175 = vpow.pop %v5174
    %v5176 = vmul.f32 %v5154, 1.442695
    %v5177 = vpow.pop %v5176
    %v5178 = vmul.f32 %v5155, 1.442695
    %v5179 = vpow.pop %v5178
    %v5180 = vmul.f32 %v5156, 1.442695
    %v5181 = vpow.pop %v5180
    %v5182 = vmul.f32 %v5157, 1.442695
    %v5183 = vpow.pop %v5182
    %v5184 = vmul.f32 %v5158, 1.442695
    %v5185 = vpow.pop %v5184
    %v5186 = vmul.f32 %v5159, 1.442695
    %v5187 = vpow.pop %v5186
    %v5188 = vmul.f32 %v5160, 1.442695
    %v5189 = vpow.pop %v5188
    %v5190 = vmul.f32 %v5161, 1.442695
    %v5191 = vpow.pop %v5190
    %v5192 = vmul.f32 %v5162, 1.442695
    %v5193 = vpow.pop %v5192
    %v5194 = vmul.f32 %v5163, 1.442695
    %v5195 = vpow.pop %v5194
    %v5196 = vsub.f32 %v5165, 1.0
    %v5197 = vsub.f32 %v5167, 1.0
    %v5198 = vsub.f32 %v5169, 1.0
    %v5199 = vsub.f32 %v5171, 1.0
    %v5200 = vsub.f32 %v5173, 1.0
    %v5201 = vsub.f32 %v5175, 1.0
    %v5202 = vsub.f32 %v5177, 1.0
    %v5203 = vsub.f32 %v5179, 1.0
    %v5204 = vsub.f32 %v5181, 1.0
    %v5205 = vsub.f32 %v5183, 1.0
    %v5206 = vsub.f32 %v5185, 1.0
    %v5207 = vsub.f32 %v5187, 1.0
    %v5208 = vsub.f32 %v5189, 1.0
    %v5209 = vsub.f32 %v5191, 1.0
    %v5210 = vsub.f32 %v5193, 1.0
    %v5211 = vsub.f32 %v5195, 1.0
    %v5212 = vsel %vm5132, %v5116, %v5196
    %v5213 = vsel %vm5133, %v5117, %v5197
    %v5214 = vsel %vm5134, %v5118, %v5198
    %v5215 = vsel %vm5135, %v5119, %v5199
    %v5216 = vsel %vm5136, %v5120, %v5200
    %v5217 = vsel %vm5137, %v5121, %v5201
    %v5218 = vsel %vm5138, %v5122, %v5202
    %v5219 = vsel %vm5139, %v5123, %v5203
    %v5220 = vsel %vm5140, %v5124, %v5204
    %v5221 = vsel %vm5141, %v5125, %v5205
    %v5222 = vsel %vm5142, %v5126, %v5206
    %v5223 = vsel %vm5143, %v5127, %v5207
    %v5224 = vsel %vm5144, %v5128, %v5208
    %v5225 = vsel %vm5145, %v5129, %v5209
    %v5226 = vsel %vm5146, %v5130, %v5210
    %v5227 = vsel %vm5147, %v5131, %v5211
    %v5228 = vld [vmem:[%s7] sm:$0x3]
    %v5245 = vrot.slane %v5213, 7
    %v5246 = vsel %vm2223, %v5245, %v5212
    %v5247 = vrot.slane %v5214, 6
    %v5248 = vsel %vm2226, %v5247, %v5246
    %v5249 = vrot.slane %v5215, 5
    %v5250 = vsel %vm2229, %v5249, %v5248
    %v5251 = vrot.slane %v5216, 4
    %v5252 = vsel %vm2232, %v5251, %v5250
    %v5253 = vrot.slane %v5217, 3
    %v5254 = vsel %vm2235, %v5253, %v5252
    %v5255 = vrot.slane %v5218, 2
    %v5256 = vsel %vm2238, %v5255, %v5254
    %v5257 = vrot.slane %v5219, 1
    %v5258 = vsel %vm2241, %v5257, %v5256
    %v5259 = vrot.slane %v5221, 7
    %v5260 = vsel %vm2223, %v5259, %v5220
    %v5261 = vrot.slane %v5222, 6
    %v5262 = vsel %vm2226, %v5261, %v5260
    %v5263 = vrot.slane %v5223, 5
    %v5264 = vsel %vm2229, %v5263, %v5262
    %v5265 = vrot.slane %v5224, 4
    %v5266 = vsel %vm2232, %v5265, %v5264
    %v5267 = vrot.slane %v5225, 3
    %v5268 = vsel %vm2235, %v5267, %v5266
    %v5269 = vrot.slane %v5226, 2
    %v5270 = vsel %vm2238, %v5269, %v5268
    %v5271 = vrot.slane %v5227, 1
    %v5272 = vsel %vm2241, %v5271, %v5270
    %v5276 = vsel %vm403, %v5228, 0
    %5278 = vmatpush.msra.mxu0 0.0
    %5279 = vmatpush.msra.mxu0 0.0
    %5280 = vmatpush.msra.mxu0 0.0
    %5281 = vmatpush.msra.mxu0 0.0
    %5282 = vmatpush.msra.mxu0 0.0
    %5283 = vmatpush.msra.mxu0 0.0
    %5284 = vmatpush.msra.mxu0 0.0
    %5285 = vmatpush.msra.mxu0 0.0
    %5286 = vmatpush.msra.mxu0 0.0
    %5287 = vmatpush.msra.mxu0 0.0
    %5288 = vmatpush.msra.mxu0 0.0
    %5289 = vmatpush.msra.mxu0 0.0
    %5290 = vmatpush.msra.mxu0 0.0
    %5291 = vmatpush.msra.mxu0 0.0
    %5292 = vmatpush.msra.mxu0 %v5272
    %5293 = vmatpush.msra.mxu0 %v5258
    %5294 = vmatmul.f32.gmra.mxu0 %v5276
    %v5295 = vpop.f32.mrf.mxu0
    %v5296 = vadd.f32 0.0, %v5295
    %5297 = vdwg.mxu0
    %v5298 = vld [vmem:[%s9] sm:$0xff]
    %v5299 = vld [vmem:[%s9 + $0x8] sm:$0xf]
    %5302 = vst [vmem:[#allocation1] ss:$4 sm:$0xff] %v5298
    %s5303 = scalar_lea.vmem [#allocation1], 32
    %5304 = vst [vmem:[%s5303] ss:$4 sm:$0xff] %v5299
    %v5305 = vld.sshfl [vmem:[#allocation1] sm:$0xff pattern:$0x73625140]
    %v5306 = vld.sshfl [vmem:[#allocation1 + $0x8] sm:$0xff pattern:$0x73625140]
    %v5307 = vld.sshfl [vmem:[#allocation1 + $0x10] sm:$0xff pattern:$0x73625140]
    %v5308 = vld.sshfl [vmem:[#allocation1 + $0x18] sm:$0xff pattern:$0x73625140]
    %v5309 = vld.sshfl [vmem:[#allocation1 + $0x20] sm:$0xff pattern:$0x73625140]
    %v5310 = vld.sshfl [vmem:[#allocation1 + $0x28] sm:$0xff pattern:$0x73625140]
    %v5317 = vpack.c.bf16 %v5305, %v5305
    %v5318 = vpack.c.bf16 %v5306, %v5306
    %v5319 = vpack.c.bf16 %v5307, %v5307
    %v5320 = vpack.c.bf16 %v5308, %v5308
    %v5321 = vpack.c.bf16 %v5309, %v5309
    %v5322 = vpack.c.bf16 %v5310, %v5310
    %v5323 = vld [vmem:[%s69] sm:$0xf]
    %v5324 = vld [vmem:[%s69 + $0x4] sm:$0xf]
    %v5325 = vld [vmem:[%s69 + $0x8] sm:$0xf]
    %v5326 = vld [vmem:[%s69 + $0xc] sm:$0xf]
    %v5327 = vld [vmem:[%s69 + $0x10] sm:$0xf]
    %v5328 = vld [vmem:[%s69 + $0x14] sm:$0xf]
    %v5329 = vld [vmem:[%s69 + $0x18] sm:$0xf]
    %v5330 = vld [vmem:[%s69 + $0x1c] sm:$0xf]
    %v5331 = vld [vmem:[%s69 + $0x20] sm:$0xf]
    %v5332 = vld [vmem:[%s69 + $0x24] sm:$0xf]
    %v5333 = vld [vmem:[%s69 + $0x28] sm:$0xf]
    %v5334 = vld [vmem:[%s69 + $0x2c] sm:$0xf]
    %v5335 = vld [vmem:[%s69 + $0x30] sm:$0xf]
    %v5336 = vld [vmem:[%s69 + $0x34] sm:$0xf]
    %v5337 = vld [vmem:[%s69 + $0x38] sm:$0xf]
    %v5338 = vld [vmem:[%s69 + $0x3c] sm:$0xf]
    %v5339 = vld [vmem:[%s69 + $0x40] sm:$0xf]
    %v5340 = vld [vmem:[%s69 + $0x44] sm:$0xf]
    %v5341 = vld [vmem:[%s69 + $0x48] sm:$0xf]
    %v5342 = vld [vmem:[%s69 + $0x4c] sm:$0xf]
    %v5343 = vld [vmem:[%s69 + $0x50] sm:$0xf]
    %v5344 = vld [vmem:[%s69 + $0x54] sm:$0xf]
    %v5345 = vld [vmem:[%s69 + $0x58] sm:$0xf]
    %v5346 = vld [vmem:[%s69 + $0x5c] sm:$0xf]
    %v5347 = vld [vmem:[%s69 + $0x60] sm:$0xf]
    %v5348 = vld [vmem:[%s69 + $0x64] sm:$0xf]
    %v5349 = vld [vmem:[%s69 + $0x68] sm:$0xf]
    %v5350 = vld [vmem:[%s69 + $0x6c] sm:$0xf]
    %v5351 = vld [vmem:[%s69 + $0x70] sm:$0xf]
    %v5352 = vld [vmem:[%s69 + $0x74] sm:$0xf]
    %v5353 = vld [vmem:[%s69 + $0x78] sm:$0xf]
    %v5354 = vld [vmem:[%s69 + $0x7c] sm:$0xf]
    %v5355 = vld [vmem:[%s69 + $0x80] sm:$0xf]
    %v5356 = vld [vmem:[%s69 + $0x84] sm:$0xf]
    %v5357 = vld [vmem:[%s69 + $0x88] sm:$0xf]
    %v5358 = vld [vmem:[%s69 + $0x8c] sm:$0xf]
    %v5359 = vld [vmem:[%s69 + $0x90] sm:$0xf]
    %v5360 = vld [vmem:[%s69 + $0x94] sm:$0xf]
    %v5361 = vld [vmem:[%s69 + $0x98] sm:$0xf]
    %v5362 = vld [vmem:[%s69 + $0x9c] sm:$0xf]
    %v5363 = vld [vmem:[%s69 + $0xa0] sm:$0xf]
    %v5364 = vld [vmem:[%s69 + $0xa4] sm:$0xf]
    %v5365 = vld [vmem:[%s69 + $0xa8] sm:$0xf]
    %v5366 = vld [vmem:[%s69 + $0xac] sm:$0xf]
    %v5367 = vld [vmem:[%s69 + $0xb0] sm:$0xf]
    %v5368 = vld [vmem:[%s69 + $0xb4] sm:$0xf]
    %v5369 = vld [vmem:[%s69 + $0xb8] sm:$0xf]
    %v5370 = vld [vmem:[%s69 + $0xbc] sm:$0xf]
    %v5371 = vld [vmem:[%s69 + $0xc0] sm:$0xf]
    %v5372 = vld [vmem:[%s69 + $0xc4] sm:$0xf]
    %v5373 = vld [vmem:[%s69 + $0xc8] sm:$0xf]
    %v5374 = vld [vmem:[%s69 + $0xcc] sm:$0xf]
    %v5375 = vld [vmem:[%s69 + $0xd0] sm:$0xf]
    %v5376 = vld [vmem:[%s69 + $0xd4] sm:$0xf]
    %v5377 = vld [vmem:[%s69 + $0xd8] sm:$0xf]
    %v5378 = vld [vmem:[%s69 + $0xdc] sm:$0xf]
    %v5379 = vld [vmem:[%s69 + $0xe0] sm:$0xf]
    %v5380 = vld [vmem:[%s69 + $0xe4] sm:$0xf]
    %v5381 = vld [vmem:[%s69 + $0xe8] sm:$0xf]
    %v5382 = vld [vmem:[%s69 + $0xec] sm:$0xf]
    %v5383 = vld [vmem:[%s69 + $0xf0] sm:$0xf]
    %v5384 = vld [vmem:[%s69 + $0xf4] sm:$0xf]
    %v5385 = vld [vmem:[%s69 + $0xf8] sm:$0xf]
    %v5386 = vld [vmem:[%s69 + $0xfc] sm:$0xf]
    %v5387 = vld [vmem:[%s69 + $0x100] sm:$0xf]
    %v5388 = vld [vmem:[%s69 + $0x104] sm:$0xf]
    %v5389 = vld [vmem:[%s69 + $0x108] sm:$0xf]
    %v5390 = vld [vmem:[%s69 + $0x10c] sm:$0xf]
    %v5391 = vld [vmem:[%s69 + $0x110] sm:$0xf]
    %v5392 = vld [vmem:[%s69 + $0x114] sm:$0xf]
    %v5393 = vld [vmem:[%s69 + $0x118] sm:$0xf]
    %v5394 = vld [vmem:[%s69 + $0x11c] sm:$0xf]
    %v5395 = vld [vmem:[%s69 + $0x120] sm:$0xf]
    %v5396 = vld [vmem:[%s69 + $0x124] sm:$0xf]
    %v5397 = vld [vmem:[%s69 + $0x128] sm:$0xf]
    %v5398 = vld [vmem:[%s69 + $0x12c] sm:$0xf]
    %v5399 = vld [vmem:[%s69 + $0x130] sm:$0xf]
    %v5400 = vld [vmem:[%s69 + $0x134] sm:$0xf]
    %v5401 = vld [vmem:[%s69 + $0x138] sm:$0xf]
    %v5402 = vld [vmem:[%s69 + $0x13c] sm:$0xf]
    %v5403 = vld [vmem:[%s69 + $0x140] sm:$0xf]
    %v5404 = vld [vmem:[%s69 + $0x144] sm:$0xf]
    %v5405 = vld [vmem:[%s69 + $0x148] sm:$0xf]
    %v5406 = vld [vmem:[%s69 + $0x14c] sm:$0xf]
    %v5407 = vld [vmem:[%s69 + $0x150] sm:$0xf]
    %v5408 = vld [vmem:[%s69 + $0x154] sm:$0xf]
    %v5409 = vld [vmem:[%s69 + $0x158] sm:$0xf]
    %v5410 = vld [vmem:[%s69 + $0x15c] sm:$0xf]
    %v5411 = vld [vmem:[%s69 + $0x160] sm:$0xf]
    %v5412 = vld [vmem:[%s69 + $0x164] sm:$0xf]
    %v5413 = vld [vmem:[%s69 + $0x168] sm:$0xf]
    %v5414 = vld [vmem:[%s69 + $0x16c] sm:$0xf]
    %v5415 = vld [vmem:[%s69 + $0x170] sm:$0xf]
    %v5416 = vld [vmem:[%s69 + $0x174] sm:$0xf]
    %v5417 = vld [vmem:[%s69 + $0x178] sm:$0xf]
    %v5418 = vld [vmem:[%s69 + $0x17c] sm:$0xf]
    %v5419 = vld [vmem:[%s71] sm:$0x1]
    %v5421 = vperm.slane %v5419, 0
    %v5519 = vunpack.c.l.b16 %v5323
    %v5520 = vunpack.c.l.b16 %v5324
    %v5521 = vunpack.c.l.b16 %v5325
    %v5522 = vunpack.c.l.b16 %v5326
    %v5523 = vunpack.c.l.b16 %v5327
    %v5524 = vunpack.c.l.b16 %v5328
    %v5525 = vunpack.c.l.b16 %v5329
    %v5526 = vunpack.c.l.b16 %v5330
    %v5527 = vunpack.c.l.b16 %v5331
    %v5528 = vunpack.c.l.b16 %v5332
    %v5529 = vunpack.c.l.b16 %v5333
    %v5530 = vunpack.c.l.b16 %v5334
    %v5531 = vunpack.c.l.b16 %v5335
    %v5532 = vunpack.c.l.b16 %v5336
    %v5533 = vunpack.c.l.b16 %v5337
    %v5534 = vunpack.c.l.b16 %v5338
    %v5535 = vunpack.c.l.b16 %v5339
    %v5536 = vunpack.c.l.b16 %v5340
    %v5537 = vunpack.c.l.b16 %v5341
    %v5538 = vunpack.c.l.b16 %v5342
    %v5539 = vunpack.c.l.b16 %v5343
    %v5540 = vunpack.c.l.b16 %v5344
    %v5541 = vunpack.c.l.b16 %v5345
    %v5542 = vunpack.c.l.b16 %v5346
    %v5543 = vunpack.c.l.b16 %v5347
    %v5544 = vunpack.c.l.b16 %v5348
    %v5545 = vunpack.c.l.b16 %v5349
    %v5546 = vunpack.c.l.b16 %v5350
    %v5547 = vunpack.c.l.b16 %v5351
    %v5548 = vunpack.c.l.b16 %v5352
    %v5549 = vunpack.c.l.b16 %v5353
    %v5550 = vunpack.c.l.b16 %v5354
    %v5551 = vunpack.c.l.b16 %v5355
    %v5552 = vunpack.c.l.b16 %v5356
    %v5553 = vunpack.c.l.b16 %v5357
    %v5554 = vunpack.c.l.b16 %v5358
    %v5555 = vunpack.c.l.b16 %v5359
    %v5556 = vunpack.c.l.b16 %v5360
    %v5557 = vunpack.c.l.b16 %v5361
    %v5558 = vunpack.c.l.b16 %v5362
    %v5559 = vunpack.c.l.b16 %v5363
    %v5560 = vunpack.c.l.b16 %v5364
    %v5561 = vunpack.c.l.b16 %v5365
    %v5562 = vunpack.c.l.b16 %v5366
    %v5563 = vunpack.c.l.b16 %v5367
    %v5564 = vunpack.c.l.b16 %v5368
    %v5565 = vunpack.c.l.b16 %v5369
    %v5566 = vunpack.c.l.b16 %v5370
    %v5567 = vunpack.c.l.b16 %v5371
    %v5568 = vunpack.c.l.b16 %v5372
    %v5569 = vunpack.c.l.b16 %v5373
    %v5570 = vunpack.c.l.b16 %v5374
    %v5571 = vunpack.c.l.b16 %v5375
    %v5572 = vunpack.c.l.b16 %v5376
    %v5573 = vunpack.c.l.b16 %v5377
    %v5574 = vunpack.c.l.b16 %v5378
    %v5575 = vunpack.c.l.b16 %v5379
    %v5576 = vunpack.c.l.b16 %v5380
    %v5577 = vunpack.c.l.b16 %v5381
    %v5578 = vunpack.c.l.b16 %v5382
    %v5579 = vunpack.c.l.b16 %v5383
    %v5580 = vunpack.c.l.b16 %v5384
    %v5581 = vunpack.c.l.b16 %v5385
    %v5582 = vunpack.c.l.b16 %v5386
    %v5583 = vunpack.c.l.b16 %v5387
    %v5584 = vunpack.c.l.b16 %v5388
    %v5585 = vunpack.c.l.b16 %v5389
    %v5586 = vunpack.c.l.b16 %v5390
    %v5587 = vunpack.c.l.b16 %v5391
    %v5588 = vunpack.c.l.b16 %v5392
    %v5589 = vunpack.c.l.b16 %v5393
    %v5590 = vunpack.c.l.b16 %v5394
    %v5591 = vunpack.c.l.b16 %v5395
    %v5592 = vunpack.c.l.b16 %v5396
    %v5593 = vunpack.c.l.b16 %v5397
    %v5594 = vunpack.c.l.b16 %v5398
    %v5595 = vunpack.c.l.b16 %v5399
    %v5596 = vunpack.c.l.b16 %v5400
    %v5597 = vunpack.c.l.b16 %v5401
    %v5598 = vunpack.c.l.b16 %v5402
    %v5599 = vunpack.c.l.b16 %v5403
    %v5600 = vunpack.c.l.b16 %v5404
    %v5601 = vunpack.c.l.b16 %v5405
    %v5602 = vunpack.c.l.b16 %v5406
    %v5603 = vunpack.c.l.b16 %v5407
    %v5604 = vunpack.c.l.b16 %v5408
    %v5605 = vunpack.c.l.b16 %v5409
    %v5606 = vunpack.c.l.b16 %v5410
    %v5607 = vunpack.c.l.b16 %v5411
    %v5608 = vunpack.c.l.b16 %v5412
    %v5609 = vunpack.c.l.b16 %v5413
    %v5610 = vunpack.c.l.b16 %v5414
    %v5611 = vunpack.c.l.b16 %v5415
    %v5612 = vunpack.c.l.b16 %v5416
    %v5613 = vunpack.c.l.b16 %v5417
    %v5614 = vunpack.c.l.b16 %v5418
    %v5615 = vpack.c.b16 %v5520, %v5519
    %v5616 = vpack.c.b16 %v5522, %v5521
    %v5617 = vpack.c.b16 %v5524, %v5523
    %v5618 = vpack.c.b16 %v5526, %v5525
    %v5619 = vpack.c.b16 %v5528, %v5527
    %v5620 = vpack.c.b16 %v5530, %v5529
    %v5621 = vpack.c.b16 %v5532, %v5531
    %v5622 = vpack.c.b16 %v5534, %v5533
    %v5623 = vpack.c.b16 %v5536, %v5535
    %v5624 = vpack.c.b16 %v5538, %v5537
    %v5625 = vpack.c.b16 %v5540, %v5539
    %v5626 = vpack.c.b16 %v5542, %v5541
    %v5627 = vpack.c.b16 %v5544, %v5543
    %v5628 = vpack.c.b16 %v5546, %v5545
    %v5629 = vpack.c.b16 %v5548, %v5547
    %v5630 = vpack.c.b16 %v5550, %v5549
    %v5631 = vpack.c.b16 %v5552, %v5551
    %v5632 = vpack.c.b16 %v5554, %v5553
    %v5633 = vpack.c.b16 %v5556, %v5555
    %v5634 = vpack.c.b16 %v5558, %v5557
    %v5635 = vpack.c.b16 %v5560, %v5559
    %v5636 = vpack.c.b16 %v5562, %v5561
    %v5637 = vpack.c.b16 %v5564, %v5563
    %v5638 = vpack.c.b16 %v5566, %v5565
    %v5639 = vpack.c.b16 %v5568, %v5567
    %v5640 = vpack.c.b16 %v5570, %v5569
    %v5641 = vpack.c.b16 %v5572, %v5571
    %v5642 = vpack.c.b16 %v5574, %v5573
    %v5643 = vpack.c.b16 %v5576, %v5575
    %v5644 = vpack.c.b16 %v5578, %v5577
    %v5645 = vpack.c.b16 %v5580, %v5579
    %v5646 = vpack.c.b16 %v5582, %v5581
    %v5647 = vpack.c.b16 %v5584, %v5583
    %v5648 = vpack.c.b16 %v5586, %v5585
    %v5649 = vpack.c.b16 %v5588, %v5587
    %v5650 = vpack.c.b16 %v5590, %v5589
    %v5651 = vpack.c.b16 %v5592, %v5591
    %v5652 = vpack.c.b16 %v5594, %v5593
    %v5653 = vpack.c.b16 %v5596, %v5595
    %v5654 = vpack.c.b16 %v5598, %v5597
    %v5655 = vpack.c.b16 %v5600, %v5599
    %v5656 = vpack.c.b16 %v5602, %v5601
    %v5657 = vpack.c.b16 %v5604, %v5603
    %v5658 = vpack.c.b16 %v5606, %v5605
    %v5659 = vpack.c.b16 %v5608, %v5607
    %v5660 = vpack.c.b16 %v5610, %v5609
    %v5661 = vpack.c.b16 %v5612, %v5611
    %v5662 = vpack.c.b16 %v5614, %v5613
    %5711 = vmatpush.bf16.msra.mxu0 %v5622
    %5712 = vmatpush.bf16.msra.mxu0 %v5621
    %5713 = vmatpush.bf16.msra.mxu0 %v5620
    %5714 = vmatpush.bf16.msra.mxu0 %v5619
    %5715 = vmatpush.bf16.msra.mxu0 %v5618
    %5716 = vmatpush.bf16.msra.mxu0 %v5617
    %5717 = vmatpush.bf16.msra.mxu0 %v5616
    %5718 = vmatpush.bf16.msra.mxu0 %v5615
    %5719 = vmatmul.bf16.gmra.mxu0 %v5317
    %v5720 = vpop.f32.mrf.mxu0
    %v5721 = vadd.f32 %v5421, %v5720
    %v5722 = vpop.f32.mrf.mxu0
    %5723 = vdwg.mxu0
    %5724 = vmatpush.bf16.msra.mxu0 %v5630
    %5725 = vmatpush.bf16.msra.mxu0 %v5629
    %5726 = vmatpush.bf16.msra.mxu0 %v5628
    %5727 = vmatpush.bf16.msra.mxu0 %v5627
    %5728 = vmatpush.bf16.msra.mxu0 %v5626
    %5729 = vmatpush.bf16.msra.mxu0 %v5625
    %5730 = vmatpush.bf16.msra.mxu0 %v5624
    %5731 = vmatpush.bf16.msra.mxu0 %v5623
    %5732 = vmatmul.bf16.gmra.mxu0 %v5318
    %v5733 = vpop.f32.mrf.mxu0
    %v5734 = vadd.f32 %v5721, %v5733
    %v5735 = vpop.f32.mrf.mxu0
    %5736 = vdwg.mxu0
    %5737 = vmatpush.bf16.msra.mxu0 %v5638
    %5738 = vmatpush.bf16.msra.mxu0 %v5637
    %5739 = vmatpush.bf16.msra.mxu0 %v5636
    %5740 = vmatpush.bf16.msra.mxu0 %v5635
    %5741 = vmatpush.bf16.msra.mxu0 %v5634
    %5742 = vmatpush.bf16.msra.mxu0 %v5633
    %5743 = vmatpush.bf16.msra.mxu0 %v5632
    %5744 = vmatpush.bf16.msra.mxu0 %v5631
    %5745 = vmatmul.bf16.gmra.mxu0 %v5319
    %v5746 = vpop.f32.mrf.mxu0
    %v5747 = vadd.f32 %v5734, %v5746
    %v5748 = vpop.f32.mrf.mxu0
    %5749 = vdwg.mxu0
    %5750 = vmatpush.bf16.msra.mxu0 %v5646
    %5751 = vmatpush.bf16.msra.mxu0 %v5645
    %5752 = vmatpush.bf16.msra.mxu0 %v5644
    %5753 = vmatpush.bf16.msra.mxu0 %v5643
    %5754 = vmatpush.bf16.msra.mxu0 %v5642
    %5755 = vmatpush.bf16.msra.mxu0 %v5641
    %5756 = vmatpush.bf16.msra.mxu0 %v5640
    %5757 = vmatpush.bf16.msra.mxu0 %v5639
    %5758 = vmatmul.bf16.gmra.mxu0 %v5320
    %v5759 = vpop.f32.mrf.mxu0
    %v5760 = vadd.f32 %v5747, %v5759
    %v5761 = vpop.f32.mrf.mxu0
    %5762 = vdwg.mxu0
    %5763 = vmatpush.bf16.msra.mxu0 %v5654
    %5764 = vmatpush.bf16.msra.mxu0 %v5653
    %5765 = vmatpush.bf16.msra.mxu0 %v5652
    %5766 = vmatpush.bf16.msra.mxu0 %v5651
    %5767 = vmatpush.bf16.msra.mxu0 %v5650
    %5768 = vmatpush.bf16.msra.mxu0 %v5649
    %5769 = vmatpush.bf16.msra.mxu0 %v5648
    %5770 = vmatpush.bf16.msra.mxu0 %v5647
    %5771 = vmatmul.bf16.gmra.mxu0 %v5321
    %v5772 = vpop.f32.mrf.mxu0
    %v5773 = vadd.f32 %v5760, %v5772
    %v5774 = vpop.f32.mrf.mxu0
    %5775 = vdwg.mxu0
    %5776 = vmatpush.bf16.msra.mxu0 %v5662
    %5777 = vmatpush.bf16.msra.mxu0 %v5661
    %5778 = vmatpush.bf16.msra.mxu0 %v5660
    %5779 = vmatpush.bf16.msra.mxu0 %v5659
    %5780 = vmatpush.bf16.msra.mxu0 %v5658
    %5781 = vmatpush.bf16.msra.mxu0 %v5657
    %5782 = vmatpush.bf16.msra.mxu0 %v5656
    %5783 = vmatpush.bf16.msra.mxu0 %v5655
    %5784 = vmatmul.bf16.gmra.mxu0 %v5322
    %v5785 = vpop.f32.mrf.mxu0
    %v5786 = vadd.f32 %v5773, %v5785
    %v5787 = vpop.f32.mrf.mxu0
    %5788 = vdwg.mxu0
    %v5789 = vld [vmem:[%s73] sm:$0x1]
    %v5790 = vld [vmem:[%s75] sm:$0x1]
    %vm5791 = vcmask 254976
    %v5792 = vsel %vm5791, %v5786, 0.0
    %5793 = vadd.xlane.f32.xlu0 %v5792
    %v5794 = vpop.xlane.xlu0 %5793
    %v5795 = vrcp.pop 32.0
    %v5796 = vmul.f32 32.0, %v5795
    %v5797 = vsub.f32 1.0, %v5796
    %v5798 = vmul.f32 %v5795, %v5797
    %v5799 = vadd.f32 %v5795, %v5798
    %vm5800 = vweird.f32 %v5795
    %v5801 = vsel %vm5800, %v5795, %v5799
    %v5802 = vmul.f32 %v5794, %v5801
    %v5803 = vsub.f32 %v5786, %v5802
    %v5804 = vmul.f32 %v5803, %v5803
    %v5805 = vsel %vm5791, %v5804, 0.0
    %5806 = vadd.xlane.f32.xlu0 %v5805
    %v5807 = vpop.xlane.xlu0 %5806
    %v5808 = vmul.f32 %v5807, %v5801
    %v5809 = vadd.f32 %v5808, 1e-05
    %v5810 = vrsqrt.pop %v5809
    %v5811 = vmul.f32 %v5810, %v5809
    %v5812 = vmul.f32 %v5811, %v5810
    %v5813 = vmul.f32 0.5, %v5812
    %v5814 = vsub.f32 1.5, %v5813
    %v5815 = vmul.f32 %v5810, %v5814
    %vm5816 = vweird.f32 %v5809
    %vm5817 = vweird.f32 %v5810
    %vm5818 = vmor %vm5816, %vm5817
    %v5819 = vsel %vm5818, %v5810, %v5815
    %v5820 = vmul.f32 %v5803, %v5819
    %v5822 = vperm.slane %v5789, 0
    %v5824 = vmul.f32 %v5820, %v5822
    %v5826 = vperm.slane %v5790, 0
    %v5828 = vadd.f32 %v5824, %v5826
    %v5829 = vld [vmem:[%s77] sm:$0xff]
    %v5830 = vld [vmem:[%s77 + $0x8] sm:$0xff]
    %v5831 = vld [vmem:[%s77 + $0x10] sm:$0xff]
    %v5832 = vld [vmem:[%s77 + $0x18] sm:$0xff]
    %v5833 = vld [vmem:[%s79] sm:$0x1]
    %v5835 = vperm.slane %v5833, 0
    %v5838 = vsel %vm880, %v5828, 0
    %5840 = vmatpush.msra.mxu0 0.0
    %5841 = vmatpush.msra.mxu0 0.0
    %5842 = vmatpush.msra.mxu0 0.0
    %5843 = vmatpush.msra.mxu0 0.0
    %5844 = vmatpush.msra.mxu0 0.0
    %5845 = vmatpush.msra.mxu0 0.0
    %5846 = vmatpush.msra.mxu0 0.0
    %5847 = vmatpush.msra.mxu0 0.0
    %5848 = vmatpush.msra.mxu0 0.0
    %5849 = vmatpush.msra.mxu0 0.0
    %5850 = vmatpush.msra.mxu0 0.0
    %5851 = vmatpush.msra.mxu0 0.0
    %5852 = vmatpush.msra.mxu0 %v5832
    %5853 = vmatpush.msra.mxu0 %v5831
    %5854 = vmatpush.msra.mxu0 %v5830
    %5855 = vmatpush.msra.mxu0 %v5829
    %5856 = vmatmul.f32.gmra.mxu0 %v5838
    %v5857 = vpop.f32.mrf.mxu0
    %v5858 = vadd.f32 %v5835, %v5857
    %5859 = vdwg.mxu0
    %v5860 = vld [vmem:[%s81] sm:$0xff]
    %v5861 = vld [vmem:[%s81 + $0x8] sm:$0xff]
    %v5862 = vld [vmem:[%s81 + $0x10] sm:$0xff]
    %v5863 = vld [vmem:[%s81 + $0x18] sm:$0xff]
    %v5864 = vld [vmem:[%s83] sm:$0x1]
    %v5866 = vperm.slane %v5864, 0
    %v5869 = vsel %vm880, %v5858, 0
    %5871 = vmatpush.msra.mxu0 0.0
    %5872 = vmatpush.msra.mxu0 0.0
    %5873 = vmatpush.msra.mxu0 0.0
    %5874 = vmatpush.msra.mxu0 0.0
    %5875 = vmatpush.msra.mxu0 0.0
    %5876 = vmatpush.msra.mxu0 0.0
    %5877 = vmatpush.msra.mxu0 0.0
    %5878 = vmatpush.msra.mxu0 0.0
    %5879 = vmatpush.msra.mxu0 0.0
    %5880 = vmatpush.msra.mxu0 0.0
    %5881 = vmatpush.msra.mxu0 0.0
    %5882 = vmatpush.msra.mxu0 0.0
    %5883 = vmatpush.msra.mxu0 %v5863
    %5884 = vmatpush.msra.mxu0 %v5862
    %5885 = vmatpush.msra.mxu0 %v5861
    %5886 = vmatpush.msra.mxu0 %v5860
    %5887 = vmatmul.f32.gmra.mxu0 %v5869
    %v5888 = vpop.f32.mrf.mxu0
    %v5889 = vadd.f32 %v5866, %v5888
    %5890 = vdwg.mxu0
    %v5891 = vmax.f32 %v5889, 0.0
    %v5892 = vld [vmem:[%s85] sm:$0xff]
    %v5893 = vld [vmem:[%s85 + $0x8] sm:$0xff]
    %v5894 = vld [vmem:[%s85 + $0x10] sm:$0xff]
    %v5895 = vld [vmem:[%s85 + $0x18] sm:$0xff]
    %v5896 = vld [vmem:[#allocation2] sm:$0x1]
    %v5898 = vperm.slane %v5896, 0
    %v5901 = vsel %vm880, %v5891, 0
    %5903 = vmatpush.msra.mxu0 0.0
    %5904 = vmatpush.msra.mxu0 0.0
    %5905 = vmatpush.msra.mxu0 0.0
    %5906 = vmatpush.msra.mxu0 0.0
    %5907 = vmatpush.msra.mxu0 0.0
    %5908 = vmatpush.msra.mxu0 0.0
    %5909 = vmatpush.msra.mxu0 0.0
    %5910 = vmatpush.msra.mxu0 0.0
    %5911 = vmatpush.msra.mxu0 0.0
    %5912 = vmatpush.msra.mxu0 0.0
    %5913 = vmatpush.msra.mxu0 0.0
    %5914 = vmatpush.msra.mxu0 0.0
    %5915 = vmatpush.msra.mxu0 %v5895
    %5916 = vmatpush.msra.mxu0 %v5894
    %5917 = vmatpush.msra.mxu0 %v5893
    %5918 = vmatpush.msra.mxu0 %v5892
    %5919 = vmatmul.f32.gmra.mxu0 %v5901
    %v5920 = vpop.f32.mrf.mxu0
    %v5921 = vadd.f32 %v5898, %v5920
    %5922 = vdwg.mxu0
    %v5923 = vadd.f32 %v5858, %v5921
    %v5924 = vld [vmem:[#allocation5] sm:$0x1]
    %v5925 = vld [vmem:[#allocation7] sm:$0x1]
    %v5926 = vsel %vm5791, %v5923, 0.0
    %5927 = vadd.xlane.f32.xlu0 %v5926
    %v5928 = vpop.xlane.xlu0 %5927
    %v5929 = vmul.f32 %v5928, %v5801
    %v5930 = vsub.f32 %v5923, %v5929
    %v5931 = vmul.f32 %v5930, %v5930
    %v5932 = vsel %vm5791, %v5931, 0.0
    %5933 = vadd.xlane.f32.xlu0 %v5932
    %v5934 = vpop.xlane.xlu0 %5933
    %v5935 = vmul.f32 %v5934, %v5801
    %v5936 = vadd.f32 %v5935, 1e-05
    %v5937 = vrsqrt.pop %v5936
    %v5938 = vmul.f32 %v5937, %v5936
    %v5939 = vmul.f32 %v5938, %v5937
    %v5940 = vmul.f32 0.5, %v5939
    %v5941 = vsub.f32 1.5, %v5940
    %v5942 = vmul.f32 %v5937, %v5941
    %vm5943 = vweird.f32 %v5936
    %vm5944 = vweird.f32 %v5937
    %vm5945 = vmor %vm5943, %vm5944
    %v5946 = vsel %vm5945, %v5937, %v5942
    %v5947 = vmul.f32 %v5930, %v5946
    %v5949 = vperm.slane %v5924, 0
    %v5951 = vmul.f32 %v5947, %v5949
    %v5953 = vperm.slane %v5925, 0
    %v5955 = vadd.f32 %v5951, %v5953
    %v5956 = vld [vmem:[%s93] sm:$0xff]
    %v5957 = vld [vmem:[%s93 + $0x8] sm:$0xff]
    %v5958 = vld [vmem:[%s93 + $0x10] sm:$0xff]
    %v5959 = vld [vmem:[%s93 + $0x18] sm:$0xff]
    %v5960 = vld [vmem:[#allocation8] sm:$0x1]
    %v5962 = vperm.slane %v5960, 0
    %v5965 = vsel %vm880, %v5955, 0
    %5967 = vmatpush.msra.mxu0 0.0
    %5968 = vmatpush.msra.mxu0 0.0
    %5969 = vmatpush.msra.mxu0 0.0
    %5970 = vmatpush.msra.mxu0 0.0
    %5971 = vmatpush.msra.mxu0 0.0
    %5972 = vmatpush.msra.mxu0 0.0
    %5973 = vmatpush.msra.mxu0 0.0
    %5974 = vmatpush.msra.mxu0 0.0
    %5975 = vmatpush.msra.mxu0 0.0
    %5976 = vmatpush.msra.mxu0 0.0
    %5977 = vmatpush.msra.mxu0 0.0
    %5978 = vmatpush.msra.mxu0 0.0
    %5979 = vmatpush.msra.mxu0 %v5959
    %5980 = vmatpush.msra.mxu0 %v5958
    %5981 = vmatpush.msra.mxu0 %v5957
    %5982 = vmatpush.msra.mxu0 %v5956
    %5983 = vmatmul.f32.gmra.mxu0 %v5965
    %v5984 = vpop.f32.mrf.mxu0
    %v5985 = vadd.f32 %v5962, %v5984
    %5986 = vdwg.mxu0
    %v5987 = vld [vmem:[%s13] sm:$0xff]
    %v5988 = vld [vmem:[%s13 + $0x8] sm:$0xff]
    %v5989 = vld [vmem:[%s13 + $0x10] sm:$0xff]
    %v5990 = vld [vmem:[%s13 + $0x18] sm:$0xff]
    %v5992 = vsel %vm880, %v5296, 0
    %5994 = vmatpush.msra.mxu0 0.0
    %5995 = vmatpush.msra.mxu0 0.0
    %5996 = vmatpush.msra.mxu0 0.0
    %5997 = vmatpush.msra.mxu0 0.0
    %5998 = vmatpush.msra.mxu0 0.0
    %5999 = vmatpush.msra.mxu0 0.0
    %6000 = vmatpush.msra.mxu0 0.0
    %6001 = vmatpush.msra.mxu0 0.0
    %6002 = vmatpush.msra.mxu0 0.0
    %6003 = vmatpush.msra.mxu0 0.0
    %6004 = vmatpush.msra.mxu0 0.0
    %6005 = vmatpush.msra.mxu0 0.0
    %6006 = vmatpush.msra.mxu0 %v5990
    %6007 = vmatpush.msra.mxu0 %v5989
    %6008 = vmatpush.msra.mxu0 %v5988
    %6009 = vmatpush.msra.mxu0 %v5987
    %6010 = vmatmul.f32.gmra.mxu0 %v5992
    %v6011 = vpop.f32.mrf.mxu0
    %v6012 = vadd.f32 0.0, %v6011
    %6013 = vdwg.mxu0
    %v6014 = vadd.f32 %v5985, %v6012
    %6015 = vst [vmem:[#allocation10] sm:$0x3] %v6014
    // Predicated region
    $region210: #{tpu_custom_call.1} parent=1 // pred_check
      _
    $region211: #{tpu_custom_call.1} parent=1 // pred_check_branch
      %6017 = sbr.rel (0) target = $region213
    $region212: #{tpu_custom_call.1} parent=1 // pred_region
      %6019 = vsyncadd [#allocation4], 0
      %s6021 = sshll.u32 [#allocation10], 4
      %s6022 = int_to_ptr.vmem [resolvable:$true] %s6021
      %s6023 = sshll.u32 %s97, 4
      %s6024 = int_to_ptr.hbm [resolvable:$true] %s6023
      %6026 = dma.vmem_to_hbm [thread:$0]  %s6022, 32, %s6024, [#allocation4]
    $region213: #{tpu_custom_call.1} parent=1 // pred_fallthru
      _
    // Predicated region
    $region214: #{tpu_custom_call.1} parent=1 // pred_check
      _
    $region215: #{tpu_custom_call.1} parent=1 // pred_check_branch
      %6028 = sbr.rel (0) target = $region217
    $region216: #{tpu_custom_call.1} parent=1 // pred_region
      %6030 = dma.done [#allocation4], 32
    $region217: #{tpu_custom_call.1} parent=1 // pred_fallthru
      _
    %6031 = vsyncpa [#allocation3], 1
    %6032 = vsyncpa [#allocation6], 1
    %6033 = vsyncpa [#allocation9], 1
    %6034 = vsyncpa [#allocation4], 1

</llo_original>
